<compile_context>
chip_gen: v7x
topology: tpu7x:2x2x1
jax: 0.10.0
libtpu: 0.0.40
codegen_flags: <defaults>
</compile_context>

<pallas_src>
import functools
import math

import jax
import jax.numpy as jnp
from jax.experimental import pallas as pl
from jax.experimental.pallas import tpu as pltpu


# ----------------------------- Fused decoder kernel -----------------------------

def _fused_decoder_kernel(
    x_ref, enc_ref,
    sa_wqkv_ref, sa_bqkv_ref, sa_wo_ref, sa_bo_ref, sa_lng_ref, sa_lnb_ref,
    ca_wq_ref, ca_bq_ref, ca_wkv_ref, ca_bkv_ref, ca_wo_ref, ca_bo_ref,
    ln1g_ref, ln1b_ref,
    ff1w_ref, ff1b_ref, ff2w_ref, ff2b_ref, ln2g_ref, ln2b_ref,
    fcw_ref, fcb_ref,
    o_ref,
    x_state,
    *, num_heads, scale, eps):
    bf16 = jnp.bfloat16
    N, L, E = x_state.shape
    Ls = enc_ref.shape[1]
    V = fcw_ref.shape[-1]
    D = E // num_heads
    l = pl.program_id(0)

    # Initialize the persistent activation accumulator on the first layer step.
    @pl.when(l == 0)
    def _():
        x_state[...] = x_ref[...].astype(jnp.float32)

    def matmul(a, w):
        # bf16 MXU operands, f32 accumulation.
        return jnp.dot(a.astype(bf16), w, preferred_element_type=jnp.float32)

    def layernorm(x, g_ref, b_ref):
        mu = jnp.mean(x, axis=-1, keepdims=True)
        xc = x - mu
        var = jnp.mean(xc * xc, axis=-1, keepdims=True)
        return xc * jax.lax.rsqrt(var + eps) * g_ref[0] + b_ref[0]

    def mha(q3, k3, v3):
        # q3: (N, Lq, E), k3/v3: (N, Lk, E). Heads are sliced along lanes and the
        # score/PV matmuls are batched over N via 3-D einsums (no transposes).
        heads = []
        for h in range(num_heads):
            sl = slice(h * D, (h + 1) * D)
            qh = (q3[:, :, sl] * scale).astype(bf16)   # pre-scale q in f32, then cast
            kh = k3[:, :, sl].astype(bf16)
            vh = v3[:, :, sl].astype(bf16)
            s = jnp.einsum('nqd,nkd->nqk', qh, kh,
                           preferred_element_type=jnp.float32)        # (N, Lq, Lk)
            m = jnp.max(s, axis=-1, keepdims=True)
            p = jnp.exp(s - m)
            p = p * pl.reciprocal(jnp.sum(p, axis=-1, keepdims=True), approx=True)
            oh = jnp.einsum('nqk,nkd->nqd', p.astype(bf16), vh,
                            preferred_element_type=jnp.float32)       # (N, Lq, D)
            heads.append(oh)
        # Head-major lane concat -> single (rows, E) @ (E, E) output projection.
        return jnp.concatenate(heads, axis=-1)                        # (N, Lq, E)

    x2 = x_state[...].reshape(N * L, E)       # running activations, f32
    enc2 = enc_ref[...].reshape(N * Ls, E)    # encoder output, bf16

    # ----- self-attention (trg_mask is unused in the reference SelfAttention) -----
    qkv = matmul(x2, sa_wqkv_ref[0]) + sa_bqkv_ref[0]                 # (N*L, 3E)
    att = mha(qkv[:, :E].reshape(N, L, E),
              qkv[:, E:2 * E].reshape(N, L, E),
              qkv[:, 2 * E:].reshape(N, L, E))
    att2 = matmul(att.reshape(N * L, E), sa_wo_ref[0]) + sa_bo_ref[0]
    query = layernorm(att2 + x2, sa_lng_ref, sa_lnb_ref)

    # ----- cross-attention over the encoder output (src_mask unused) -----
    cq = matmul(query, ca_wq_ref[0]) + ca_bq_ref[0]                   # (N*L, E)
    ckv = matmul(enc2, ca_wkv_ref[0]) + ca_bkv_ref[0]                 # (N*Ls, 2E)
    catt = mha(cq.reshape(N, L, E),
               ckv[:, :E].reshape(N, Ls, E),
               ckv[:, E:].reshape(N, Ls, E))
    catt2 = matmul(catt.reshape(N * L, E), ca_wo_ref[0]) + ca_bo_ref[0]
    h1 = layernorm(catt2 + query, ln1g_ref, ln1b_ref)

    # ----- feed-forward -----
    f = jnp.maximum(matmul(h1, ff1w_ref[0]) + ff1b_ref[0], 0.0)
    f = matmul(f, ff2w_ref[0]) + ff2b_ref[0]
    x_new = layernorm(f + h1, ln2g_ref, ln2b_ref)

    x_state[...] = x_new.reshape(N, L, E)

    # ----- final vocabulary projection, emitted once on the last layer step -----
    @pl.when(l == pl.num_programs(0) - 1)
    def _():
        logits = matmul(x_new, fcw_ref[...]) + fcb_ref[...]           # (N*L, V)
        o_ref[...] = logits.reshape(N, L, V).astype(o_ref.dtype)


# ----------------------------- Wrapper -----------------------------

_PER_LAYER_KEYS = (
    "sa_wqkv", "sa_bqkv", "sa_wo", "sa_bo", "sa_ln_g", "sa_ln_b",
    "ca_wq", "ca_bq", "ca_wkv", "ca_bkv", "ca_wo", "ca_bo",
    "ln1_g", "ln1_b",
    "ff1_w", "ff1_b", "ff2_w", "ff2_b", "ln2_g", "ln2_b",
)
_CONST_KEYS = ("fc_out_w", "fc_out_b")


def _nbytes(a):
    return int(math.prod(a.shape)) * a.dtype.itemsize


def decoder_forward(params, x_tokens, enc_out, src_mask=None, trg_mask=None,
                    *, num_heads):
    # Masks are accepted for signature parity but (as in the reference code)
    # SelfAttention never applies them.
    N, L = x_tokens.shape
    Ls = enc_out.shape[1]
    E = params["word_emb"].shape[-1]
    V = params["fc_out_w"].shape[-1]
    hidden = params["ff1_w"].shape[-1]
    num_layers = params["sa_wqkv"].shape[0]
    D = E // num_heads

    positions = jnp.arange(L)
    # TODO(synk): embedding gathers stay in plain JAX (tiny tables; a Pallas gather
    # buys nothing at this scale).
    h = params["word_emb"][x_tokens] + params["pos_emb"][positions][None, :, :]
    h = h.astype(jnp.bfloat16)             # halve activation HBM->VMEM DMA bytes
    enc = enc_out.astype(jnp.bfloat16)

    layer_weights = [params[k] for k in _PER_LAYER_KEYS]
    const_weights = [params[k] for k in _CONST_KEYS]

    def layer_spec(w):
        nd = w.ndim
        return pl.BlockSpec((1,) + tuple(w.shape[1:]),
                            lambda l, _nd=nd: (l,) + (0,) * (_nd - 1))

    def const_spec(w):
        nd = w.ndim
        return pl.BlockSpec(tuple(w.shape), lambda l, _nd=nd: (0,) * _nd)

    in_specs = (
        [pl.BlockSpec((N, L, E), lambda l: (0, 0, 0)),
         pl.BlockSpec((N, Ls, E), lambda l: (0, 0, 0))]
        + [layer_spec(w) for w in layer_weights]
        + [const_spec(w) for w in const_weights]
    )

    # VMEM budget: one layer's weights (double-buffered by the pipeline) plus the
    # resident activations / output / scratch / fc_out weights, with headroom.
    per_layer_bytes = sum(_nbytes(w) // num_layers for w in layer_weights)
    resident_bytes = (_nbytes(h) + _nbytes(enc) + N * L * V * 4 + N * L * E * 4
                      + sum(_nbytes(w) for w in const_weights))
    vmem_limit = int(min(max(4 * (2 * per_layer_bytes + resident_bytes), 16 << 20),
                         64 << 20))

    flops = num_layers * (
        2 * N * L * E * 3 * E             # self-attn QKV projection
        + 4 * N * num_heads * L * L * D   # self-attn scores + PV
        + 2 * N * L * E * E               # self-attn out projection
        + 2 * N * L * E * E               # cross-attn Q projection
        + 2 * N * Ls * E * 2 * E          # cross-attn KV projection
        + 4 * N * num_heads * L * Ls * D  # cross-attn scores + PV
        + 2 * N * L * E * E               # cross-attn out projection
        + 4 * N * L * E * hidden          # feed-forward
    ) + 2 * N * L * E * V                 # fc_out
    cost = pl.CostEstimate(
        flops=int(flops),
        transcendentals=int(N * num_layers * num_heads * (L * L + L * Ls)),
        bytes_accessed=int(_nbytes(h) + _nbytes(enc) + N * L * V * 4
                           + sum(_nbytes(w) for w in layer_weights + const_weights)),
    )

    kernel = functools.partial(
        _fused_decoder_kernel,
        num_heads=num_heads,
        scale=1.0 / math.sqrt(float(E)),   # reference divides by sqrt(embedding_size)
        eps=1e-5,
    )

    out = pl.pallas_call(
        kernel,
        out_shape=jax.ShapeDtypeStruct((N, L, V), jnp.float32),
        grid_spec=pltpu.PrefetchScalarGridSpec(
            num_scalar_prefetch=0,
            grid=(num_layers,),
            in_specs=in_specs,
            out_specs=pl.BlockSpec((N, L, V), lambda l: (0, 0, 0)),
            scratch_shapes=[pltpu.VMEM((N, L, E), jnp.float32)],
        ),
        compiler_params=pltpu.CompilerParams(
            dimension_semantics=("arbitrary",),
            vmem_limit_bytes=vmem_limit,
        ),
        cost_estimate=cost,
    )(h, enc, *layer_weights, *const_weights)
    return out


# ----------------------------- Parameter init -----------------------------

def init_decoder_params(key, vocab, embed, num_layers, num_heads,
                        forward_expansion, max_length):
    E = embed
    hidden = forward_expansion * E
    wdt = jnp.bfloat16   # MXU operand dtype; accumulation stays f32 in-kernel
    keys = iter(jax.random.split(key, 16))

    def w(shape):
        return (jax.random.normal(next(keys), shape, jnp.float32) * 0.02).astype(wdt)

    def zeros(shape):
        return jnp.zeros(shape, jnp.float32)

    def ones(shape):
        return jnp.ones(shape, jnp.float32)

    Lyr = num_layers
    return dict(
        # self-attention: Q|K|V fused along the output dim; Wo is the full (E, E)
        # projection applied to the head-major concatenation of head outputs.
        sa_wqkv=w((Lyr, E, 3 * E)),
        sa_bqkv=zeros((Lyr, 1, 3 * E)),
        sa_wo=w((Lyr, E, E)),
        sa_bo=zeros((Lyr, 1, E)),
        sa_ln_g=ones((Lyr, 1, E)),
        sa_ln_b=zeros((Lyr, 1, E)),
        # cross-attention
        ca_wq=w((Lyr, E, E)),
        ca_bq=zeros((Lyr, 1, E)),
        ca_wkv=w((Lyr, E, 2 * E)),
        ca_bkv=zeros((Lyr, 1, 2 * E)),
        ca_wo=w((Lyr, E, E)),
        ca_bo=zeros((Lyr, 1, E)),
        ln1_g=ones((Lyr, 1, E)),
        ln1_b=zeros((Lyr, 1, E)),
        # feed-forward
        ff1_w=w((Lyr, E, hidden)),
        ff1_b=zeros((Lyr, 1, hidden)),
        ff2_w=w((Lyr, hidden, E)),
        ff2_b=zeros((Lyr, 1, E)),
        ln2_g=ones((Lyr, 1, E)),
        ln2_b=zeros((Lyr, 1, E)),
        # output head + embeddings
        fc_out_w=w((E, vocab)),
        fc_out_b=zeros((1, vocab)),
        word_emb=jax.random.normal(next(keys), (vocab, E), jnp.float32) * 0.02,
        pos_emb=jax.random.normal(next(keys), (max_length, E), jnp.float32) * 0.02,
    )


# ----------------------------- Main -----------------------------

if __name__ == "__main__":
    trg_vocab_size = 128     # multiple of 128 -> lane-dense output stores
    embedding_size = 64
    num_layers = 2
    num_heads = 4
    forward_expansion = 4
    max_length = 16

    batch = 2
    trg_seq = 8
    src_seq = 16

    root = jax.random.PRNGKey(0)
    k_params, k_tokens, k_enc = jax.random.split(root, 3)

    params = init_decoder_params(
        k_params, trg_vocab_size, embedding_size, num_layers, num_heads,
        forward_expansion, max_length,
    )

    x_tokens = jax.random.randint(k_tokens, (batch, trg_seq), 0, trg_vocab_size,
                                  dtype=jnp.int32)
    enc_out = jax.random.normal(k_enc, (batch, src_seq, embedding_size), jnp.float32)

    fwd = jax.jit(functools.partial(decoder_forward, num_heads=num_heads))
    out = fwd(params, x_tokens, enc_out)
    out = jax.block_until_ready(out)

    assert out.shape == (batch, trg_seq, trg_vocab_size), out.shape
    assert bool(jnp.all(jnp.isfinite(out)))
    print("KERNEL_OK")
</pallas_src>

<mosaic_0001>
module attributes {stable_mosaic.version = 11 : i64} {
  func.func @_fused_decoder_kernel(%arg0: i32, %arg1: memref<2x8x64xbf16, #tpu.memory_space<vmem>>, %arg2: memref<2x16x64xbf16, #tpu.memory_space<vmem>>, %arg3: memref<1x64x192xbf16, #tpu.memory_space<vmem>>, %arg4: memref<1x1x192xf32, #tpu.memory_space<vmem>>, %arg5: memref<1x64x64xbf16, #tpu.memory_space<vmem>>, %arg6: memref<1x1x64xf32, #tpu.memory_space<vmem>>, %arg7: memref<1x1x64xf32, #tpu.memory_space<vmem>>, %arg8: memref<1x1x64xf32, #tpu.memory_space<vmem>>, %arg9: memref<1x64x64xbf16, #tpu.memory_space<vmem>>, %arg10: memref<1x1x64xf32, #tpu.memory_space<vmem>>, %arg11: memref<1x64x128xbf16, #tpu.memory_space<vmem>>, %arg12: memref<1x1x128xf32, #tpu.memory_space<vmem>>, %arg13: memref<1x64x64xbf16, #tpu.memory_space<vmem>>, %arg14: memref<1x1x64xf32, #tpu.memory_space<vmem>>, %arg15: memref<1x1x64xf32, #tpu.memory_space<vmem>>, %arg16: memref<1x1x64xf32, #tpu.memory_space<vmem>>, %arg17: memref<1x64x256xbf16, #tpu.memory_space<vmem>>, %arg18: memref<1x1x256xf32, #tpu.memory_space<vmem>>, %arg19: memref<1x256x64xbf16, #tpu.memory_space<vmem>>, %arg20: memref<1x1x64xf32, #tpu.memory_space<vmem>>, %arg21: memref<1x1x64xf32, #tpu.memory_space<vmem>>, %arg22: memref<1x1x64xf32, #tpu.memory_space<vmem>>, %arg23: memref<64x128xbf16, #tpu.memory_space<vmem>>, %arg24: memref<1x128xf32, #tpu.memory_space<vmem>>, %arg25: memref<2x8x128xf32, #tpu.memory_space<vmem>>, %arg26: memref<2x8x64xf32, #tpu.memory_space<vmem>>) attributes {dimension_semantics = [#tpu.dimension_semantics<arbitrary>], iteration_bounds = array<i64: 2>, scalar_prefetch = 0 : i64, scratch_operands = 1 : i64, tpu.core_type = #tpu.core_type<tc>, window_params = [{pipeline_mode = #tpu.pipeline_mode<synchronous>, transform_indices = @transform_0, window_bounds = array<i64: 2, 8, 64>}, {pipeline_mode = #tpu.pipeline_mode<synchronous>, transform_indices = @transform_1, window_bounds = array<i64: 2, 16, 64>}, {transform_indices = @transform_2, window_bounds = array<i64: 1, 64, 192>}, {transform_indices = @transform_3, window_bounds = array<i64: 1, 1, 192>}, {transform_indices = @transform_4, window_bounds = array<i64: 1, 64, 64>}, {transform_indices = @transform_5, window_bounds = array<i64: 1, 1, 64>}, {transform_indices = @transform_6, window_bounds = array<i64: 1, 1, 64>}, {transform_indices = @transform_7, window_bounds = array<i64: 1, 1, 64>}, {transform_indices = @transform_8, window_bounds = array<i64: 1, 64, 64>}, {transform_indices = @transform_9, window_bounds = array<i64: 1, 1, 64>}, {transform_indices = @transform_10, window_bounds = array<i64: 1, 64, 128>}, {transform_indices = @transform_11, window_bounds = array<i64: 1, 1, 128>}, {transform_indices = @transform_12, window_bounds = array<i64: 1, 64, 64>}, {transform_indices = @transform_13, window_bounds = array<i64: 1, 1, 64>}, {transform_indices = @transform_14, window_bounds = array<i64: 1, 1, 64>}, {transform_indices = @transform_15, window_bounds = array<i64: 1, 1, 64>}, {transform_indices = @transform_16, window_bounds = array<i64: 1, 64, 256>}, {transform_indices = @transform_17, window_bounds = array<i64: 1, 1, 256>}, {transform_indices = @transform_18, window_bounds = array<i64: 1, 256, 64>}, {transform_indices = @transform_19, window_bounds = array<i64: 1, 1, 64>}, {transform_indices = @transform_20, window_bounds = array<i64: 1, 1, 64>}, {transform_indices = @transform_21, window_bounds = array<i64: 1, 1, 64>}, {pipeline_mode = #tpu.pipeline_mode<synchronous>, transform_indices = @transform_22, window_bounds = array<i64: 64, 128>}, {pipeline_mode = #tpu.pipeline_mode<synchronous>, transform_indices = @transform_23, window_bounds = array<i64: 1, 128>}, {pipeline_mode = #tpu.pipeline_mode<synchronous>, transform_indices = @transform_24, window_bounds = array<i64: 2, 8, 128>}]} {
    %c0_i32 = arith.constant 0 : i32
    %0 = arith.cmpi eq, %arg0, %c0_i32 : i32
    %1 = arith.extui %0 : i1 to i32
    %c0_i32_0 = arith.constant 0 : i32
    %2 = arith.cmpi ne, %1, %c0_i32_0 : i32
    scf.if %2 {
      %c0_132 = arith.constant 0 : index
      %c0_133 = arith.constant 0 : index
      %c0_134 = arith.constant 0 : index
      %327 = vector.load %arg1[%c0_132, %c0_133, %c0_134] : memref<2x8x64xbf16, #tpu.memory_space<vmem>>, vector<2x8x64xbf16>
      %328 = arith.extf %327 : vector<2x8x64xbf16> to vector<2x8x64xf32>
      %c0_135 = arith.constant 0 : index
      %c0_136 = arith.constant 0 : index
      %c0_137 = arith.constant 0 : index
      %329 = vector.load %arg26[%c0_135, %c0_136, %c0_137] : memref<2x8x64xf32, #tpu.memory_space<vmem>>, vector<2x8x64xf32>
      tpu.vector_store %arg26[%c0_135, %c0_136, %c0_137], %328 {strides = array<i32>} : memref<2x8x64xf32, #tpu.memory_space<vmem>>, vector<2x8x64xf32>,
    } else {
    }
    %c0 = arith.constant 0 : index
    %c0_1 = arith.constant 0 : index
    %c0_2 = arith.constant 0 : index
    %3 = vector.load %arg26[%c0, %c0_1, %c0_2] : memref<2x8x64xf32, #tpu.memory_space<vmem>>, vector<2x8x64xf32>
    %4 = vector.shape_cast %3 : vector<2x8x64xf32> to vector<16x64xf32>
    %c0_3 = arith.constant 0 : index
    %c0_4 = arith.constant 0 : index
    %c0_5 = arith.constant 0 : index
    %5 = vector.load %arg2[%c0_3, %c0_4, %c0_5] : memref<2x16x64xbf16, #tpu.memory_space<vmem>>, vector<2x16x64xbf16>
    %6 = vector.shape_cast %5 : vector<2x16x64xbf16> to vector<32x64xbf16>
    %c0_6 = arith.constant 0 : index
    %c0_7 = arith.constant 0 : index
    %c0_8 = arith.constant 0 : index
    %7 = vector.load %arg3[%c0_6, %c0_7, %c0_8] : memref<1x64x192xbf16, #tpu.memory_space<vmem>>, vector<1x64x192xbf16>
    %8 = vector.shape_cast %7 : vector<1x64x192xbf16> to vector<64x192xbf16>
    %9 = arith.truncf %4 : vector<16x64xf32> to vector<16x64xbf16>
    %cst = arith.constant dense<0.000000e+00> : vector<16x192xf32>
    %10 = tpu.matmul %9, %8, %cst {dimension_numbers = #tpu.dot_dimension_numbers<[1], [0], [0], [1], [0, 0, 1, 1], [], []>} : vector<16x64xbf16>, vector<64x192xbf16>, vector<16x192xf32> -> vector<16x192xf32>
    %c0_9 = arith.constant 0 : index
    %c0_10 = arith.constant 0 : index
    %c0_11 = arith.constant 0 : index
    %11 = vector.load %arg4[%c0_9, %c0_10, %c0_11] : memref<1x1x192xf32, #tpu.memory_space<vmem>>, vector<1x1x192xf32>
    %12 = vector.shape_cast %11 : vector<1x1x192xf32> to vector<1x192xf32>
    %13 = vector.broadcast %12 : vector<1x192xf32> to vector<16x192xf32>
    %14 = arith.addf %10, %13 : vector<16x192xf32>
    %15 = vector.extract_strided_slice %14 {offsets = [0, 0], sizes = [16, 64], strides = [1, 1]} : vector<16x192xf32> to vector<16x64xf32>
    %16 = vector.shape_cast %15 : vector<16x64xf32> to vector<2x8x64xf32>
    %17 = vector.extract_strided_slice %14 {offsets = [0, 64], sizes = [16, 64], strides = [1, 1]} : vector<16x192xf32> to vector<16x64xf32>
    %18 = vector.shape_cast %17 : vector<16x64xf32> to vector<2x8x64xf32>
    %19 = vector.extract_strided_slice %14 {offsets = [0, 128], sizes = [16, 64], strides = [1, 1]} : vector<16x192xf32> to vector<16x64xf32>
    %20 = vector.shape_cast %19 : vector<16x64xf32> to vector<2x8x64xf32>
    %21 = vector.extract_strided_slice %16 {offsets = [0, 0, 0], sizes = [2, 8, 16], strides = [1, 1, 1]} : vector<2x8x64xf32> to vector<2x8x16xf32>
    %cst_12 = arith.constant 1.250000e-01 : f32
    %22 = vector.broadcast %cst_12 : f32 to vector<2x8x16xf32>
    %23 = arith.mulf %21, %22 : vector<2x8x16xf32>
    %24 = arith.truncf %23 : vector<2x8x16xf32> to vector<2x8x16xbf16>
    %25 = vector.extract_strided_slice %18 {offsets = [0, 0, 0], sizes = [2, 8, 16], strides = [1, 1, 1]} : vector<2x8x64xf32> to vector<2x8x16xf32>
    %26 = arith.truncf %25 : vector<2x8x16xf32> to vector<2x8x16xbf16>
    %27 = vector.extract_strided_slice %20 {offsets = [0, 0, 0], sizes = [2, 8, 16], strides = [1, 1, 1]} : vector<2x8x64xf32> to vector<2x8x16xf32>
    %28 = arith.truncf %27 : vector<2x8x16xf32> to vector<2x8x16xbf16>
    "tpu.trace_start"() <{level = 10 : i32, message = "nqd,nkd->nqk"}> : () -> ()
    %cst_13 = arith.constant dense<0.000000e+00> : vector<2x8x8xf32>
    %29 = tpu.matmul %24, %26, %cst_13 {dimension_numbers = #tpu.dot_dimension_numbers<[2], [2], [1], [1], [0, 0, 0, 1, 1, 1], [0], [0]>} : vector<2x8x16xbf16>, vector<2x8x16xbf16>, vector<2x8x8xf32> -> vector<2x8x8xf32>
    "tpu.trace_stop"() : () -> ()
    %cst_14 = arith.constant dense<0xFF800000> : vector<2x8xf32>
    %30 = vector.multi_reduction <maximumf>, %29, %cst_14 [2] : vector<2x8x8xf32> to vector<2x8xf32>
    %31 = vector.shape_cast %30 : vector<2x8xf32> to vector<2x8x1xf32>
    %32 = vector.broadcast %31 : vector<2x8x1xf32> to vector<2x8x8xf32>
    %33 = arith.subf %29, %32 : vector<2x8x8xf32>
    %34 = math.exp %33 : vector<2x8x8xf32>
    %cst_15 = arith.constant dense<0.000000e+00> : vector<2x8xf32>
    %35 = vector.multi_reduction <add>, %34, %cst_15 [2] : vector<2x8x8xf32> to vector<2x8xf32>
    %36 = vector.shape_cast %35 : vector<2x8xf32> to vector<2x8x1xf32>
    %37 = tpu.reciprocal %36 {approx = true} : vector<2x8x1xf32> -> vector<2x8x1xf32>
    %38 = vector.broadcast %37 : vector<2x8x1xf32> to vector<2x8x8xf32>
    %39 = arith.mulf %34, %38 : vector<2x8x8xf32>
    %40 = arith.truncf %39 : vector<2x8x8xf32> to vector<2x8x8xbf16>
    "tpu.trace_start"() <{level = 10 : i32, message = "nqk,nkd->nqd"}> : () -> ()
    %cst_16 = arith.constant dense<0.000000e+00> : vector<2x8x16xf32>
    %41 = tpu.matmul %40, %28, %cst_16 {dimension_numbers = #tpu.dot_dimension_numbers<[2], [1], [1], [2], [0, 0, 0, 1, 1, 2], [0], [0]>} : vector<2x8x8xbf16>, vector<2x8x16xbf16>, vector<2x8x16xf32> -> vector<2x8x16xf32>
    "tpu.trace_stop"() : () -> ()
    %42 = vector.extract_strided_slice %16 {offsets = [0, 0, 16], sizes = [2, 8, 16], strides = [1, 1, 1]} : vector<2x8x64xf32> to vector<2x8x16xf32>
    %cst_17 = arith.constant 1.250000e-01 : f32
    %43 = vector.broadcast %cst_17 : f32 to vector<2x8x16xf32>
    %44 = arith.mulf %42, %43 : vector<2x8x16xf32>
    %45 = arith.truncf %44 : vector<2x8x16xf32> to vector<2x8x16xbf16>
    %46 = vector.extract_strided_slice %18 {offsets = [0, 0, 16], sizes = [2, 8, 16], strides = [1, 1, 1]} : vector<2x8x64xf32> to vector<2x8x16xf32>
    %47 = arith.truncf %46 : vector<2x8x16xf32> to vector<2x8x16xbf16>
    %48 = vector.extract_strided_slice %20 {offsets = [0, 0, 16], sizes = [2, 8, 16], strides = [1, 1, 1]} : vector<2x8x64xf32> to vector<2x8x16xf32>
    %49 = arith.truncf %48 : vector<2x8x16xf32> to vector<2x8x16xbf16>
    "tpu.trace_start"() <{level = 10 : i32, message = "nqd,nkd->nqk"}> : () -> ()
    %cst_18 = arith.constant dense<0.000000e+00> : vector<2x8x8xf32>
    %50 = tpu.matmul %45, %47, %cst_18 {dimension_numbers = #tpu.dot_dimension_numbers<[2], [2], [1], [1], [0, 0, 0, 1, 1, 1], [0], [0]>} : vector<2x8x16xbf16>, vector<2x8x16xbf16>, vector<2x8x8xf32> -> vector<2x8x8xf32>
    "tpu.trace_stop"() : () -> ()
    %cst_19 = arith.constant dense<0xFF800000> : vector<2x8xf32>
    %51 = vector.multi_reduction <maximumf>, %50, %cst_19 [2] : vector<2x8x8xf32> to vector<2x8xf32>
    %52 = vector.shape_cast %51 : vector<2x8xf32> to vector<2x8x1xf32>
    %53 = vector.broadcast %52 : vector<2x8x1xf32> to vector<2x8x8xf32>
    %54 = arith.subf %50, %53 : vector<2x8x8xf32>
    %55 = math.exp %54 : vector<2x8x8xf32>
    %cst_20 = arith.constant dense<0.000000e+00> : vector<2x8xf32>
    %56 = vector.multi_reduction <add>, %55, %cst_20 [2] : vector<2x8x8xf32> to vector<2x8xf32>
    %57 = vector.shape_cast %56 : vector<2x8xf32> to vector<2x8x1xf32>
    %58 = tpu.reciprocal %57 {approx = true} : vector<2x8x1xf32> -> vector<2x8x1xf32>
    %59 = vector.broadcast %58 : vector<2x8x1xf32> to vector<2x8x8xf32>
    %60 = arith.mulf %55, %59 : vector<2x8x8xf32>
    %61 = arith.truncf %60 : vector<2x8x8xf32> to vector<2x8x8xbf16>
    "tpu.trace_start"() <{level = 10 : i32, message = "nqk,nkd->nqd"}> : () -> ()
    %cst_21 = arith.constant dense<0.000000e+00> : vector<2x8x16xf32>
    %62 = tpu.matmul %61, %49, %cst_21 {dimension_numbers = #tpu.dot_dimension_numbers<[2], [1], [1], [2], [0, 0, 0, 1, 1, 2], [0], [0]>} : vector<2x8x8xbf16>, vector<2x8x16xbf16>, vector<2x8x16xf32> -> vector<2x8x16xf32>
    "tpu.trace_stop"() : () -> ()
    %63 = vector.extract_strided_slice %16 {offsets = [0, 0, 32], sizes = [2, 8, 16], strides = [1, 1, 1]} : vector<2x8x64xf32> to vector<2x8x16xf32>
    %cst_22 = arith.constant 1.250000e-01 : f32
    %64 = vector.broadcast %cst_22 : f32 to vector<2x8x16xf32>
    %65 = arith.mulf %63, %64 : vector<2x8x16xf32>
    %66 = arith.truncf %65 : vector<2x8x16xf32> to vector<2x8x16xbf16>
    %67 = vector.extract_strided_slice %18 {offsets = [0, 0, 32], sizes = [2, 8, 16], strides = [1, 1, 1]} : vector<2x8x64xf32> to vector<2x8x16xf32>
    %68 = arith.truncf %67 : vector<2x8x16xf32> to vector<2x8x16xbf16>
    %69 = vector.extract_strided_slice %20 {offsets = [0, 0, 32], sizes = [2, 8, 16], strides = [1, 1, 1]} : vector<2x8x64xf32> to vector<2x8x16xf32>
    %70 = arith.truncf %69 : vector<2x8x16xf32> to vector<2x8x16xbf16>
    "tpu.trace_start"() <{level = 10 : i32, message = "nqd,nkd->nqk"}> : () -> ()
    %cst_23 = arith.constant dense<0.000000e+00> : vector<2x8x8xf32>
    %71 = tpu.matmul %66, %68, %cst_23 {dimension_numbers = #tpu.dot_dimension_numbers<[2], [2], [1], [1], [0, 0, 0, 1, 1, 1], [0], [0]>} : vector<2x8x16xbf16>, vector<2x8x16xbf16>, vector<2x8x8xf32> -> vector<2x8x8xf32>
    "tpu.trace_stop"() : () -> ()
    %cst_24 = arith.constant dense<0xFF800000> : vector<2x8xf32>
    %72 = vector.multi_reduction <maximumf>, %71, %cst_24 [2] : vector<2x8x8xf32> to vector<2x8xf32>
    %73 = vector.shape_cast %72 : vector<2x8xf32> to vector<2x8x1xf32>
    %74 = vector.broadcast %73 : vector<2x8x1xf32> to vector<2x8x8xf32>
    %75 = arith.subf %71, %74 : vector<2x8x8xf32>
    %76 = math.exp %75 : vector<2x8x8xf32>
    %cst_25 = arith.constant dense<0.000000e+00> : vector<2x8xf32>
    %77 = vector.multi_reduction <add>, %76, %cst_25 [2] : vector<2x8x8xf32> to vector<2x8xf32>
    %78 = vector.shape_cast %77 : vector<2x8xf32> to vector<2x8x1xf32>
    %79 = tpu.reciprocal %78 {approx = true} : vector<2x8x1xf32> -> vector<2x8x1xf32>
    %80 = vector.broadcast %79 : vector<2x8x1xf32> to vector<2x8x8xf32>
    %81 = arith.mulf %76, %80 : vector<2x8x8xf32>
    %82 = arith.truncf %81 : vector<2x8x8xf32> to vector<2x8x8xbf16>
    "tpu.trace_start"() <{level = 10 : i32, message = "nqk,nkd->nqd"}> : () -> ()
    %cst_26 = arith.constant dense<0.000000e+00> : vector<2x8x16xf32>
    %83 = tpu.matmul %82, %70, %cst_26 {dimension_numbers = #tpu.dot_dimension_numbers<[2], [1], [1], [2], [0, 0, 0, 1, 1, 2], [0], [0]>} : vector<2x8x8xbf16>, vector<2x8x16xbf16>, vector<2x8x16xf32> -> vector<2x8x16xf32>
    "tpu.trace_stop"() : () -> ()
    %84 = vector.extract_strided_slice %16 {offsets = [0, 0, 48], sizes = [2, 8, 16], strides = [1, 1, 1]} : vector<2x8x64xf32> to vector<2x8x16xf32>
    %cst_27 = arith.constant 1.250000e-01 : f32
    %85 = vector.broadcast %cst_27 : f32 to vector<2x8x16xf32>
    %86 = arith.mulf %84, %85 : vector<2x8x16xf32>
    %87 = arith.truncf %86 : vector<2x8x16xf32> to vector<2x8x16xbf16>
    %88 = vector.extract_strided_slice %18 {offsets = [0, 0, 48], sizes = [2, 8, 16], strides = [1, 1, 1]} : vector<2x8x64xf32> to vector<2x8x16xf32>
    %89 = arith.truncf %88 : vector<2x8x16xf32> to vector<2x8x16xbf16>
    %90 = vector.extract_strided_slice %20 {offsets = [0, 0, 48], sizes = [2, 8, 16], strides = [1, 1, 1]} : vector<2x8x64xf32> to vector<2x8x16xf32>
    %91 = arith.truncf %90 : vector<2x8x16xf32> to vector<2x8x16xbf16>
    "tpu.trace_start"() <{level = 10 : i32, message = "nqd,nkd->nqk"}> : () -> ()
    %cst_28 = arith.constant dense<0.000000e+00> : vector<2x8x8xf32>
    %92 = tpu.matmul %87, %89, %cst_28 {dimension_numbers = #tpu.dot_dimension_numbers<[2], [2], [1], [1], [0, 0, 0, 1, 1, 1], [0], [0]>} : vector<2x8x16xbf16>, vector<2x8x16xbf16>, vector<2x8x8xf32> -> vector<2x8x8xf32>
    "tpu.trace_stop"() : () -> ()
    %cst_29 = arith.constant dense<0xFF800000> : vector<2x8xf32>
    %93 = vector.multi_reduction <maximumf>, %92, %cst_29 [2] : vector<2x8x8xf32> to vector<2x8xf32>
    %94 = vector.shape_cast %93 : vector<2x8xf32> to vector<2x8x1xf32>
    %95 = vector.broadcast %94 : vector<2x8x1xf32> to vector<2x8x8xf32>
    %96 = arith.subf %92, %95 : vector<2x8x8xf32>
    %97 = math.exp %96 : vector<2x8x8xf32>
    %cst_30 = arith.constant dense<0.000000e+00> : vector<2x8xf32>
    %98 = vector.multi_reduction <add>, %97, %cst_30 [2] : vector<2x8x8xf32> to vector<2x8xf32>
    %99 = vector.shape_cast %98 : vector<2x8xf32> to vector<2x8x1xf32>
    %100 = tpu.reciprocal %99 {approx = true} : vector<2x8x1xf32> -> vector<2x8x1xf32>
    %101 = vector.broadcast %100 : vector<2x8x1xf32> to vector<2x8x8xf32>
    %102 = arith.mulf %97, %101 : vector<2x8x8xf32>
    %103 = arith.truncf %102 : vector<2x8x8xf32> to vector<2x8x8xbf16>
    "tpu.trace_start"() <{level = 10 : i32, message = "nqk,nkd->nqd"}> : () -> ()
    %cst_31 = arith.constant dense<0.000000e+00> : vector<2x8x16xf32>
    %104 = tpu.matmul %103, %91, %cst_31 {dimension_numbers = #tpu.dot_dimension_numbers<[2], [1], [1], [2], [0, 0, 0, 1, 1, 2], [0], [0]>} : vector<2x8x8xbf16>, vector<2x8x16xbf16>, vector<2x8x16xf32> -> vector<2x8x16xf32>
    "tpu.trace_stop"() : () -> ()
    %105 = tpu.concatenate %41, %62, %83, %104 in 2 : vector<2x8x16xf32>, vector<2x8x16xf32>, vector<2x8x16xf32>, vector<2x8x16xf32> -> vector<2x8x64xf32>
    %106 = vector.shape_cast %105 : vector<2x8x64xf32> to vector<16x64xf32>
    %c0_32 = arith.constant 0 : index
    %c0_33 = arith.constant 0 : index
    %c0_34 = arith.constant 0 : index
    %107 = vector.load %arg5[%c0_32, %c0_33, %c0_34] : memref<1x64x64xbf16, #tpu.memory_space<vmem>>, vector<1x64x64xbf16>
    %108 = vector.shape_cast %107 : vector<1x64x64xbf16> to vector<64x64xbf16>
    %109 = arith.truncf %106 : vector<16x64xf32> to vector<16x64xbf16>
    %cst_35 = arith.constant dense<0.000000e+00> : vector<16x64xf32>
    %110 = tpu.matmul %109, %108, %cst_35 {dimension_numbers = #tpu.dot_dimension_numbers<[1], [0], [0], [1], [0, 0, 1, 1], [], []>} : vector<16x64xbf16>, vector<64x64xbf16>, vector<16x64xf32> -> vector<16x64xf32>
    %c0_36 = arith.constant 0 : index
    %c0_37 = arith.constant 0 : index
    %c0_38 = arith.constant 0 : index
    %111 = vector.load %arg6[%c0_36, %c0_37, %c0_38] : memref<1x1x64xf32, #tpu.memory_space<vmem>>, vector<1x1x64xf32>
    %112 = vector.shape_cast %111 : vector<1x1x64xf32> to vector<1x64xf32>
    %113 = vector.broadcast %112 : vector<1x64xf32> to vector<16x64xf32>
    %114 = arith.addf %110, %113 : vector<16x64xf32>
    %115 = arith.addf %114, %4 : vector<16x64xf32>
    %cst_39 = arith.constant dense<0.000000e+00> : vector<16xf32>
    %116 = vector.multi_reduction <add>, %115, %cst_39 [1] : vector<16x64xf32> to vector<16xf32>
    %117 = vector.shape_cast %116 : vector<16xf32> to vector<16x1xf32>
    %cst_40 = arith.constant 6.400000e+01 : f32
    %118 = vector.broadcast %cst_40 : f32 to vector<16x1xf32>
    %119 = arith.divf %117, %118 : vector<16x1xf32>
    %120 = vector.broadcast %119 : vector<16x1xf32> to vector<16x64xf32>
    %121 = arith.subf %115, %120 : vector<16x64xf32>
    %122 = arith.mulf %121, %121 : vector<16x64xf32>
    %cst_41 = arith.constant dense<0.000000e+00> : vector<16xf32>
    %123 = vector.multi_reduction <add>, %122, %cst_41 [1] : vector<16x64xf32> to vector<16xf32>
    %124 = vector.shape_cast %123 : vector<16xf32> to vector<16x1xf32>
    %cst_42 = arith.constant 6.400000e+01 : f32
    %125 = vector.broadcast %cst_42 : f32 to vector<16x1xf32>
    %126 = arith.divf %124, %125 : vector<16x1xf32>
    %cst_43 = arith.constant 9.99999974E-6 : f32
    %127 = vector.broadcast %cst_43 : f32 to vector<16x1xf32>
    %128 = arith.addf %126, %127 : vector<16x1xf32>
    %129 = math.rsqrt %128 : vector<16x1xf32>
    %130 = vector.broadcast %129 : vector<16x1xf32> to vector<16x64xf32>
    %131 = arith.mulf %121, %130 : vector<16x64xf32>
    %c0_44 = arith.constant 0 : index
    %c0_45 = arith.constant 0 : index
    %c0_46 = arith.constant 0 : index
    %132 = vector.load %arg7[%c0_44, %c0_45, %c0_46] : memref<1x1x64xf32, #tpu.memory_space<vmem>>, vector<1x1x64xf32>
    %133 = vector.shape_cast %132 : vector<1x1x64xf32> to vector<1x64xf32>
    %134 = vector.broadcast %133 : vector<1x64xf32> to vector<16x64xf32>
    %135 = arith.mulf %131, %134 : vector<16x64xf32>
    %c0_47 = arith.constant 0 : index
    %c0_48 = arith.constant 0 : index
    %c0_49 = arith.constant 0 : index
    %136 = vector.load %arg8[%c0_47, %c0_48, %c0_49] : memref<1x1x64xf32, #tpu.memory_space<vmem>>, vector<1x1x64xf32>
    %137 = vector.shape_cast %136 : vector<1x1x64xf32> to vector<1x64xf32>
    %138 = vector.broadcast %137 : vector<1x64xf32> to vector<16x64xf32>
    %139 = arith.addf %135, %138 : vector<16x64xf32>
    %c0_50 = arith.constant 0 : index
    %c0_51 = arith.constant 0 : index
    %c0_52 = arith.constant 0 : index
    %140 = vector.load %arg9[%c0_50, %c0_51, %c0_52] : memref<1x64x64xbf16, #tpu.memory_space<vmem>>, vector<1x64x64xbf16>
    %141 = vector.shape_cast %140 : vector<1x64x64xbf16> to vector<64x64xbf16>
    %142 = arith.truncf %139 : vector<16x64xf32> to vector<16x64xbf16>
    %cst_53 = arith.constant dense<0.000000e+00> : vector<16x64xf32>
    %143 = tpu.matmul %142, %141, %cst_53 {dimension_numbers = #tpu.dot_dimension_numbers<[1], [0], [0], [1], [0, 0, 1, 1], [], []>} : vector<16x64xbf16>, vector<64x64xbf16>, vector<16x64xf32> -> vector<16x64xf32>
    %c0_54 = arith.constant 0 : index
    %c0_55 = arith.constant 0 : index
    %c0_56 = arith.constant 0 : index
    %144 = vector.load %arg10[%c0_54, %c0_55, %c0_56] : memref<1x1x64xf32, #tpu.memory_space<vmem>>, vector<1x1x64xf32>
    %145 = vector.shape_cast %144 : vector<1x1x64xf32> to vector<1x64xf32>
    %146 = vector.broadcast %145 : vector<1x64xf32> to vector<16x64xf32>
    %147 = arith.addf %143, %146 : vector<16x64xf32>
    %c0_57 = arith.constant 0 : index
    %c0_58 = arith.constant 0 : index
    %c0_59 = arith.constant 0 : index
    %148 = vector.load %arg11[%c0_57, %c0_58, %c0_59] : memref<1x64x128xbf16, #tpu.memory_space<vmem>>, vector<1x64x128xbf16>
    %149 = vector.shape_cast %148 : vector<1x64x128xbf16> to vector<64x128xbf16>
    %cst_60 = arith.constant dense<0.000000e+00> : vector<32x128xf32>
    %150 = tpu.matmul %6, %149, %cst_60 {dimension_numbers = #tpu.dot_dimension_numbers<[1], [0], [0], [1], [0, 0, 1, 1], [], []>} : vector<32x64xbf16>, vector<64x128xbf16>, vector<32x128xf32> -> vector<32x128xf32>
    %c0_61 = arith.constant 0 : index
    %c0_62 = arith.constant 0 : index
    %c0_63 = arith.constant 0 : index
    %151 = vector.load %arg12[%c0_61, %c0_62, %c0_63] : memref<1x1x128xf32, #tpu.memory_space<vmem>>, vector<1x1x128xf32>
    %152 = vector.shape_cast %151 : vector<1x1x128xf32> to vector<1x128xf32>
    %153 = vector.broadcast %152 : vector<1x128xf32> to vector<32x128xf32>
    %154 = arith.addf %150, %153 : vector<32x128xf32>
    %155 = vector.shape_cast %147 : vector<16x64xf32> to vector<2x8x64xf32>
    %156 = vector.extract_strided_slice %154 {offsets = [0, 0], sizes = [32, 64], strides = [1, 1]} : vector<32x128xf32> to vector<32x64xf32>
    %157 = vector.shape_cast %156 : vector<32x64xf32> to vector<2x16x64xf32>
    %158 = vector.extract_strided_slice %154 {offsets = [0, 64], sizes = [32, 64], strides = [1, 1]} : vector<32x128xf32> to vector<32x64xf32>
    %159 = vector.shape_cast %158 : vector<32x64xf32> to vector<2x16x64xf32>
    %160 = vector.extract_strided_slice %155 {offsets = [0, 0, 0], sizes = [2, 8, 16], strides = [1, 1, 1]} : vector<2x8x64xf32> to vector<2x8x16xf32>
    %cst_64 = arith.constant 1.250000e-01 : f32
    %161 = vector.broadcast %cst_64 : f32 to vector<2x8x16xf32>
    %162 = arith.mulf %160, %161 : vector<2x8x16xf32>
    %163 = arith.truncf %162 : vector<2x8x16xf32> to vector<2x8x16xbf16>
    %164 = vector.extract_strided_slice %157 {offsets = [0, 0, 0], sizes = [2, 16, 16], strides = [1, 1, 1]} : vector<2x16x64xf32> to vector<2x16x16xf32>
    %165 = arith.truncf %164 : vector<2x16x16xf32> to vector<2x16x16xbf16>
    %166 = vector.extract_strided_slice %159 {offsets = [0, 0, 0], sizes = [2, 16, 16], strides = [1, 1, 1]} : vector<2x16x64xf32> to vector<2x16x16xf32>
    %167 = arith.truncf %166 : vector<2x16x16xf32> to vector<2x16x16xbf16>
    "tpu.trace_start"() <{level = 10 : i32, message = "nqd,nkd->nqk"}> : () -> ()
    %cst_65 = arith.constant dense<0.000000e+00> : vector<2x8x16xf32>
    %168 = tpu.matmul %163, %165, %cst_65 {dimension_numbers = #tpu.dot_dimension_numbers<[2], [2], [1], [1], [0, 0, 0, 1, 1, 1], [0], [0]>} : vector<2x8x16xbf16>, vector<2x16x16xbf16>, vector<2x8x16xf32> -> vector<2x8x16xf32>
    "tpu.trace_stop"() : () -> ()
    %cst_66 = arith.constant dense<0xFF800000> : vector<2x8xf32>
    %169 = vector.multi_reduction <maximumf>, %168, %cst_66 [2] : vector<2x8x16xf32> to vector<2x8xf32>
    %170 = vector.shape_cast %169 : vector<2x8xf32> to vector<2x8x1xf32>
    %171 = vector.broadcast %170 : vector<2x8x1xf32> to vector<2x8x16xf32>
    %172 = arith.subf %168, %171 : vector<2x8x16xf32>
    %173 = math.exp %172 : vector<2x8x16xf32>
    %cst_67 = arith.constant dense<0.000000e+00> : vector<2x8xf32>
    %174 = vector.multi_reduction <add>, %173, %cst_67 [2] : vector<2x8x16xf32> to vector<2x8xf32>
    %175 = vector.shape_cast %174 : vector<2x8xf32> to vector<2x8x1xf32>
    %176 = tpu.reciprocal %175 {approx = true} : vector<2x8x1xf32> -> vector<2x8x1xf32>
    %177 = vector.broadcast %176 : vector<2x8x1xf32> to vector<2x8x16xf32>
    %178 = arith.mulf %173, %177 : vector<2x8x16xf32>
    %179 = arith.truncf %178 : vector<2x8x16xf32> to vector<2x8x16xbf16>
    "tpu.trace_start"() <{level = 10 : i32, message = "nqk,nkd->nqd"}> : () -> ()
    %cst_68 = arith.constant dense<0.000000e+00> : vector<2x8x16xf32>
    %180 = tpu.matmul %179, %167, %cst_68 {dimension_numbers = #tpu.dot_dimension_numbers<[2], [1], [1], [2], [0, 0, 0, 1, 1, 2], [0], [0]>} : vector<2x8x16xbf16>, vector<2x16x16xbf16>, vector<2x8x16xf32> -> vector<2x8x16xf32>
    "tpu.trace_stop"() : () -> ()
    %181 = vector.extract_strided_slice %155 {offsets = [0, 0, 16], sizes = [2, 8, 16], strides = [1, 1, 1]} : vector<2x8x64xf32> to vector<2x8x16xf32>
    %cst_69 = arith.constant 1.250000e-01 : f32
    %182 = vector.broadcast %cst_69 : f32 to vector<2x8x16xf32>
    %183 = arith.mulf %181, %182 : vector<2x8x16xf32>
    %184 = arith.truncf %183 : vector<2x8x16xf32> to vector<2x8x16xbf16>
    %185 = vector.extract_strided_slice %157 {offsets = [0, 0, 16], sizes = [2, 16, 16], strides = [1, 1, 1]} : vector<2x16x64xf32> to vector<2x16x16xf32>
    %186 = arith.truncf %185 : vector<2x16x16xf32> to vector<2x16x16xbf16>
    %187 = vector.extract_strided_slice %159 {offsets = [0, 0, 16], sizes = [2, 16, 16], strides = [1, 1, 1]} : vector<2x16x64xf32> to vector<2x16x16xf32>
    %188 = arith.truncf %187 : vector<2x16x16xf32> to vector<2x16x16xbf16>
    "tpu.trace_start"() <{level = 10 : i32, message = "nqd,nkd->nqk"}> : () -> ()
    %cst_70 = arith.constant dense<0.000000e+00> : vector<2x8x16xf32>
    %189 = tpu.matmul %184, %186, %cst_70 {dimension_numbers = #tpu.dot_dimension_numbers<[2], [2], [1], [1], [0, 0, 0, 1, 1, 1], [0], [0]>} : vector<2x8x16xbf16>, vector<2x16x16xbf16>, vector<2x8x16xf32> -> vector<2x8x16xf32>
    "tpu.trace_stop"() : () -> ()
    %cst_71 = arith.constant dense<0xFF800000> : vector<2x8xf32>
    %190 = vector.multi_reduction <maximumf>, %189, %cst_71 [2] : vector<2x8x16xf32> to vector<2x8xf32>
    %191 = vector.shape_cast %190 : vector<2x8xf32> to vector<2x8x1xf32>
    %192 = vector.broadcast %191 : vector<2x8x1xf32> to vector<2x8x16xf32>
    %193 = arith.subf %189, %192 : vector<2x8x16xf32>
    %194 = math.exp %193 : vector<2x8x16xf32>
    %cst_72 = arith.constant dense<0.000000e+00> : vector<2x8xf32>
    %195 = vector.multi_reduction <add>, %194, %cst_72 [2] : vector<2x8x16xf32> to vector<2x8xf32>
    %196 = vector.shape_cast %195 : vector<2x8xf32> to vector<2x8x1xf32>
    %197 = tpu.reciprocal %196 {approx = true} : vector<2x8x1xf32> -> vector<2x8x1xf32>
    %198 = vector.broadcast %197 : vector<2x8x1xf32> to vector<2x8x16xf32>
    %199 = arith.mulf %194, %198 : vector<2x8x16xf32>
    %200 = arith.truncf %199 : vector<2x8x16xf32> to vector<2x8x16xbf16>
    "tpu.trace_start"() <{level = 10 : i32, message = "nqk,nkd->nqd"}> : () -> ()
    %cst_73 = arith.constant dense<0.000000e+00> : vector<2x8x16xf32>
    %201 = tpu.matmul %200, %188, %cst_73 {dimension_numbers = #tpu.dot_dimension_numbers<[2], [1], [1], [2], [0, 0, 0, 1, 1, 2], [0], [0]>} : vector<2x8x16xbf16>, vector<2x16x16xbf16>, vector<2x8x16xf32> -> vector<2x8x16xf32>
    "tpu.trace_stop"() : () -> ()
    %202 = vector.extract_strided_slice %155 {offsets = [0, 0, 32], sizes = [2, 8, 16], strides = [1, 1, 1]} : vector<2x8x64xf32> to vector<2x8x16xf32>
    %cst_74 = arith.constant 1.250000e-01 : f32
    %203 = vector.broadcast %cst_74 : f32 to vector<2x8x16xf32>
    %204 = arith.mulf %202, %203 : vector<2x8x16xf32>
    %205 = arith.truncf %204 : vector<2x8x16xf32> to vector<2x8x16xbf16>
    %206 = vector.extract_strided_slice %157 {offsets = [0, 0, 32], sizes = [2, 16, 16], strides = [1, 1, 1]} : vector<2x16x64xf32> to vector<2x16x16xf32>
    %207 = arith.truncf %206 : vector<2x16x16xf32> to vector<2x16x16xbf16>
    %208 = vector.extract_strided_slice %159 {offsets = [0, 0, 32], sizes = [2, 16, 16], strides = [1, 1, 1]} : vector<2x16x64xf32> to vector<2x16x16xf32>
    %209 = arith.truncf %208 : vector<2x16x16xf32> to vector<2x16x16xbf16>
    "tpu.trace_start"() <{level = 10 : i32, message = "nqd,nkd->nqk"}> : () -> ()
    %cst_75 = arith.constant dense<0.000000e+00> : vector<2x8x16xf32>
    %210 = tpu.matmul %205, %207, %cst_75 {dimension_numbers = #tpu.dot_dimension_numbers<[2], [2], [1], [1], [0, 0, 0, 1, 1, 1], [0], [0]>} : vector<2x8x16xbf16>, vector<2x16x16xbf16>, vector<2x8x16xf32> -> vector<2x8x16xf32>
    "tpu.trace_stop"() : () -> ()
    %cst_76 = arith.constant dense<0xFF800000> : vector<2x8xf32>
    %211 = vector.multi_reduction <maximumf>, %210, %cst_76 [2] : vector<2x8x16xf32> to vector<2x8xf32>
    %212 = vector.shape_cast %211 : vector<2x8xf32> to vector<2x8x1xf32>
    %213 = vector.broadcast %212 : vector<2x8x1xf32> to vector<2x8x16xf32>
    %214 = arith.subf %210, %213 : vector<2x8x16xf32>
    %215 = math.exp %214 : vector<2x8x16xf32>
    %cst_77 = arith.constant dense<0.000000e+00> : vector<2x8xf32>
    %216 = vector.multi_reduction <add>, %215, %cst_77 [2] : vector<2x8x16xf32> to vector<2x8xf32>
    %217 = vector.shape_cast %216 : vector<2x8xf32> to vector<2x8x1xf32>
    %218 = tpu.reciprocal %217 {approx = true} : vector<2x8x1xf32> -> vector<2x8x1xf32>
    %219 = vector.broadcast %218 : vector<2x8x1xf32> to vector<2x8x16xf32>
    %220 = arith.mulf %215, %219 : vector<2x8x16xf32>
    %221 = arith.truncf %220 : vector<2x8x16xf32> to vector<2x8x16xbf16>
    "tpu.trace_start"() <{level = 10 : i32, message = "nqk,nkd->nqd"}> : () -> ()
    %cst_78 = arith.constant dense<0.000000e+00> : vector<2x8x16xf32>
    %222 = tpu.matmul %221, %209, %cst_78 {dimension_numbers = #tpu.dot_dimension_numbers<[2], [1], [1], [2], [0, 0, 0, 1, 1, 2], [0], [0]>} : vector<2x8x16xbf16>, vector<2x16x16xbf16>, vector<2x8x16xf32> -> vector<2x8x16xf32>
    "tpu.trace_stop"() : () -> ()
    %223 = vector.extract_strided_slice %155 {offsets = [0, 0, 48], sizes = [2, 8, 16], strides = [1, 1, 1]} : vector<2x8x64xf32> to vector<2x8x16xf32>
    %cst_79 = arith.constant 1.250000e-01 : f32
    %224 = vector.broadcast %cst_79 : f32 to vector<2x8x16xf32>
    %225 = arith.mulf %223, %224 : vector<2x8x16xf32>
    %226 = arith.truncf %225 : vector<2x8x16xf32> to vector<2x8x16xbf16>
    %227 = vector.extract_strided_slice %157 {offsets = [0, 0, 48], sizes = [2, 16, 16], strides = [1, 1, 1]} : vector<2x16x64xf32> to vector<2x16x16xf32>
    %228 = arith.truncf %227 : vector<2x16x16xf32> to vector<2x16x16xbf16>
    %229 = vector.extract_strided_slice %159 {offsets = [0, 0, 48], sizes = [2, 16, 16], strides = [1, 1, 1]} : vector<2x16x64xf32> to vector<2x16x16xf32>
    %230 = arith.truncf %229 : vector<2x16x16xf32> to vector<2x16x16xbf16>
    "tpu.trace_start"() <{level = 10 : i32, message = "nqd,nkd->nqk"}> : () -> ()
    %cst_80 = arith.constant dense<0.000000e+00> : vector<2x8x16xf32>
    %231 = tpu.matmul %226, %228, %cst_80 {dimension_numbers = #tpu.dot_dimension_numbers<[2], [2], [1], [1], [0, 0, 0, 1, 1, 1], [0], [0]>} : vector<2x8x16xbf16>, vector<2x16x16xbf16>, vector<2x8x16xf32> -> vector<2x8x16xf32>
    "tpu.trace_stop"() : () -> ()
    %cst_81 = arith.constant dense<0xFF800000> : vector<2x8xf32>
    %232 = vector.multi_reduction <maximumf>, %231, %cst_81 [2] : vector<2x8x16xf32> to vector<2x8xf32>
    %233 = vector.shape_cast %232 : vector<2x8xf32> to vector<2x8x1xf32>
    %234 = vector.broadcast %233 : vector<2x8x1xf32> to vector<2x8x16xf32>
    %235 = arith.subf %231, %234 : vector<2x8x16xf32>
    %236 = math.exp %235 : vector<2x8x16xf32>
    %cst_82 = arith.constant dense<0.000000e+00> : vector<2x8xf32>
    %237 = vector.multi_reduction <add>, %236, %cst_82 [2] : vector<2x8x16xf32> to vector<2x8xf32>
    %238 = vector.shape_cast %237 : vector<2x8xf32> to vector<2x8x1xf32>
    %239 = tpu.reciprocal %238 {approx = true} : vector<2x8x1xf32> -> vector<2x8x1xf32>
    %240 = vector.broadcast %239 : vector<2x8x1xf32> to vector<2x8x16xf32>
    %241 = arith.mulf %236, %240 : vector<2x8x16xf32>
    %242 = arith.truncf %241 : vector<2x8x16xf32> to vector<2x8x16xbf16>
    "tpu.trace_start"() <{level = 10 : i32, message = "nqk,nkd->nqd"}> : () -> ()
    %cst_83 = arith.constant dense<0.000000e+00> : vector<2x8x16xf32>
    %243 = tpu.matmul %242, %230, %cst_83 {dimension_numbers = #tpu.dot_dimension_numbers<[2], [1], [1], [2], [0, 0, 0, 1, 1, 2], [0], [0]>} : vector<2x8x16xbf16>, vector<2x16x16xbf16>, vector<2x8x16xf32> -> vector<2x8x16xf32>
    "tpu.trace_stop"() : () -> ()
    %244 = tpu.concatenate %180, %201, %222, %243 in 2 : vector<2x8x16xf32>, vector<2x8x16xf32>, vector<2x8x16xf32>, vector<2x8x16xf32> -> vector<2x8x64xf32>
    %245 = vector.shape_cast %244 : vector<2x8x64xf32> to vector<16x64xf32>
    %c0_84 = arith.constant 0 : index
    %c0_85 = arith.constant 0 : index
    %c0_86 = arith.constant 0 : index
    %246 = vector.load %arg13[%c0_84, %c0_85, %c0_86] : memref<1x64x64xbf16, #tpu.memory_space<vmem>>, vector<1x64x64xbf16>
    %247 = vector.shape_cast %246 : vector<1x64x64xbf16> to vector<64x64xbf16>
    %248 = arith.truncf %245 : vector<16x64xf32> to vector<16x64xbf16>
    %cst_87 = arith.constant dense<0.000000e+00> : vector<16x64xf32>
    %249 = tpu.matmul %248, %247, %cst_87 {dimension_numbers = #tpu.dot_dimension_numbers<[1], [0], [0], [1], [0, 0, 1, 1], [], []>} : vector<16x64xbf16>, vector<64x64xbf16>, vector<16x64xf32> -> vector<16x64xf32>
    %c0_88 = arith.constant 0 : index
    %c0_89 = arith.constant 0 : index
    %c0_90 = arith.constant 0 : index
    %250 = vector.load %arg14[%c0_88, %c0_89, %c0_90] : memref<1x1x64xf32, #tpu.memory_space<vmem>>, vector<1x1x64xf32>
    %251 = vector.shape_cast %250 : vector<1x1x64xf32> to vector<1x64xf32>
    %252 = vector.broadcast %251 : vector<1x64xf32> to vector<16x64xf32>
    %253 = arith.addf %249, %252 : vector<16x64xf32>
    %254 = arith.addf %253, %139 : vector<16x64xf32>
    %cst_91 = arith.constant dense<0.000000e+00> : vector<16xf32>
    %255 = vector.multi_reduction <add>, %254, %cst_91 [1] : vector<16x64xf32> to vector<16xf32>
    %256 = vector.shape_cast %255 : vector<16xf32> to vector<16x1xf32>
    %cst_92 = arith.constant 6.400000e+01 : f32
    %257 = vector.broadcast %cst_92 : f32 to vector<16x1xf32>
    %258 = arith.divf %256, %257 : vector<16x1xf32>
    %259 = vector.broadcast %258 : vector<16x1xf32> to vector<16x64xf32>
    %260 = arith.subf %254, %259 : vector<16x64xf32>
    %261 = arith.mulf %260, %260 : vector<16x64xf32>
    %cst_93 = arith.constant dense<0.000000e+00> : vector<16xf32>
    %262 = vector.multi_reduction <add>, %261, %cst_93 [1] : vector<16x64xf32> to vector<16xf32>
    %263 = vector.shape_cast %262 : vector<16xf32> to vector<16x1xf32>
    %cst_94 = arith.constant 6.400000e+01 : f32
    %264 = vector.broadcast %cst_94 : f32 to vector<16x1xf32>
    %265 = arith.divf %263, %264 : vector<16x1xf32>
    %cst_95 = arith.constant 9.99999974E-6 : f32
    %266 = vector.broadcast %cst_95 : f32 to vector<16x1xf32>
    %267 = arith.addf %265, %266 : vector<16x1xf32>
    %268 = math.rsqrt %267 : vector<16x1xf32>
    %269 = vector.broadcast %268 : vector<16x1xf32> to vector<16x64xf32>
    %270 = arith.mulf %260, %269 : vector<16x64xf32>
    %c0_96 = arith.constant 0 : index
    %c0_97 = arith.constant 0 : index
    %c0_98 = arith.constant 0 : index
    %271 = vector.load %arg15[%c0_96, %c0_97, %c0_98] : memref<1x1x64xf32, #tpu.memory_space<vmem>>, vector<1x1x64xf32>
    %272 = vector.shape_cast %271 : vector<1x1x64xf32> to vector<1x64xf32>
    %273 = vector.broadcast %272 : vector<1x64xf32> to vector<16x64xf32>
    %274 = arith.mulf %270, %273 : vector<16x64xf32>
    %c0_99 = arith.constant 0 : index
    %c0_100 = arith.constant 0 : index
    %c0_101 = arith.constant 0 : index
    %275 = vector.load %arg16[%c0_99, %c0_100, %c0_101] : memref<1x1x64xf32, #tpu.memory_space<vmem>>, vector<1x1x64xf32>
    %276 = vector.shape_cast %275 : vector<1x1x64xf32> to vector<1x64xf32>
    %277 = vector.broadcast %276 : vector<1x64xf32> to vector<16x64xf32>
    %278 = arith.addf %274, %277 : vector<16x64xf32>
    %c0_102 = arith.constant 0 : index
    %c0_103 = arith.constant 0 : index
    %c0_104 = arith.constant 0 : index
    %279 = vector.load %arg17[%c0_102, %c0_103, %c0_104] : memref<1x64x256xbf16, #tpu.memory_space<vmem>>, vector<1x64x256xbf16>
    %280 = vector.shape_cast %279 : vector<1x64x256xbf16> to vector<64x256xbf16>
    %281 = arith.truncf %278 : vector<16x64xf32> to vector<16x64xbf16>
    %cst_105 = arith.constant dense<0.000000e+00> : vector<16x256xf32>
    %282 = tpu.matmul %281, %280, %cst_105 {dimension_numbers = #tpu.dot_dimension_numbers<[1], [0], [0], [1], [0, 0, 1, 1], [], []>} : vector<16x64xbf16>, vector<64x256xbf16>, vector<16x256xf32> -> vector<16x256xf32>
    %c0_106 = arith.constant 0 : index
    %c0_107 = arith.constant 0 : index
    %c0_108 = arith.constant 0 : index
    %283 = vector.load %arg18[%c0_106, %c0_107, %c0_108] : memref<1x1x256xf32, #tpu.memory_space<vmem>>, vector<1x1x256xf32>
    %284 = vector.shape_cast %283 : vector<1x1x256xf32> to vector<1x256xf32>
    %285 = vector.broadcast %284 : vector<1x256xf32> to vector<16x256xf32>
    %286 = arith.addf %282, %285 : vector<16x256xf32>
    %cst_109 = arith.constant 0.000000e+00 : f32
    %287 = vector.broadcast %cst_109 : f32 to vector<16x256xf32>
    %288 = arith.maximumf %286, %287 : vector<16x256xf32>
    %c0_110 = arith.constant 0 : index
    %c0_111 = arith.constant 0 : index
    %c0_112 = arith.constant 0 : index
    %289 = vector.load %arg19[%c0_110, %c0_111, %c0_112] : memref<1x256x64xbf16, #tpu.memory_space<vmem>>, vector<1x256x64xbf16>
    %290 = vector.shape_cast %289 : vector<1x256x64xbf16> to vector<256x64xbf16>
    %291 = arith.truncf %288 : vector<16x256xf32> to vector<16x256xbf16>
    %cst_113 = arith.constant dense<0.000000e+00> : vector<16x64xf32>
    %292 = tpu.matmul %291, %290, %cst_113 {dimension_numbers = #tpu.dot_dimension_numbers<[1], [0], [0], [1], [0, 0, 1, 1], [], []>} : vector<16x256xbf16>, vector<256x64xbf16>, vector<16x64xf32> -> vector<16x64xf32>
    %c0_114 = arith.constant 0 : index
    %c0_115 = arith.constant 0 : index
    %c0_116 = arith.constant 0 : index
    %293 = vector.load %arg20[%c0_114, %c0_115, %c0_116] : memref<1x1x64xf32, #tpu.memory_space<vmem>>, vector<1x1x64xf32>
    %294 = vector.shape_cast %293 : vector<1x1x64xf32> to vector<1x64xf32>
    %295 = vector.broadcast %294 : vector<1x64xf32> to vector<16x64xf32>
    %296 = arith.addf %292, %295 : vector<16x64xf32>
    %297 = arith.addf %296, %278 : vector<16x64xf32>
    %cst_117 = arith.constant dense<0.000000e+00> : vector<16xf32>
    %298 = vector.multi_reduction <add>, %297, %cst_117 [1] : vector<16x64xf32> to vector<16xf32>
    %299 = vector.shape_cast %298 : vector<16xf32> to vector<16x1xf32>
    %cst_118 = arith.constant 6.400000e+01 : f32
    %300 = vector.broadcast %cst_118 : f32 to vector<16x1xf32>
    %301 = arith.divf %299, %300 : vector<16x1xf32>
    %302 = vector.broadcast %301 : vector<16x1xf32> to vector<16x64xf32>
    %303 = arith.subf %297, %302 : vector<16x64xf32>
    %304 = arith.mulf %303, %303 : vector<16x64xf32>
    %cst_119 = arith.constant dense<0.000000e+00> : vector<16xf32>
    %305 = vector.multi_reduction <add>, %304, %cst_119 [1] : vector<16x64xf32> to vector<16xf32>
    %306 = vector.shape_cast %305 : vector<16xf32> to vector<16x1xf32>
    %cst_120 = arith.constant 6.400000e+01 : f32
    %307 = vector.broadcast %cst_120 : f32 to vector<16x1xf32>
    %308 = arith.divf %306, %307 : vector<16x1xf32>
    %cst_121 = arith.constant 9.99999974E-6 : f32
    %309 = vector.broadcast %cst_121 : f32 to vector<16x1xf32>
    %310 = arith.addf %308, %309 : vector<16x1xf32>
    %311 = math.rsqrt %310 : vector<16x1xf32>
    %312 = vector.broadcast %311 : vector<16x1xf32> to vector<16x64xf32>
    %313 = arith.mulf %303, %312 : vector<16x64xf32>
    %c0_122 = arith.constant 0 : index
    %c0_123 = arith.constant 0 : index
    %c0_124 = arith.constant 0 : index
    %314 = vector.load %arg21[%c0_122, %c0_123, %c0_124] : memref<1x1x64xf32, #tpu.memory_space<vmem>>, vector<1x1x64xf32>
    %315 = vector.shape_cast %314 : vector<1x1x64xf32> to vector<1x64xf32>
    %316 = vector.broadcast %315 : vector<1x64xf32> to vector<16x64xf32>
    %317 = arith.mulf %313, %316 : vector<16x64xf32>
    %c0_125 = arith.constant 0 : index
    %c0_126 = arith.constant 0 : index
    %c0_127 = arith.constant 0 : index
    %318 = vector.load %arg22[%c0_125, %c0_126, %c0_127] : memref<1x1x64xf32, #tpu.memory_space<vmem>>, vector<1x1x64xf32>
    %319 = vector.shape_cast %318 : vector<1x1x64xf32> to vector<1x64xf32>
    %320 = vector.broadcast %319 : vector<1x64xf32> to vector<16x64xf32>
    %321 = arith.addf %317, %320 : vector<16x64xf32>
    %322 = vector.shape_cast %321 : vector<16x64xf32> to vector<2x8x64xf32>
    %c0_128 = arith.constant 0 : index
    %c0_129 = arith.constant 0 : index
    %c0_130 = arith.constant 0 : index
    %323 = vector.load %arg26[%c0_128, %c0_129, %c0_130] : memref<2x8x64xf32, #tpu.memory_space<vmem>>, vector<2x8x64xf32>
    tpu.vector_store %arg26[%c0_128, %c0_129, %c0_130], %322 {strides = array<i32>} : memref<2x8x64xf32, #tpu.memory_space<vmem>>, vector<2x8x64xf32>,
    %c1_i32 = arith.constant 1 : i32
    %324 = arith.cmpi eq, %arg0, %c1_i32 : i32
    %325 = arith.extui %324 : i1 to i32
    %c0_i32_131 = arith.constant 0 : i32
    %326 = arith.cmpi ne, %325, %c0_i32_131 : i32
    scf.if %326 {
      %c0_132 = arith.constant 0 : index
      %c0_133 = arith.constant 0 : index
      %327 = vector.load %arg23[%c0_132, %c0_133] : memref<64x128xbf16, #tpu.memory_space<vmem>>, vector<64x128xbf16>
      %328 = arith.truncf %321 : vector<16x64xf32> to vector<16x64xbf16>
      %cst_134 = arith.constant dense<0.000000e+00> : vector<16x128xf32>
      %329 = tpu.matmul %328, %327, %cst_134 {dimension_numbers = #tpu.dot_dimension_numbers<[1], [0], [0], [1], [0, 0, 1, 1], [], []>} : vector<16x64xbf16>, vector<64x128xbf16>, vector<16x128xf32> -> vector<16x128xf32>
      %c0_135 = arith.constant 0 : index
      %c0_136 = arith.constant 0 : index
      %330 = vector.load %arg24[%c0_135, %c0_136] : memref<1x128xf32, #tpu.memory_space<vmem>>, vector<1x128xf32>
      %331 = vector.broadcast %330 : vector<1x128xf32> to vector<16x128xf32>
      %332 = arith.addf %329, %331 : vector<16x128xf32>
      %333 = vector.shape_cast %332 : vector<16x128xf32> to vector<2x8x128xf32>
      %c0_137 = arith.constant 0 : index
      %c0_138 = arith.constant 0 : index
      %c0_139 = arith.constant 0 : index
      %334 = vector.load %arg25[%c0_137, %c0_138, %c0_139] : memref<2x8x128xf32, #tpu.memory_space<vmem>>, vector<2x8x128xf32>
      tpu.vector_store %arg25[%c0_137, %c0_138, %c0_139], %333 {strides = array<i32>} : memref<2x8x128xf32, #tpu.memory_space<vmem>>, vector<2x8x128xf32>,
    } else {
    }
    return
  }
  func.func @transform_0(%arg0: i32) -> (i32, i32, i32) {
    %c0_i32 = arith.constant 0 : i32
    %c0_i32_0 = arith.constant 0 : i32
    %c0_i32_1 = arith.constant 0 : i32
    %c0_i32_2 = arith.constant 0 : i32
    return %c0_i32, %c0_i32_0, %c0_i32_1 : i32, i32, i32
  }
  func.func @transform_1(%arg0: i32) -> (i32, i32, i32) {
    %c0_i32 = arith.constant 0 : i32
    %c0_i32_0 = arith.constant 0 : i32
    %c0_i32_1 = arith.constant 0 : i32
    %c0_i32_2 = arith.constant 0 : i32
    return %c0_i32, %c0_i32_0, %c0_i32_1 : i32, i32, i32
  }
  func.func @transform_2(%arg0: i32) -> (i32, i32, i32) {
    %c0_i32 = arith.constant 0 : i32
    %c0_i32_0 = arith.constant 0 : i32
    %c0_i32_1 = arith.constant 0 : i32
    return %arg0, %c0_i32, %c0_i32_0 : i32, i32, i32
  }
  func.func @transform_3(%arg0: i32) -> (i32, i32, i32) {
    %c0_i32 = arith.constant 0 : i32
    %c0_i32_0 = arith.constant 0 : i32
    %c0_i32_1 = arith.constant 0 : i32
    return %arg0, %c0_i32, %c0_i32_0 : i32, i32, i32
  }
  func.func @transform_4(%arg0: i32) -> (i32, i32, i32) {
    %c0_i32 = arith.constant 0 : i32
    %c0_i32_0 = arith.constant 0 : i32
    %c0_i32_1 = arith.constant 0 : i32
    return %arg0, %c0_i32, %c0_i32_0 : i32, i32, i32
  }
  func.func @transform_5(%arg0: i32) -> (i32, i32, i32) {
    %c0_i32 = arith.constant 0 : i32
    %c0_i32_0 = arith.constant 0 : i32
    %c0_i32_1 = arith.constant 0 : i32
    return %arg0, %c0_i32, %c0_i32_0 : i32, i32, i32
  }
  func.func @transform_6(%arg0: i32) -> (i32, i32, i32) {
    %c0_i32 = arith.constant 0 : i32
    %c0_i32_0 = arith.constant 0 : i32
    %c0_i32_1 = arith.constant 0 : i32
    return %arg0, %c0_i32, %c0_i32_0 : i32, i32, i32
  }
  func.func @transform_7(%arg0: i32) -> (i32, i32, i32) {
    %c0_i32 = arith.constant 0 : i32
    %c0_i32_0 = arith.constant 0 : i32
    %c0_i32_1 = arith.constant 0 : i32
    return %arg0, %c0_i32, %c0_i32_0 : i32, i32, i32
  }
  func.func @transform_8(%arg0: i32) -> (i32, i32, i32) {
    %c0_i32 = arith.constant 0 : i32
    %c0_i32_0 = arith.constant 0 : i32
    %c0_i32_1 = arith.constant 0 : i32
    return %arg0, %c0_i32, %c0_i32_0 : i32, i32, i32
  }
  func.func @transform_9(%arg0: i32) -> (i32, i32, i32) {
    %c0_i32 = arith.constant 0 : i32
    %c0_i32_0 = arith.constant 0 : i32
    %c0_i32_1 = arith.constant 0 : i32
    return %arg0, %c0_i32, %c0_i32_0 : i32, i32, i32
  }
  func.func @transform_10(%arg0: i32) -> (i32, i32, i32) {
    %c0_i32 = arith.constant 0 : i32
    %c0_i32_0 = arith.constant 0 : i32
    %c0_i32_1 = arith.constant 0 : i32
    return %arg0, %c0_i32, %c0_i32_0 : i32, i32, i32
  }
  func.func @transform_11(%arg0: i32) -> (i32, i32, i32) {
    %c0_i32 = arith.constant 0 : i32
    %c0_i32_0 = arith.constant 0 : i32
    %c0_i32_1 = arith.constant 0 : i32
    return %arg0, %c0_i32, %c0_i32_0 : i32, i32, i32
  }
  func.func @transform_12(%arg0: i32) -> (i32, i32, i32) {
    %c0_i32 = arith.constant 0 : i32
    %c0_i32_0 = arith.constant 0 : i32
    %c0_i32_1 = arith.constant 0 : i32
    return %arg0, %c0_i32, %c0_i32_0 : i32, i32, i32
  }
  func.func @transform_13(%arg0: i32) -> (i32, i32, i32) {
    %c0_i32 = arith.constant 0 : i32
    %c0_i32_0 = arith.constant 0 : i32
    %c0_i32_1 = arith.constant 0 : i32
    return %arg0, %c0_i32, %c0_i32_0 : i32, i32, i32
  }
  func.func @transform_14(%arg0: i32) -> (i32, i32, i32) {
    %c0_i32 = arith.constant 0 : i32
    %c0_i32_0 = arith.constant 0 : i32
    %c0_i32_1 = arith.constant 0 : i32
    return %arg0, %c0_i32, %c0_i32_0 : i32, i32, i32
  }
  func.func @transform_15(%arg0: i32) -> (i32, i32, i32) {
    %c0_i32 = arith.constant 0 : i32
    %c0_i32_0 = arith.constant 0 : i32
    %c0_i32_1 = arith.constant 0 : i32
    return %arg0, %c0_i32, %c0_i32_0 : i32, i32, i32
  }
  func.func @transform_16(%arg0: i32) -> (i32, i32, i32) {
    %c0_i32 = arith.constant 0 : i32
    %c0_i32_0 = arith.constant 0 : i32
    %c0_i32_1 = arith.constant 0 : i32
    return %arg0, %c0_i32, %c0_i32_0 : i32, i32, i32
  }
  func.func @transform_17(%arg0: i32) -> (i32, i32, i32) {
    %c0_i32 = arith.constant 0 : i32
    %c0_i32_0 = arith.constant 0 : i32
    %c0_i32_1 = arith.constant 0 : i32
    return %arg0, %c0_i32, %c0_i32_0 : i32, i32, i32
  }
  func.func @transform_18(%arg0: i32) -> (i32, i32, i32) {
    %c0_i32 = arith.constant 0 : i32
    %c0_i32_0 = arith.constant 0 : i32
    %c0_i32_1 = arith.constant 0 : i32
    return %arg0, %c0_i32, %c0_i32_0 : i32, i32, i32
  }
  func.func @transform_19(%arg0: i32) -> (i32, i32, i32) {
    %c0_i32 = arith.constant 0 : i32
    %c0_i32_0 = arith.constant 0 : i32
    %c0_i32_1 = arith.constant 0 : i32
    return %arg0, %c0_i32, %c0_i32_0 : i32, i32, i32
  }
  func.func @transform_20(%arg0: i32) -> (i32, i32, i32) {
    %c0_i32 = arith.constant 0 : i32
    %c0_i32_0 = arith.constant 0 : i32
    %c0_i32_1 = arith.constant 0 : i32
    return %arg0, %c0_i32, %c0_i32_0 : i32, i32, i32
  }
  func.func @transform_21(%arg0: i32) -> (i32, i32, i32) {
    %c0_i32 = arith.constant 0 : i32
    %c0_i32_0 = arith.constant 0 : i32
    %c0_i32_1 = arith.constant 0 : i32
    return %arg0, %c0_i32, %c0_i32_0 : i32, i32, i32
  }
  func.func @transform_22(%arg0: i32) -> (i32, i32) {
    %c0_i32 = arith.constant 0 : i32
    %c0_i32_0 = arith.constant 0 : i32
    %c0_i32_1 = arith.constant 0 : i32
    return %c0_i32, %c0_i32_0 : i32, i32
  }
  func.func @transform_23(%arg0: i32) -> (i32, i32) {
    %c0_i32 = arith.constant 0 : i32
    %c0_i32_0 = arith.constant 0 : i32
    %c0_i32_1 = arith.constant 0 : i32
    return %c0_i32, %c0_i32_0 : i32, i32
  }
  func.func @transform_24(%arg0: i32) -> (i32, i32, i32) {
    %c0_i32 = arith.constant 0 : i32
    %c0_i32_0 = arith.constant 0 : i32
    %c0_i32_1 = arith.constant 0 : i32
    %c0_i32_2 = arith.constant 0 : i32
    return %c0_i32, %c0_i32_0, %c0_i32_1 : i32, i32, i32
  }
}

</mosaic_0001>

<llo_original>
// kernel: decoder_forward.1
$region0: #{decoder_forward.1}
  #allocation0 [shape = 'u32[]', space=smem, size = 0x4, offset = 0x4, fixed_abs, tag = 'smem constant byte address 0x4 - core index']
  #allocation1 [shape = 'u32[144,128]{1,0:T(1,128)}', space=vmem, size = 0x12000, scoped, tag = 'internal scratch']
  #allocation2 [shape = 'f32[2,8,64]{2,1,0:T(8,128)}', space=vmem, size = 0x2000, scoped, tag = 'scratch operand']
  %s0 = inlined_call_operand.vmem [shape: bf16[2,8,64], index: 0, kind: input, shape index: {}]
  %s1 = inlined_call_operand.vmem [shape: bf16[2,16,64], index: 1, kind: input, shape index: {}]
  %s2 = inlined_call_operand.vmem [shape: bf16[2,64,192], index: 2, kind: input, shape index: {}]
  %s3 = inlined_call_operand.vmem [shape: f32[2,1,192], index: 3, kind: input, shape index: {}]
  %s4 = inlined_call_operand.vmem [shape: bf16[2,64,64], index: 4, kind: input, shape index: {}]
  %s5 = inlined_call_operand.vmem [shape: f32[2,1,64], index: 5, kind: input, shape index: {}]
  %s6 = inlined_call_operand.vmem [shape: f32[2,1,64], index: 6, kind: input, shape index: {}]
  %s7 = inlined_call_operand.vmem [shape: f32[2,1,64], index: 7, kind: input, shape index: {}]
  %s8 = inlined_call_operand.vmem [shape: bf16[2,64,64], index: 8, kind: input, shape index: {}]
  %s9 = inlined_call_operand.vmem [shape: f32[2,1,64], index: 9, kind: input, shape index: {}]
  %s10 = inlined_call_operand.vmem [shape: bf16[2,64,128], index: 10, kind: input, shape index: {}]
  %s11 = inlined_call_operand.vmem [shape: f32[2,1,128], index: 11, kind: input, shape index: {}]
  %s12 = inlined_call_operand.vmem [shape: bf16[2,64,64], index: 12, kind: input, shape index: {}]
  %s13 = inlined_call_operand.vmem [shape: f32[2,1,64], index: 13, kind: input, shape index: {}]
  %s14 = inlined_call_operand.vmem [shape: f32[2,1,64], index: 14, kind: input, shape index: {}]
  %s15 = inlined_call_operand.vmem [shape: f32[2,1,64], index: 15, kind: input, shape index: {}]
  %s16 = inlined_call_operand.vmem [shape: bf16[2,64,256], index: 16, kind: input, shape index: {}]
  %s17 = inlined_call_operand.vmem [shape: f32[2,1,256], index: 17, kind: input, shape index: {}]
  %s18 = inlined_call_operand.vmem [shape: bf16[2,256,64], index: 18, kind: input, shape index: {}]
  %s19 = inlined_call_operand.vmem [shape: f32[2,1,64], index: 19, kind: input, shape index: {}]
  %s20 = inlined_call_operand.vmem [shape: f32[2,1,64], index: 20, kind: input, shape index: {}]
  %s21 = inlined_call_operand.vmem [shape: f32[2,1,64], index: 21, kind: input, shape index: {}]
  %s22 = inlined_call_operand.vmem [shape: bf16[64,128], index: 22, kind: input, shape index: {}]
  %s23 = inlined_call_operand.vmem [shape: f32[1,128], index: 23, kind: input, shape index: {}]
  %s24 = inlined_call_operand.hbm [shape: f32[2,8,128], index: 24, kind: output, shape index: {}]
  %s25 = sld [smem:[#allocation0]]
  $region137: #{decoder_forward.1} parent=0
    _
  %s27 = ssub.s32 1, %s25
  %s28 = scalar_select 0, %s27, %s25
  $region1: #{decoder_forward.1} parent=0
    #allocation3 [shape = 'u8[8192]{0}', space=vmem, size = 0x2000, scoped, tag = 'output window, operand 0, single buffered']
    #allocation4 [shape = 's32[2]{0}', space=sflag, size = 0x8, scoped, tag = 'scoped memory for decoder_forward.1']
    %29 = vsyncpa [#allocation4], 0
    loop: start=0, step=1, limit=4
    $region2: #{decoder_forward.1} parent=1 // loop_pre_header
      _
    $region3: #{decoder_forward.1} parent=1 // loop_header
      %s31 = sphi 0, %s35
      %p32 = scmp.ge.s32.totalorder %s31, 4
      %s39 = sphi 0, %s39
      %s41 = sphi 0, %s39
      %s42 = sphi 0, %s41
      %s56 = sphi 0, %s42
      %s60 = sphi 0, %s60
      %s62 = sphi 0, %s60
      %s63 = sphi 0, %s62
      %s77 = sphi 0, %s63
      %s83 = sphi 0, %s85
      %s86 = sphi 0, %s83
      %s87 = sphi 0, %s86
      %s103 = sphi 0, %s87
      %s109 = sphi 0, %s111
      %s112 = sphi 0, %s109
      %s113 = sphi 0, %s112
      %s129 = sphi 0, %s113
      %s135 = sphi 0, %s137
      %s138 = sphi 0, %s135
      %s139 = sphi 0, %s138
      %s155 = sphi 0, %s139
      %s161 = sphi 0, %s163
      %s164 = sphi 0, %s161
      %s165 = sphi 0, %s164
      %s181 = sphi 0, %s165
      %s187 = sphi 0, %s189
      %s190 = sphi 0, %s187
      %s191 = sphi 0, %s190
      %s207 = sphi 0, %s191
      %s213 = sphi 0, %s215
      %s216 = sphi 0, %s213
      %s217 = sphi 0, %s216
      %s233 = sphi 0, %s217
      %s239 = sphi 0, %s241
      %s242 = sphi 0, %s239
      %s243 = sphi 0, %s242
      %s259 = sphi 0, %s243
      %s265 = sphi 0, %s267
      %s268 = sphi 0, %s265
      %s269 = sphi 0, %s268
      %s285 = sphi 0, %s269
      %s291 = sphi 0, %s293
      %s294 = sphi 0, %s291
      %s295 = sphi 0, %s294
      %s311 = sphi 0, %s295
      %s317 = sphi 0, %s319
      %s320 = sphi 0, %s317
      %s321 = sphi 0, %s320
      %s337 = sphi 0, %s321
      %s343 = sphi 0, %s345
      %s346 = sphi 0, %s343
      %s347 = sphi 0, %s346
      %s363 = sphi 0, %s347
      %s369 = sphi 0, %s371
      %s372 = sphi 0, %s369
      %s373 = sphi 0, %s372
      %s389 = sphi 0, %s373
      %s395 = sphi 0, %s397
      %s398 = sphi 0, %s395
      %s399 = sphi 0, %s398
      %s415 = sphi 0, %s399
      %s421 = sphi 0, %s423
      %s424 = sphi 0, %s421
      %s425 = sphi 0, %s424
      %s441 = sphi 0, %s425
      %s447 = sphi 0, %s449
      %s450 = sphi 0, %s447
      %s451 = sphi 0, %s450
      %s467 = sphi 0, %s451
      %s473 = sphi 0, %s475
      %s476 = sphi 0, %s473
      %s477 = sphi 0, %s476
      %s493 = sphi 0, %s477
      %s499 = sphi 0, %s501
      %s502 = sphi 0, %s499
      %s503 = sphi 0, %s502
      %s519 = sphi 0, %s503
      %s525 = sphi 0, %s527
      %s528 = sphi 0, %s525
      %s529 = sphi 0, %s528
      %s545 = sphi 0, %s529
      %s551 = sphi 0, %s553
      %s554 = sphi 0, %s551
      %s555 = sphi 0, %s554
      %s571 = sphi 0, %s555
      %s577 = sphi 0, %s579
      %s580 = sphi 0, %s577
      %s581 = sphi 0, %s580
      %s597 = sphi 0, %s581
      %s601 = sphi 0, %s601
      %s603 = sphi 0, %s601
      %s604 = sphi 0, %s603
      %s618 = sphi 0, %s604
      %s622 = sphi 0, %s622
      %s624 = sphi 0, %s622
      %s625 = sphi 0, %s624
      %s639 = sphi 0, %s625
      %s643 = sphi 0, %s643
      %s645 = sphi 0, %s643
      %s646 = sphi 0, %s645
      %s660 = sphi 0, %s646
    $region4: #{decoder_forward.1} parent=1 // loop_header_branch
      %34 = sbr.rel (%p32) target = $region8
    $region5: #{decoder_forward.1} parent=1 // loop_body
      %s36 = ssub.s32 %s31, 1
      %s37 = ssub.s32 %s31, 2
      %s38 = sadd.s32 %s31, 1
      %s40 = sadd.s32 %s39, 1
      %p43 = scmp.eq.s32.totalorder %s31, 1
      %p44 = scmp.ne.s32.totalorder %s39, %s41
      %p45 = scmp.eq.s32.totalorder %s31, 0
      %p46 = por %p44, %p45
      %p47 = scmp.ne.s32.totalorder %s39, %s41
      %p48 = scmp.eq.s32.totalorder %s36, 1
      %p49 = por %p47, %p48
      %p50 = scmp.ne.s32.totalorder %s41, %s42
      %p51 = scmp.eq.s32.totalorder %s36, 0
      %p52 = por %p50, %p51
      %p53 = scmp.ne.s32.totalorder %s41, %s42
      %p54 = scmp.eq.s32.totalorder %s37, 1
      %p55 = por %p53, %p54
      %p57 = scmp.ne.s32.totalorder %s42, %s56
      %p58 = scmp.eq.s32.totalorder %s37, 0
      %p59 = por %p57, %p58
      %s61 = sadd.s32 %s60, 1
      %p64 = scmp.eq.s32.totalorder %s31, 1
      %p65 = scmp.ne.s32.totalorder %s60, %s62
      %p66 = scmp.eq.s32.totalorder %s31, 0
      %p67 = por %p65, %p66
      %p68 = scmp.ne.s32.totalorder %s60, %s62
      %p69 = scmp.eq.s32.totalorder %s36, 1
      %p70 = por %p68, %p69
      %p71 = scmp.ne.s32.totalorder %s62, %s63
      %p72 = scmp.eq.s32.totalorder %s36, 0
      %p73 = por %p71, %p72
      %p74 = scmp.ne.s32.totalorder %s62, %s63
      %p75 = scmp.eq.s32.totalorder %s37, 1
      %p76 = por %p74, %p75
      %p78 = scmp.ne.s32.totalorder %s63, %s77
      %p79 = scmp.eq.s32.totalorder %s37, 0
      %p80 = por %p78, %p79
      %s81 = ssub.s32 %s31, %s38
      %p82 = scmp.eq.s32.totalorder %s81, 0
      %s84 = sadd.s32 %s83, 1
      %s85 = scalar_select %p82, %s83, %s84
      %p88 = pneg %p82
      %p89 = scmp.eq.s32.totalorder %s31, 1
      %p90 = por %p88, %p89
      %p91 = scmp.ne.s32.totalorder %s83, %s86
      %p92 = scmp.eq.s32.totalorder %s31, 0
      %p93 = por %p91, %p92
      %p94 = scmp.ne.s32.totalorder %s83, %s86
      %p95 = scmp.eq.s32.totalorder %s36, 1
      %p96 = por %p94, %p95
      %p97 = scmp.ne.s32.totalorder %s86, %s87
      %p98 = scmp.eq.s32.totalorder %s36, 0
      %p99 = por %p97, %p98
      %p100 = scmp.ne.s32.totalorder %s86, %s87
      %p101 = scmp.eq.s32.totalorder %s37, 1
      %p102 = por %p100, %p101
      %p104 = scmp.ne.s32.totalorder %s87, %s103
      %p105 = scmp.eq.s32.totalorder %s37, 0
      %p106 = por %p104, %p105
      %s107 = ssub.s32 %s31, %s38
      %p108 = scmp.eq.s32.totalorder %s107, 0
      %s110 = sadd.s32 %s109, 1
      %s111 = scalar_select %p108, %s109, %s110
      %p114 = pneg %p108
      %p115 = scmp.eq.s32.totalorder %s31, 1
      %p116 = por %p114, %p115
      %p117 = scmp.ne.s32.totalorder %s109, %s112
      %p118 = scmp.eq.s32.totalorder %s31, 0
      %p119 = por %p117, %p118
      %p120 = scmp.ne.s32.totalorder %s109, %s112
      %p121 = scmp.eq.s32.totalorder %s36, 1
      %p122 = por %p120, %p121
      %p123 = scmp.ne.s32.totalorder %s112, %s113
      %p124 = scmp.eq.s32.totalorder %s36, 0
      %p125 = por %p123, %p124
      %p126 = scmp.ne.s32.totalorder %s112, %s113
      %p127 = scmp.eq.s32.totalorder %s37, 1
      %p128 = por %p126, %p127
      %p130 = scmp.ne.s32.totalorder %s113, %s129
      %p131 = scmp.eq.s32.totalorder %s37, 0
      %p132 = por %p130, %p131
      %s133 = ssub.s32 %s31, %s38
      %p134 = scmp.eq.s32.totalorder %s133, 0
      %s136 = sadd.s32 %s135, 1
      %s137 = scalar_select %p134, %s135, %s136
      %p140 = pneg %p134
      %p141 = scmp.eq.s32.totalorder %s31, 1
      %p142 = por %p140, %p141
      %p143 = scmp.ne.s32.totalorder %s135, %s138
      %p144 = scmp.eq.s32.totalorder %s31, 0
      %p145 = por %p143, %p144
      %p146 = scmp.ne.s32.totalorder %s135, %s138
      %p147 = scmp.eq.s32.totalorder %s36, 1
      %p148 = por %p146, %p147
      %p149 = scmp.ne.s32.totalorder %s138, %s139
      %p150 = scmp.eq.s32.totalorder %s36, 0
      %p151 = por %p149, %p150
      %p152 = scmp.ne.s32.totalorder %s138, %s139
      %p153 = scmp.eq.s32.totalorder %s37, 1
      %p154 = por %p152, %p153
      %p156 = scmp.ne.s32.totalorder %s139, %s155
      %p157 = scmp.eq.s32.totalorder %s37, 0
      %p158 = por %p156, %p157
      %s159 = ssub.s32 %s31, %s38
      %p160 = scmp.eq.s32.totalorder %s159, 0
      %s162 = sadd.s32 %s161, 1
      %s163 = scalar_select %p160, %s161, %s162
      %p166 = pneg %p160
      %p167 = scmp.eq.s32.totalorder %s31, 1
      %p168 = por %p166, %p167
      %p169 = scmp.ne.s32.totalorder %s161, %s164
      %p170 = scmp.eq.s32.totalorder %s31, 0
      %p171 = por %p169, %p170
      %p172 = scmp.ne.s32.totalorder %s161, %s164
      %p173 = scmp.eq.s32.totalorder %s36, 1
      %p174 = por %p172, %p173
      %p175 = scmp.ne.s32.totalorder %s164, %s165
      %p176 = scmp.eq.s32.totalorder %s36, 0
      %p177 = por %p175, %p176
      %p178 = scmp.ne.s32.totalorder %s164, %s165
      %p179 = scmp.eq.s32.totalorder %s37, 1
      %p180 = por %p178, %p179
      %p182 = scmp.ne.s32.totalorder %s165, %s181
      %p183 = scmp.eq.s32.totalorder %s37, 0
      %p184 = por %p182, %p183
      %s185 = ssub.s32 %s31, %s38
      %p186 = scmp.eq.s32.totalorder %s185, 0
      %s188 = sadd.s32 %s187, 1
      %s189 = scalar_select %p186, %s187, %s188
      %p192 = pneg %p186
      %p193 = scmp.eq.s32.totalorder %s31, 1
      %p194 = por %p192, %p193
      %p195 = scmp.ne.s32.totalorder %s187, %s190
      %p196 = scmp.eq.s32.totalorder %s31, 0
      %p197 = por %p195, %p196
      %p198 = scmp.ne.s32.totalorder %s187, %s190
      %p199 = scmp.eq.s32.totalorder %s36, 1
      %p200 = por %p198, %p199
      %p201 = scmp.ne.s32.totalorder %s190, %s191
      %p202 = scmp.eq.s32.totalorder %s36, 0
      %p203 = por %p201, %p202
      %p204 = scmp.ne.s32.totalorder %s190, %s191
      %p205 = scmp.eq.s32.totalorder %s37, 1
      %p206 = por %p204, %p205
      %p208 = scmp.ne.s32.totalorder %s191, %s207
      %p209 = scmp.eq.s32.totalorder %s37, 0
      %p210 = por %p208, %p209
      %s211 = ssub.s32 %s31, %s38
      %p212 = scmp.eq.s32.totalorder %s211, 0
      %s214 = sadd.s32 %s213, 1
      %s215 = scalar_select %p212, %s213, %s214
      %p218 = pneg %p212
      %p219 = scmp.eq.s32.totalorder %s31, 1
      %p220 = por %p218, %p219
      %p221 = scmp.ne.s32.totalorder %s213, %s216
      %p222 = scmp.eq.s32.totalorder %s31, 0
      %p223 = por %p221, %p222
      %p224 = scmp.ne.s32.totalorder %s213, %s216
      %p225 = scmp.eq.s32.totalorder %s36, 1
      %p226 = por %p224, %p225
      %p227 = scmp.ne.s32.totalorder %s216, %s217
      %p228 = scmp.eq.s32.totalorder %s36, 0
      %p229 = por %p227, %p228
      %p230 = scmp.ne.s32.totalorder %s216, %s217
      %p231 = scmp.eq.s32.totalorder %s37, 1
      %p232 = por %p230, %p231
      %p234 = scmp.ne.s32.totalorder %s217, %s233
      %p235 = scmp.eq.s32.totalorder %s37, 0
      %p236 = por %p234, %p235
      %s237 = ssub.s32 %s31, %s38
      %p238 = scmp.eq.s32.totalorder %s237, 0
      %s240 = sadd.s32 %s239, 1
      %s241 = scalar_select %p238, %s239, %s240
      %p244 = pneg %p238
      %p245 = scmp.eq.s32.totalorder %s31, 1
      %p246 = por %p244, %p245
      %p247 = scmp.ne.s32.totalorder %s239, %s242
      %p248 = scmp.eq.s32.totalorder %s31, 0
      %p249 = por %p247, %p248
      %p250 = scmp.ne.s32.totalorder %s239, %s242
      %p251 = scmp.eq.s32.totalorder %s36, 1
      %p252 = por %p250, %p251
      %p253 = scmp.ne.s32.totalorder %s242, %s243
      %p254 = scmp.eq.s32.totalorder %s36, 0
      %p255 = por %p253, %p254
      %p256 = scmp.ne.s32.totalorder %s242, %s243
      %p257 = scmp.eq.s32.totalorder %s37, 1
      %p258 = por %p256, %p257
      %p260 = scmp.ne.s32.totalorder %s243, %s259
      %p261 = scmp.eq.s32.totalorder %s37, 0
      %p262 = por %p260, %p261
      %s263 = ssub.s32 %s31, %s38
      %p264 = scmp.eq.s32.totalorder %s263, 0
      %s266 = sadd.s32 %s265, 1
      %s267 = scalar_select %p264, %s265, %s266
      %p270 = pneg %p264
      %p271 = scmp.eq.s32.totalorder %s31, 1
      %p272 = por %p270, %p271
      %p273 = scmp.ne.s32.totalorder %s265, %s268
      %p274 = scmp.eq.s32.totalorder %s31, 0
      %p275 = por %p273, %p274
      %p276 = scmp.ne.s32.totalorder %s265, %s268
      %p277 = scmp.eq.s32.totalorder %s36, 1
      %p278 = por %p276, %p277
      %p279 = scmp.ne.s32.totalorder %s268, %s269
      %p280 = scmp.eq.s32.totalorder %s36, 0
      %p281 = por %p279, %p280
      %p282 = scmp.ne.s32.totalorder %s268, %s269
      %p283 = scmp.eq.s32.totalorder %s37, 1
      %p284 = por %p282, %p283
      %p286 = scmp.ne.s32.totalorder %s269, %s285
      %p287 = scmp.eq.s32.totalorder %s37, 0
      %p288 = por %p286, %p287
      %s289 = ssub.s32 %s31, %s38
      %p290 = scmp.eq.s32.totalorder %s289, 0
      %s292 = sadd.s32 %s291, 1
      %s293 = scalar_select %p290, %s291, %s292
      %p296 = pneg %p290
      %p297 = scmp.eq.s32.totalorder %s31, 1
      %p298 = por %p296, %p297
      %p299 = scmp.ne.s32.totalorder %s291, %s294
      %p300 = scmp.eq.s32.totalorder %s31, 0
      %p301 = por %p299, %p300
      %p302 = scmp.ne.s32.totalorder %s291, %s294
      %p303 = scmp.eq.s32.totalorder %s36, 1
      %p304 = por %p302, %p303
      %p305 = scmp.ne.s32.totalorder %s294, %s295
      %p306 = scmp.eq.s32.totalorder %s36, 0
      %p307 = por %p305, %p306
      %p308 = scmp.ne.s32.totalorder %s294, %s295
      %p309 = scmp.eq.s32.totalorder %s37, 1
      %p310 = por %p308, %p309
      %p312 = scmp.ne.s32.totalorder %s295, %s311
      %p313 = scmp.eq.s32.totalorder %s37, 0
      %p314 = por %p312, %p313
      %s315 = ssub.s32 %s31, %s38
      %p316 = scmp.eq.s32.totalorder %s315, 0
      %s318 = sadd.s32 %s317, 1
      %s319 = scalar_select %p316, %s317, %s318
      %p322 = pneg %p316
      %p323 = scmp.eq.s32.totalorder %s31, 1
      %p324 = por %p322, %p323
      %p325 = scmp.ne.s32.totalorder %s317, %s320
      %p326 = scmp.eq.s32.totalorder %s31, 0
      %p327 = por %p325, %p326
      %p328 = scmp.ne.s32.totalorder %s317, %s320
      %p329 = scmp.eq.s32.totalorder %s36, 1
      %p330 = por %p328, %p329
      %p331 = scmp.ne.s32.totalorder %s320, %s321
      %p332 = scmp.eq.s32.totalorder %s36, 0
      %p333 = por %p331, %p332
      %p334 = scmp.ne.s32.totalorder %s320, %s321
      %p335 = scmp.eq.s32.totalorder %s37, 1
      %p336 = por %p334, %p335
      %p338 = scmp.ne.s32.totalorder %s321, %s337
      %p339 = scmp.eq.s32.totalorder %s37, 0
      %p340 = por %p338, %p339
      %s341 = ssub.s32 %s31, %s38
      %p342 = scmp.eq.s32.totalorder %s341, 0
      %s344 = sadd.s32 %s343, 1
      %s345 = scalar_select %p342, %s343, %s344
      %p348 = pneg %p342
      %p349 = scmp.eq.s32.totalorder %s31, 1
      %p350 = por %p348, %p349
      %p351 = scmp.ne.s32.totalorder %s343, %s346
      %p352 = scmp.eq.s32.totalorder %s31, 0
      %p353 = por %p351, %p352
      %p354 = scmp.ne.s32.totalorder %s343, %s346
      %p355 = scmp.eq.s32.totalorder %s36, 1
      %p356 = por %p354, %p355
      %p357 = scmp.ne.s32.totalorder %s346, %s347
      %p358 = scmp.eq.s32.totalorder %s36, 0
      %p359 = por %p357, %p358
      %p360 = scmp.ne.s32.totalorder %s346, %s347
      %p361 = scmp.eq.s32.totalorder %s37, 1
      %p362 = por %p360, %p361
      %p364 = scmp.ne.s32.totalorder %s347, %s363
      %p365 = scmp.eq.s32.totalorder %s37, 0
      %p366 = por %p364, %p365
      %s367 = ssub.s32 %s31, %s38
      %p368 = scmp.eq.s32.totalorder %s367, 0
      %s370 = sadd.s32 %s369, 1
      %s371 = scalar_select %p368, %s369, %s370
      %p374 = pneg %p368
      %p375 = scmp.eq.s32.totalorder %s31, 1
      %p376 = por %p374, %p375
      %p377 = scmp.ne.s32.totalorder %s369, %s372
      %p378 = scmp.eq.s32.totalorder %s31, 0
      %p379 = por %p377, %p378
      %p380 = scmp.ne.s32.totalorder %s369, %s372
      %p381 = scmp.eq.s32.totalorder %s36, 1
      %p382 = por %p380, %p381
      %p383 = scmp.ne.s32.totalorder %s372, %s373
      %p384 = scmp.eq.s32.totalorder %s36, 0
      %p385 = por %p383, %p384
      %p386 = scmp.ne.s32.totalorder %s372, %s373
      %p387 = scmp.eq.s32.totalorder %s37, 1
      %p388 = por %p386, %p387
      %p390 = scmp.ne.s32.totalorder %s373, %s389
      %p391 = scmp.eq.s32.totalorder %s37, 0
      %p392 = por %p390, %p391
      %s393 = ssub.s32 %s31, %s38
      %p394 = scmp.eq.s32.totalorder %s393, 0
      %s396 = sadd.s32 %s395, 1
      %s397 = scalar_select %p394, %s395, %s396
      %p400 = pneg %p394
      %p401 = scmp.eq.s32.totalorder %s31, 1
      %p402 = por %p400, %p401
      %p403 = scmp.ne.s32.totalorder %s395, %s398
      %p404 = scmp.eq.s32.totalorder %s31, 0
      %p405 = por %p403, %p404
      %p406 = scmp.ne.s32.totalorder %s395, %s398
      %p407 = scmp.eq.s32.totalorder %s36, 1
      %p408 = por %p406, %p407
      %p409 = scmp.ne.s32.totalorder %s398, %s399
      %p410 = scmp.eq.s32.totalorder %s36, 0
      %p411 = por %p409, %p410
      %p412 = scmp.ne.s32.totalorder %s398, %s399
      %p413 = scmp.eq.s32.totalorder %s37, 1
      %p414 = por %p412, %p413
      %p416 = scmp.ne.s32.totalorder %s399, %s415
      %p417 = scmp.eq.s32.totalorder %s37, 0
      %p418 = por %p416, %p417
      %s419 = ssub.s32 %s31, %s38
      %p420 = scmp.eq.s32.totalorder %s419, 0
      %s422 = sadd.s32 %s421, 1
      %s423 = scalar_select %p420, %s421, %s422
      %p426 = pneg %p420
      %p427 = scmp.eq.s32.totalorder %s31, 1
      %p428 = por %p426, %p427
      %p429 = scmp.ne.s32.totalorder %s421, %s424
      %p430 = scmp.eq.s32.totalorder %s31, 0
      %p431 = por %p429, %p430
      %p432 = scmp.ne.s32.totalorder %s421, %s424
      %p433 = scmp.eq.s32.totalorder %s36, 1
      %p434 = por %p432, %p433
      %p435 = scmp.ne.s32.totalorder %s424, %s425
      %p436 = scmp.eq.s32.totalorder %s36, 0
      %p437 = por %p435, %p436
      %p438 = scmp.ne.s32.totalorder %s424, %s425
      %p439 = scmp.eq.s32.totalorder %s37, 1
      %p440 = por %p438, %p439
      %p442 = scmp.ne.s32.totalorder %s425, %s441
      %p443 = scmp.eq.s32.totalorder %s37, 0
      %p444 = por %p442, %p443
      %s445 = ssub.s32 %s31, %s38
      %p446 = scmp.eq.s32.totalorder %s445, 0
      %s448 = sadd.s32 %s447, 1
      %s449 = scalar_select %p446, %s447, %s448
      %p452 = pneg %p446
      %p453 = scmp.eq.s32.totalorder %s31, 1
      %p454 = por %p452, %p453
      %p455 = scmp.ne.s32.totalorder %s447, %s450
      %p456 = scmp.eq.s32.totalorder %s31, 0
      %p457 = por %p455, %p456
      %p458 = scmp.ne.s32.totalorder %s447, %s450
      %p459 = scmp.eq.s32.totalorder %s36, 1
      %p460 = por %p458, %p459
      %p461 = scmp.ne.s32.totalorder %s450, %s451
      %p462 = scmp.eq.s32.totalorder %s36, 0
      %p463 = por %p461, %p462
      %p464 = scmp.ne.s32.totalorder %s450, %s451
      %p465 = scmp.eq.s32.totalorder %s37, 1
      %p466 = por %p464, %p465
      %p468 = scmp.ne.s32.totalorder %s451, %s467
      %p469 = scmp.eq.s32.totalorder %s37, 0
      %p470 = por %p468, %p469
      %s471 = ssub.s32 %s31, %s38
      %p472 = scmp.eq.s32.totalorder %s471, 0
      %s474 = sadd.s32 %s473, 1
      %s475 = scalar_select %p472, %s473, %s474
      %p478 = pneg %p472
      %p479 = scmp.eq.s32.totalorder %s31, 1
      %p480 = por %p478, %p479
      %p481 = scmp.ne.s32.totalorder %s473, %s476
      %p482 = scmp.eq.s32.totalorder %s31, 0
      %p483 = por %p481, %p482
      %p484 = scmp.ne.s32.totalorder %s473, %s476
      %p485 = scmp.eq.s32.totalorder %s36, 1
      %p486 = por %p484, %p485
      %p487 = scmp.ne.s32.totalorder %s476, %s477
      %p488 = scmp.eq.s32.totalorder %s36, 0
      %p489 = por %p487, %p488
      %p490 = scmp.ne.s32.totalorder %s476, %s477
      %p491 = scmp.eq.s32.totalorder %s37, 1
      %p492 = por %p490, %p491
      %p494 = scmp.ne.s32.totalorder %s477, %s493
      %p495 = scmp.eq.s32.totalorder %s37, 0
      %p496 = por %p494, %p495
      %s497 = ssub.s32 %s31, %s38
      %p498 = scmp.eq.s32.totalorder %s497, 0
      %s500 = sadd.s32 %s499, 1
      %s501 = scalar_select %p498, %s499, %s500
      %p504 = pneg %p498
      %p505 = scmp.eq.s32.totalorder %s31, 1
      %p506 = por %p504, %p505
      %p507 = scmp.ne.s32.totalorder %s499, %s502
      %p508 = scmp.eq.s32.totalorder %s31, 0
      %p509 = por %p507, %p508
      %p510 = scmp.ne.s32.totalorder %s499, %s502
      %p511 = scmp.eq.s32.totalorder %s36, 1
      %p512 = por %p510, %p511
      %p513 = scmp.ne.s32.totalorder %s502, %s503
      %p514 = scmp.eq.s32.totalorder %s36, 0
      %p515 = por %p513, %p514
      %p516 = scmp.ne.s32.totalorder %s502, %s503
      %p517 = scmp.eq.s32.totalorder %s37, 1
      %p518 = por %p516, %p517
      %p520 = scmp.ne.s32.totalorder %s503, %s519
      %p521 = scmp.eq.s32.totalorder %s37, 0
      %p522 = por %p520, %p521
      %s523 = ssub.s32 %s31, %s38
      %p524 = scmp.eq.s32.totalorder %s523, 0
      %s526 = sadd.s32 %s525, 1
      %s527 = scalar_select %p524, %s525, %s526
      %p530 = pneg %p524
      %p531 = scmp.eq.s32.totalorder %s31, 1
      %p532 = por %p530, %p531
      %p533 = scmp.ne.s32.totalorder %s525, %s528
      %p534 = scmp.eq.s32.totalorder %s31, 0
      %p535 = por %p533, %p534
      %p536 = scmp.ne.s32.totalorder %s525, %s528
      %p537 = scmp.eq.s32.totalorder %s36, 1
      %p538 = por %p536, %p537
      %p539 = scmp.ne.s32.totalorder %s528, %s529
      %p540 = scmp.eq.s32.totalorder %s36, 0
      %p541 = por %p539, %p540
      %p542 = scmp.ne.s32.totalorder %s528, %s529
      %p543 = scmp.eq.s32.totalorder %s37, 1
      %p544 = por %p542, %p543
      %p546 = scmp.ne.s32.totalorder %s529, %s545
      %p547 = scmp.eq.s32.totalorder %s37, 0
      %p548 = por %p546, %p547
      %s549 = ssub.s32 %s31, %s38
      %p550 = scmp.eq.s32.totalorder %s549, 0
      %s552 = sadd.s32 %s551, 1
      %s553 = scalar_select %p550, %s551, %s552
      %p556 = pneg %p550
      %p557 = scmp.eq.s32.totalorder %s31, 1
      %p558 = por %p556, %p557
      %p559 = scmp.ne.s32.totalorder %s551, %s554
      %p560 = scmp.eq.s32.totalorder %s31, 0
      %p561 = por %p559, %p560
      %p562 = scmp.ne.s32.totalorder %s551, %s554
      %p563 = scmp.eq.s32.totalorder %s36, 1
      %p564 = por %p562, %p563
      %p565 = scmp.ne.s32.totalorder %s554, %s555
      %p566 = scmp.eq.s32.totalorder %s36, 0
      %p567 = por %p565, %p566
      %p568 = scmp.ne.s32.totalorder %s554, %s555
      %p569 = scmp.eq.s32.totalorder %s37, 1
      %p570 = por %p568, %p569
      %p572 = scmp.ne.s32.totalorder %s555, %s571
      %p573 = scmp.eq.s32.totalorder %s37, 0
      %p574 = por %p572, %p573
      %s575 = ssub.s32 %s31, %s38
      %p576 = scmp.eq.s32.totalorder %s575, 0
      %s578 = sadd.s32 %s577, 1
      %s579 = scalar_select %p576, %s577, %s578
      %p582 = pneg %p576
      %p583 = scmp.eq.s32.totalorder %s31, 1
      %p584 = por %p582, %p583
      %p585 = scmp.ne.s32.totalorder %s577, %s580
      %p586 = scmp.eq.s32.totalorder %s31, 0
      %p587 = por %p585, %p586
      %p588 = scmp.ne.s32.totalorder %s577, %s580
      %p589 = scmp.eq.s32.totalorder %s36, 1
      %p590 = por %p588, %p589
      %p591 = scmp.ne.s32.totalorder %s580, %s581
      %p592 = scmp.eq.s32.totalorder %s36, 0
      %p593 = por %p591, %p592
      %p594 = scmp.ne.s32.totalorder %s580, %s581
      %p595 = scmp.eq.s32.totalorder %s37, 1
      %p596 = por %p594, %p595
      %p598 = scmp.ne.s32.totalorder %s581, %s597
      %p599 = scmp.eq.s32.totalorder %s37, 0
      %p600 = por %p598, %p599
      %s602 = sadd.s32 %s601, 1
      %p605 = scmp.eq.s32.totalorder %s31, 1
      %p606 = scmp.ne.s32.totalorder %s601, %s603
      %p607 = scmp.eq.s32.totalorder %s31, 0
      %p608 = por %p606, %p607
      %p609 = scmp.ne.s32.totalorder %s601, %s603
      %p610 = scmp.eq.s32.totalorder %s36, 1
      %p611 = por %p609, %p610
      %p612 = scmp.ne.s32.totalorder %s603, %s604
      %p613 = scmp.eq.s32.totalorder %s36, 0
      %p614 = por %p612, %p613
      %p615 = scmp.ne.s32.totalorder %s603, %s604
      %p616 = scmp.eq.s32.totalorder %s37, 1
      %p617 = por %p615, %p616
      %p619 = scmp.ne.s32.totalorder %s604, %s618
      %p620 = scmp.eq.s32.totalorder %s37, 0
      %p621 = por %p619, %p620
      %s623 = sadd.s32 %s622, 1
      %p626 = scmp.eq.s32.totalorder %s31, 1
      %p627 = scmp.ne.s32.totalorder %s622, %s624
      %p628 = scmp.eq.s32.totalorder %s31, 0
      %p629 = por %p627, %p628
      %p630 = scmp.ne.s32.totalorder %s622, %s624
      %p631 = scmp.eq.s32.totalorder %s36, 1
      %p632 = por %p630, %p631
      %p633 = scmp.ne.s32.totalorder %s624, %s625
      %p634 = scmp.eq.s32.totalorder %s36, 0
      %p635 = por %p633, %p634
      %p636 = scmp.ne.s32.totalorder %s624, %s625
      %p637 = scmp.eq.s32.totalorder %s37, 1
      %p638 = por %p636, %p637
      %p640 = scmp.ne.s32.totalorder %s625, %s639
      %p641 = scmp.eq.s32.totalorder %s37, 0
      %p642 = por %p640, %p641
      %s644 = sadd.s32 %s643, 1
      %p647 = scmp.eq.s32.totalorder %s31, 1
      %p648 = scmp.ne.s32.totalorder %s643, %s645
      %p649 = scmp.eq.s32.totalorder %s31, 0
      %p650 = por %p648, %p649
      %p651 = scmp.ne.s32.totalorder %s643, %s645
      %p652 = scmp.eq.s32.totalorder %s36, 1
      %p653 = por %p651, %p652
      %p654 = scmp.ne.s32.totalorder %s645, %s646
      %p655 = scmp.eq.s32.totalorder %s36, 0
      %p656 = por %p654, %p655
      %p657 = scmp.ne.s32.totalorder %s645, %s646
      %p658 = scmp.eq.s32.totalorder %s37, 1
      %p659 = por %p657, %p658
      %p661 = scmp.ne.s32.totalorder %s646, %s660
      %p662 = scmp.eq.s32.totalorder %s37, 0
      %p663 = por %p661, %p662
      %p664 = scmp.le.s32.totalorder 1, %s31
      %p665 = scmp.lt.s32.totalorder %s31, 3
      %p666 = pnand %p664, %p665
      %p667 = pneg %p666
      // Predicated region
      $region9: #{decoder_forward.1} parent=5 // pred_check
        _
      $region10: #{decoder_forward.1} parent=5 // pred_check_branch
        %669 = sbr.rel (%p666) target = $region12
      $region11: #{decoder_forward.1} parent=5 // pred_region
        %s670 = ssub.s32 %s31, 1
        // Predicated region
        $region13: #{decoder_forward.1} parent=11 // pred_check
          %p671 = pneg %p52
        $region14: #{decoder_forward.1} parent=11 // pred_check_branch
          %673 = sbr.rel (%p671) target = $region16
        $region15: #{decoder_forward.1} parent=11 // pred_region
          _
        $region16: #{decoder_forward.1} parent=11 // pred_fallthru
          _
        // Predicated region
        $region17: #{decoder_forward.1} parent=11 // pred_check
          %p674 = pneg %p73
        $region18: #{decoder_forward.1} parent=11 // pred_check_branch
          %676 = sbr.rel (%p674) target = $region20
        $region19: #{decoder_forward.1} parent=11 // pred_region
          _
        $region20: #{decoder_forward.1} parent=11 // pred_fallthru
          _
        // Predicated region
        $region21: #{decoder_forward.1} parent=11 // pred_check
          %p677 = pneg %p614
        $region22: #{decoder_forward.1} parent=11 // pred_check_branch
          %679 = sbr.rel (%p677) target = $region24
        $region23: #{decoder_forward.1} parent=11 // pred_region
          _
        $region24: #{decoder_forward.1} parent=11 // pred_fallthru
          _
        // Predicated region
        $region25: #{decoder_forward.1} parent=11 // pred_check
          %p680 = pneg %p635
        $region26: #{decoder_forward.1} parent=11 // pred_check_branch
          %682 = sbr.rel (%p680) target = $region28
        $region27: #{decoder_forward.1} parent=11 // pred_region
          _
        $region28: #{decoder_forward.1} parent=11 // pred_fallthru
          _
      $region12: #{decoder_forward.1} parent=5 // pred_fallthru
        _
      %p683 = scmp.lt.s32.totalorder %s31, 2
      // Predicated region
      $region29: #{decoder_forward.1} parent=5 // pred_check
        %p684 = pneg %p683
      $region30: #{decoder_forward.1} parent=5 // pred_check_branch
        %686 = sbr.rel (%p684) target = $region32
      $region31: #{decoder_forward.1} parent=5 // pred_region
        // Predicated region
        $region33: #{decoder_forward.1} parent=31 // pred_check
          %p687 = pneg %p93
        $region34: #{decoder_forward.1} parent=31 // pred_check_branch
          %689 = sbr.rel (%p687) target = $region36
        $region35: #{decoder_forward.1} parent=31 // pred_region
          %p690 = scmp.lt.s32.totalorder %s31, 1
          %s691 = scalar_select %p690, %s31, 1
          %s692 = smul.addr %s691, 16
          %s693 = smul.addr %s692, 4
          %s694 = scalar_lea.vmem %s2, %s693
        $region36: #{decoder_forward.1} parent=31 // pred_fallthru
          _
        // Predicated region
        $region37: #{decoder_forward.1} parent=31 // pred_check
          %p695 = pneg %p119
        $region38: #{decoder_forward.1} parent=31 // pred_check_branch
          %697 = sbr.rel (%p695) target = $region40
        $region39: #{decoder_forward.1} parent=31 // pred_region
          %p698 = scmp.lt.s32.totalorder %s31, 1
          %s699 = scalar_select %p698, %s31, 1
          %s700 = smul.addr %s699, 2
          %s701 = scalar_lea.vmem %s3, %s700
        $region40: #{decoder_forward.1} parent=31 // pred_fallthru
          _
        // Predicated region
        $region41: #{decoder_forward.1} parent=31 // pred_check
          %p702 = pneg %p145
        $region42: #{decoder_forward.1} parent=31 // pred_check_branch
          %704 = sbr.rel (%p702) target = $region44
        $region43: #{decoder_forward.1} parent=31 // pred_region
          %p705 = scmp.lt.s32.totalorder %s31, 1
          %s706 = scalar_select %p705, %s31, 1
          %s707 = smul.addr %s706, 8
          %s708 = smul.addr %s707, 4
          %s709 = scalar_lea.vmem %s4, %s708
        $region44: #{decoder_forward.1} parent=31 // pred_fallthru
          _
        // Predicated region
        $region45: #{decoder_forward.1} parent=31 // pred_check
          %p710 = pneg %p171
        $region46: #{decoder_forward.1} parent=31 // pred_check_branch
          %712 = sbr.rel (%p710) target = $region48
        $region47: #{decoder_forward.1} parent=31 // pred_region
          %p713 = scmp.lt.s32.totalorder %s31, 1
          %s714 = scalar_select %p713, %s31, 1
          %s715 = scalar_lea.vmem %s5, %s714
        $region48: #{decoder_forward.1} parent=31 // pred_fallthru
          _
        // Predicated region
        $region49: #{decoder_forward.1} parent=31 // pred_check
          %p716 = pneg %p197
        $region50: #{decoder_forward.1} parent=31 // pred_check_branch
          %718 = sbr.rel (%p716) target = $region52
        $region51: #{decoder_forward.1} parent=31 // pred_region
          %p719 = scmp.lt.s32.totalorder %s31, 1
          %s720 = scalar_select %p719, %s31, 1
          %s721 = scalar_lea.vmem %s6, %s720
        $region52: #{decoder_forward.1} parent=31 // pred_fallthru
          _
        // Predicated region
        $region53: #{decoder_forward.1} parent=31 // pred_check
          %p722 = pneg %p223
        $region54: #{decoder_forward.1} parent=31 // pred_check_branch
          %724 = sbr.rel (%p722) target = $region56
        $region55: #{decoder_forward.1} parent=31 // pred_region
          %p725 = scmp.lt.s32.totalorder %s31, 1
          %s726 = scalar_select %p725, %s31, 1
          %s727 = scalar_lea.vmem %s7, %s726
        $region56: #{decoder_forward.1} parent=31 // pred_fallthru
          _
        // Predicated region
        $region57: #{decoder_forward.1} parent=31 // pred_check
          %p728 = pneg %p249
        $region58: #{decoder_forward.1} parent=31 // pred_check_branch
          %730 = sbr.rel (%p728) target = $region60
        $region59: #{decoder_forward.1} parent=31 // pred_region
          %p731 = scmp.lt.s32.totalorder %s31, 1
          %s732 = scalar_select %p731, %s31, 1
          %s733 = smul.addr %s732, 8
          %s734 = smul.addr %s733, 4
          %s735 = scalar_lea.vmem %s8, %s734
        $region60: #{decoder_forward.1} parent=31 // pred_fallthru
          _
        // Predicated region
        $region61: #{decoder_forward.1} parent=31 // pred_check
          %p736 = pneg %p275
        $region62: #{decoder_forward.1} parent=31 // pred_check_branch
          %738 = sbr.rel (%p736) target = $region64
        $region63: #{decoder_forward.1} parent=31 // pred_region
          %p739 = scmp.lt.s32.totalorder %s31, 1
          %s740 = scalar_select %p739, %s31, 1
          %s741 = scalar_lea.vmem %s9, %s740
        $region64: #{decoder_forward.1} parent=31 // pred_fallthru
          _
        // Predicated region
        $region65: #{decoder_forward.1} parent=31 // pred_check
          %p742 = pneg %p301
        $region66: #{decoder_forward.1} parent=31 // pred_check_branch
          %744 = sbr.rel (%p742) target = $region68
        $region67: #{decoder_forward.1} parent=31 // pred_region
          %p745 = scmp.lt.s32.totalorder %s31, 1
          %s746 = scalar_select %p745, %s31, 1
          %s747 = smul.addr %s746, 8
          %s748 = smul.addr %s747, 4
          %s749 = scalar_lea.vmem %s10, %s748
        $region68: #{decoder_forward.1} parent=31 // pred_fallthru
          _
        // Predicated region
        $region69: #{decoder_forward.1} parent=31 // pred_check
          %p750 = pneg %p327
        $region70: #{decoder_forward.1} parent=31 // pred_check_branch
          %752 = sbr.rel (%p750) target = $region72
        $region71: #{decoder_forward.1} parent=31 // pred_region
          %p753 = scmp.lt.s32.totalorder %s31, 1
          %s754 = scalar_select %p753, %s31, 1
          %s755 = scalar_lea.vmem %s11, %s754
        $region72: #{decoder_forward.1} parent=31 // pred_fallthru
          _
        // Predicated region
        $region73: #{decoder_forward.1} parent=31 // pred_check
          %p756 = pneg %p353
        $region74: #{decoder_forward.1} parent=31 // pred_check_branch
          %758 = sbr.rel (%p756) target = $region76
        $region75: #{decoder_forward.1} parent=31 // pred_region
          %p759 = scmp.lt.s32.totalorder %s31, 1
          %s760 = scalar_select %p759, %s31, 1
          %s761 = smul.addr %s760, 8
          %s762 = smul.addr %s761, 4
          %s763 = scalar_lea.vmem %s12, %s762
        $region76: #{decoder_forward.1} parent=31 // pred_fallthru
          _
        // Predicated region
        $region77: #{decoder_forward.1} parent=31 // pred_check
          %p764 = pneg %p379
        $region78: #{decoder_forward.1} parent=31 // pred_check_branch
          %766 = sbr.rel (%p764) target = $region80
        $region79: #{decoder_forward.1} parent=31 // pred_region
          %p767 = scmp.lt.s32.totalorder %s31, 1
          %s768 = scalar_select %p767, %s31, 1
          %s769 = scalar_lea.vmem %s13, %s768
        $region80: #{decoder_forward.1} parent=31 // pred_fallthru
          _
        // Predicated region
        $region81: #{decoder_forward.1} parent=31 // pred_check
          %p770 = pneg %p405
        $region82: #{decoder_forward.1} parent=31 // pred_check_branch
          %772 = sbr.rel (%p770) target = $region84
        $region83: #{decoder_forward.1} parent=31 // pred_region
          %p773 = scmp.lt.s32.totalorder %s31, 1
          %s774 = scalar_select %p773, %s31, 1
          %s775 = scalar_lea.vmem %s14, %s774
        $region84: #{decoder_forward.1} parent=31 // pred_fallthru
          _
        // Predicated region
        $region85: #{decoder_forward.1} parent=31 // pred_check
          %p776 = pneg %p431
        $region86: #{decoder_forward.1} parent=31 // pred_check_branch
          %778 = sbr.rel (%p776) target = $region88
        $region87: #{decoder_forward.1} parent=31 // pred_region
          %p779 = scmp.lt.s32.totalorder %s31, 1
          %s780 = scalar_select %p779, %s31, 1
          %s781 = scalar_lea.vmem %s15, %s780
        $region88: #{decoder_forward.1} parent=31 // pred_fallthru
          _
        // Predicated region
        $region89: #{decoder_forward.1} parent=31 // pred_check
          %p782 = pneg %p457
        $region90: #{decoder_forward.1} parent=31 // pred_check_branch
          %784 = sbr.rel (%p782) target = $region92
        $region91: #{decoder_forward.1} parent=31 // pred_region
          %p785 = scmp.lt.s32.totalorder %s31, 1
          %s786 = scalar_select %p785, %s31, 1
          %s787 = smul.addr %s786, 16
          %s788 = smul.addr %s787, 4
          %s789 = scalar_lea.vmem %s16, %s788
        $region92: #{decoder_forward.1} parent=31 // pred_fallthru
          _
        // Predicated region
        $region93: #{decoder_forward.1} parent=31 // pred_check
          %p790 = pneg %p483
        $region94: #{decoder_forward.1} parent=31 // pred_check_branch
          %792 = sbr.rel (%p790) target = $region96
        $region95: #{decoder_forward.1} parent=31 // pred_region
          %p793 = scmp.lt.s32.totalorder %s31, 1
          %s794 = scalar_select %p793, %s31, 1
          %s795 = smul.addr %s794, 2
          %s796 = scalar_lea.vmem %s17, %s795
        $region96: #{decoder_forward.1} parent=31 // pred_fallthru
          _
        // Predicated region
        $region97: #{decoder_forward.1} parent=31 // pred_check
          %p797 = pneg %p509
        $region98: #{decoder_forward.1} parent=31 // pred_check_branch
          %799 = sbr.rel (%p797) target = $region100
        $region99: #{decoder_forward.1} parent=31 // pred_region
          %p800 = scmp.lt.s32.totalorder %s31, 1
          %s801 = scalar_select %p800, %s31, 1
          %s802 = smul.addr %s801, 32
          %s803 = smul.addr %s802, 4
          %s804 = scalar_lea.vmem %s18, %s803
        $region100: #{decoder_forward.1} parent=31 // pred_fallthru
          _
        // Predicated region
        $region101: #{decoder_forward.1} parent=31 // pred_check
          %p805 = pneg %p535
        $region102: #{decoder_forward.1} parent=31 // pred_check_branch
          %807 = sbr.rel (%p805) target = $region104
        $region103: #{decoder_forward.1} parent=31 // pred_region
          %p808 = scmp.lt.s32.totalorder %s31, 1
          %s809 = scalar_select %p808, %s31, 1
          %s810 = scalar_lea.vmem %s19, %s809
        $region104: #{decoder_forward.1} parent=31 // pred_fallthru
          _
        // Predicated region
        $region105: #{decoder_forward.1} parent=31 // pred_check
          %p811 = pneg %p561
        $region106: #{decoder_forward.1} parent=31 // pred_check_branch
          %813 = sbr.rel (%p811) target = $region108
        $region107: #{decoder_forward.1} parent=31 // pred_region
          %p814 = scmp.lt.s32.totalorder %s31, 1
          %s815 = scalar_select %p814, %s31, 1
          %s816 = scalar_lea.vmem %s20, %s815
        $region108: #{decoder_forward.1} parent=31 // pred_fallthru
          _
        // Predicated region
        $region109: #{decoder_forward.1} parent=31 // pred_check
          %p817 = pneg %p587
        $region110: #{decoder_forward.1} parent=31 // pred_check_branch
          %819 = sbr.rel (%p817) target = $region112
        $region111: #{decoder_forward.1} parent=31 // pred_region
          %p820 = scmp.lt.s32.totalorder %s31, 1
          %s821 = scalar_select %p820, %s31, 1
          %s822 = scalar_lea.vmem %s21, %s821
        $region112: #{decoder_forward.1} parent=31 // pred_fallthru
          _
      $region32: #{decoder_forward.1} parent=5 // pred_fallthru
        _
      %p823 = scmp.le.s32.totalorder 1, %s31
      %p824 = scmp.lt.s32.totalorder %s31, 3
      %p825 = pnand %p823, %p824
      %p826 = pneg %p825
      // Predicated region
      $region113: #{decoder_forward.1} parent=5 // pred_check
        _
      $region114: #{decoder_forward.1} parent=5 // pred_check_branch
        %828 = sbr.rel (%p825) target = $region116
      $region115: #{decoder_forward.1} parent=5 // pred_region
        %s829 = ssub.s32 %s31, 1
        %p830 = pneg %p52
        %p831 = pneg %p49
        %p832 = pneg %p73
        %p833 = pneg %p70
        %p834 = scmp.lt.s32.totalorder %s36, 1
        %s835 = scalar_select %p834, %s36, 1
        %s836 = smul.addr %s835, 16
        %s837 = smul.addr %s836, 4
        %s838 = scalar_lea.vmem %s2, %s837
        %p839 = pneg %p99
        %p840 = pneg %p96
        %p841 = scmp.lt.s32.totalorder %s36, 1
        %s842 = scalar_select %p841, %s36, 1
        %s843 = smul.addr %s842, 2
        %s844 = scalar_lea.vmem %s3, %s843
        %p845 = pneg %p125
        %p846 = pneg %p122
        %p847 = scmp.lt.s32.totalorder %s36, 1
        %s848 = scalar_select %p847, %s36, 1
        %s849 = smul.addr %s848, 8
        %s850 = smul.addr %s849, 4
        %s851 = scalar_lea.vmem %s4, %s850
        %p852 = pneg %p151
        %p853 = pneg %p148
        %p854 = scmp.lt.s32.totalorder %s36, 1
        %s855 = scalar_select %p854, %s36, 1
        %s856 = scalar_lea.vmem %s5, %s855
        %p857 = pneg %p177
        %p858 = pneg %p174
        %p859 = scmp.lt.s32.totalorder %s36, 1
        %s860 = scalar_select %p859, %s36, 1
        %s861 = scalar_lea.vmem %s6, %s860
        %p862 = pneg %p203
        %p863 = pneg %p200
        %p864 = scmp.lt.s32.totalorder %s36, 1
        %s865 = scalar_select %p864, %s36, 1
        %s866 = scalar_lea.vmem %s7, %s865
        %p867 = pneg %p229
        %p868 = pneg %p226
        %p869 = scmp.lt.s32.totalorder %s36, 1
        %s870 = scalar_select %p869, %s36, 1
        %s871 = smul.addr %s870, 8
        %s872 = smul.addr %s871, 4
        %s873 = scalar_lea.vmem %s8, %s872
        %p874 = pneg %p255
        %p875 = pneg %p252
        %p876 = scmp.lt.s32.totalorder %s36, 1
        %s877 = scalar_select %p876, %s36, 1
        %s878 = scalar_lea.vmem %s9, %s877
        %p879 = pneg %p281
        %p880 = pneg %p278
        %p881 = scmp.lt.s32.totalorder %s36, 1
        %s882 = scalar_select %p881, %s36, 1
        %s883 = smul.addr %s882, 8
        %s884 = smul.addr %s883, 4
        %s885 = scalar_lea.vmem %s10, %s884
        %p886 = pneg %p307
        %p887 = pneg %p304
        %p888 = scmp.lt.s32.totalorder %s36, 1
        %s889 = scalar_select %p888, %s36, 1
        %s890 = scalar_lea.vmem %s11, %s889
        %p891 = pneg %p333
        %p892 = pneg %p330
        %p893 = scmp.lt.s32.totalorder %s36, 1
        %s894 = scalar_select %p893, %s36, 1
        %s895 = smul.addr %s894, 8
        %s896 = smul.addr %s895, 4
        %s897 = scalar_lea.vmem %s12, %s896
        %p898 = pneg %p359
        %p899 = pneg %p356
        %p900 = scmp.lt.s32.totalorder %s36, 1
        %s901 = scalar_select %p900, %s36, 1
        %s902 = scalar_lea.vmem %s13, %s901
        %p903 = pneg %p385
        %p904 = pneg %p382
        %p905 = scmp.lt.s32.totalorder %s36, 1
        %s906 = scalar_select %p905, %s36, 1
        %s907 = scalar_lea.vmem %s14, %s906
        %p908 = pneg %p411
        %p909 = pneg %p408
        %p910 = scmp.lt.s32.totalorder %s36, 1
        %s911 = scalar_select %p910, %s36, 1
        %s912 = scalar_lea.vmem %s15, %s911
        %p913 = pneg %p437
        %p914 = pneg %p434
        %p915 = scmp.lt.s32.totalorder %s36, 1
        %s916 = scalar_select %p915, %s36, 1
        %s917 = smul.addr %s916, 16
        %s918 = smul.addr %s917, 4
        %s919 = scalar_lea.vmem %s16, %s918
        %p920 = pneg %p463
        %p921 = pneg %p460
        %p922 = scmp.lt.s32.totalorder %s36, 1
        %s923 = scalar_select %p922, %s36, 1
        %s924 = smul.addr %s923, 2
        %s925 = scalar_lea.vmem %s17, %s924
        %p926 = pneg %p489
        %p927 = pneg %p486
        %p928 = scmp.lt.s32.totalorder %s36, 1
        %s929 = scalar_select %p928, %s36, 1
        %s930 = smul.addr %s929, 32
        %s931 = smul.addr %s930, 4
        %s932 = scalar_lea.vmem %s18, %s931
        %p933 = pneg %p515
        %p934 = pneg %p512
        %p935 = scmp.lt.s32.totalorder %s36, 1
        %s936 = scalar_select %p935, %s36, 1
        %s937 = scalar_lea.vmem %s19, %s936
        %p938 = pneg %p541
        %p939 = pneg %p538
        %p940 = scmp.lt.s32.totalorder %s36, 1
        %s941 = scalar_select %p940, %s36, 1
        %s942 = scalar_lea.vmem %s20, %s941
        %p943 = pneg %p567
        %p944 = pneg %p564
        %p945 = scmp.lt.s32.totalorder %s36, 1
        %s946 = scalar_select %p945, %s36, 1
        %s947 = scalar_lea.vmem %s21, %s946
        %p948 = pneg %p593
        %p949 = pneg %p590
        %p950 = pneg %p614
        %p951 = pneg %p611
        %p952 = pneg %p635
        %p953 = pneg %p632
        %p954 = pneg %p656
        %p955 = pneg %p653
        %p956 = scmp.lt.s32.totalorder %s36, 1
        %s957 = scalar_select %p956, %s36, 1
        %s958 = smul.addr %s957, 16
        %s959 = smul.addr %s958, 4
        %s960 = scalar_lea.vmem %s2, %s959
        %p961 = scmp.lt.s32.totalorder %s36, 1
        %s962 = scalar_select %p961, %s36, 1
        %s963 = smul.addr %s962, 2
        %s964 = scalar_lea.vmem %s3, %s963
        %p965 = scmp.lt.s32.totalorder %s36, 1
        %s966 = scalar_select %p965, %s36, 1
        %s967 = smul.addr %s966, 8
        %s968 = smul.addr %s967, 4
        %s969 = scalar_lea.vmem %s4, %s968
        %p970 = scmp.lt.s32.totalorder %s36, 1
        %s971 = scalar_select %p970, %s36, 1
        %s972 = scalar_lea.vmem %s5, %s971
        %p973 = scmp.lt.s32.totalorder %s36, 1
        %s974 = scalar_select %p973, %s36, 1
        %s975 = scalar_lea.vmem %s6, %s974
        %p976 = scmp.lt.s32.totalorder %s36, 1
        %s977 = scalar_select %p976, %s36, 1
        %s978 = scalar_lea.vmem %s7, %s977
        %p979 = scmp.lt.s32.totalorder %s36, 1
        %s980 = scalar_select %p979, %s36, 1
        %s981 = smul.addr %s980, 8
        %s982 = smul.addr %s981, 4
        %s983 = scalar_lea.vmem %s8, %s982
        %p984 = scmp.lt.s32.totalorder %s36, 1
        %s985 = scalar_select %p984, %s36, 1
        %s986 = scalar_lea.vmem %s9, %s985
        %p987 = scmp.lt.s32.totalorder %s36, 1
        %s988 = scalar_select %p987, %s36, 1
        %s989 = smul.addr %s988, 8
        %s990 = smul.addr %s989, 4
        %s991 = scalar_lea.vmem %s10, %s990
        %p992 = scmp.lt.s32.totalorder %s36, 1
        %s993 = scalar_select %p992, %s36, 1
        %s994 = scalar_lea.vmem %s11, %s993
        %p995 = scmp.lt.s32.totalorder %s36, 1
        %s996 = scalar_select %p995, %s36, 1
        %s997 = smul.addr %s996, 8
        %s998 = smul.addr %s997, 4
        %s999 = scalar_lea.vmem %s12, %s998
        %p1000 = scmp.lt.s32.totalorder %s36, 1
        %s1001 = scalar_select %p1000, %s36, 1
        %s1002 = scalar_lea.vmem %s13, %s1001
        %p1003 = scmp.lt.s32.totalorder %s36, 1
        %s1004 = scalar_select %p1003, %s36, 1
        %s1005 = scalar_lea.vmem %s14, %s1004
        %p1006 = scmp.lt.s32.totalorder %s36, 1
        %s1007 = scalar_select %p1006, %s36, 1
        %s1008 = scalar_lea.vmem %s15, %s1007
        %p1009 = scmp.lt.s32.totalorder %s36, 1
        %s1010 = scalar_select %p1009, %s36, 1
        %s1011 = smul.addr %s1010, 16
        %s1012 = smul.addr %s1011, 4
        %s1013 = scalar_lea.vmem %s16, %s1012
        %p1014 = scmp.lt.s32.totalorder %s36, 1
        %s1015 = scalar_select %p1014, %s36, 1
        %s1016 = smul.addr %s1015, 2
        %s1017 = scalar_lea.vmem %s17, %s1016
        %p1018 = scmp.lt.s32.totalorder %s36, 1
        %s1019 = scalar_select %p1018, %s36, 1
        %s1020 = smul.addr %s1019, 32
        %s1021 = smul.addr %s1020, 4
        %s1022 = scalar_lea.vmem %s18, %s1021
        %p1023 = scmp.lt.s32.totalorder %s36, 1
        %s1024 = scalar_select %p1023, %s36, 1
        %s1025 = scalar_lea.vmem %s19, %s1024
        %p1026 = scmp.lt.s32.totalorder %s36, 1
        %s1027 = scalar_select %p1026, %s36, 1
        %s1028 = scalar_lea.vmem %s20, %s1027
        %p1029 = scmp.lt.s32.totalorder %s36, 1
        %s1030 = scalar_select %p1029, %s36, 1
        %s1031 = scalar_lea.vmem %s21, %s1030
        %p1033 = scmp.eq.s32.totalorder %s36, 0
        // Predicated region
        $region117: #{decoder_forward.1} parent=115 // pred_check
          %p1034 = pneg %p1033
        $region118: #{decoder_forward.1} parent=115 // pred_check_branch
          %1036 = sbr.rel (%p1034) target = $region120
        $region119: #{decoder_forward.1} parent=115 // pred_region
          %v1037 = vld [vmem:[%s0] sm:$0xf]
          %v1038 = vld [vmem:[%s0 + $0x4] sm:$0xf]
          %v1039 = vunpack.c.l.bf16 %v1037
          %v1040 = vunpack.c.l.bf16 %v1038
          %vm1041 = vcmask 523264
          %1042 = vst.msk [vmem:[#allocation2] sm:$0xff] %vm1041, %v1039
          %1043 = vst.msk [vmem:[#allocation2 + $0x8] sm:$0xff] %vm1041, %v1040
        $region120: #{decoder_forward.1} parent=115 // pred_fallthru
          _
        %v1044 = vld [vmem:[#allocation2] sm:$0xff]
        %v1045 = vld [vmem:[#allocation2 + $0x8] sm:$0xff]
        %v1046 = vld [vmem:[%s1] sm:$0xf]
        %v1047 = vld [vmem:[%s1 + $0x4] sm:$0xf]
        %v1048 = vld [vmem:[%s1 + $0x8] sm:$0xf]
        %v1049 = vld [vmem:[%s1 + $0xc] sm:$0xf]
        %v1050 = vld [vmem:[%s960] sm:$0xff]
        %v1051 = vld [vmem:[%s960 + $0x8] sm:$0xff]
        %v1052 = vld [vmem:[%s960 + $0x10] sm:$0xff]
        %v1053 = vld [vmem:[%s960 + $0x18] sm:$0xff]
        %v1054 = vld [vmem:[%s960 + $0x20] sm:$0xff]
        %v1055 = vld [vmem:[%s960 + $0x28] sm:$0xff]
        %v1056 = vld [vmem:[%s960 + $0x30] sm:$0xff]
        %v1057 = vld [vmem:[%s960 + $0x38] sm:$0xff]
        %v1058 = vpack.c.bf16 %v1045, %v1044
        %v1059 = vld [vmem:[%s964] sm:$0x3]
        %v1061 = vlaneseq
        %v1062 = vshrl.u32 %v1061, 7
        %v1063 = vsub.s32 0, %v1062
        %v1064 = vrot.slane %v1059, %v1063
        %v1065 = vlaneseq
        %v1066 = vshrl.u32 %v1065, 7
        %v1067 = vsub.s32 1, %v1066
        %v1068 = vrot.slane %v1059, %v1067
        %v1079 = vunpack.c.l.b16 %v1050
        %v1080 = vunpack.c.h.b16 %v1050
        %v1081 = vunpack.c.l.b16 %v1051
        %v1082 = vunpack.c.h.b16 %v1051
        %v1083 = vunpack.c.l.b16 %v1052
        %v1084 = vunpack.c.h.b16 %v1052
        %v1085 = vunpack.c.l.b16 %v1053
        %v1086 = vunpack.c.h.b16 %v1053
        %v1087 = vunpack.c.l.b16 %v1054
        %v1088 = vunpack.c.h.b16 %v1054
        %v1089 = vunpack.c.l.b16 %v1055
        %v1090 = vunpack.c.h.b16 %v1055
        %v1091 = vunpack.c.l.b16 %v1056
        %v1092 = vunpack.c.h.b16 %v1056
        %v1093 = vunpack.c.l.b16 %v1057
        %v1094 = vunpack.c.h.b16 %v1057
        %v1095 = vpack.c.b16 %v1081, %v1079
        %v1096 = vpack.c.b16 %v1082, %v1080
        %v1097 = vpack.c.b16 %v1085, %v1083
        %v1098 = vpack.c.b16 %v1086, %v1084
        %v1099 = vpack.c.b16 %v1089, %v1087
        %v1100 = vpack.c.b16 %v1090, %v1088
        %v1101 = vpack.c.b16 %v1093, %v1091
        %v1102 = vpack.c.b16 %v1094, %v1092
        %vm1111 = vcmask 523264
        %v1113 = vsel %vm1111, %v1058, 0
        %1115 = vmatprep.subr.bf16.mxu0 %v1096
        %1116 = vmatpush1.bf16.msra.mxu0 %v1095
        %1117 = vmatprep.subr.bf16.mxu0 %v1098
        %1118 = vmatpush1.bf16.msra.mxu0 %v1097
        %1119 = vmatprep.subr.bf16.mxu0 %v1100
        %1120 = vmatpush1.bf16.msra.mxu0 %v1099
        %1121 = vmatprep.subr.bf16.mxu0 %v1102
        %1122 = vmatpush1.bf16.msra.mxu0 %v1101
        %1123 = vmatprep.subr.bf16.mxu0 0
        %1124 = vmatpush1.bf16.msra.mxu0 0
        %1125 = vmatprep.subr.bf16.mxu0 0
        %1126 = vmatpush1.bf16.msra.mxu0 0
        %1127 = vmatprep.subr.bf16.mxu0 0
        %1128 = vmatpush1.bf16.msra.mxu0 0
        %1129 = vmatprep.subr.bf16.mxu0 0
        %1130 = vmatpush1.bf16.msra.mxu0 0
        %1131 = vmatprep.subr.bf16.mxu0 0
        %1132 = vmatpush1.bf16.msra.mxu0 0
        %1133 = vmatprep.subr.bf16.mxu0 0
        %1134 = vmatpush1.bf16.msra.mxu0 0
        %1135 = vmatprep.subr.bf16.mxu0 0
        %1136 = vmatpush1.bf16.msra.mxu0 0
        %1137 = vmatprep.subr.bf16.mxu0 0
        %1138 = vmatpush1.bf16.msra.mxu0 0
        %1139 = vmatprep.subr.bf16.mxu0 0
        %1140 = vmatpush1.bf16.msra.mxu0 0
        %1141 = vmatprep.subr.bf16.mxu0 0
        %1142 = vmatpush1.bf16.msra.mxu0 0
        %1143 = vmatprep.subr.bf16.mxu0 0
        %1144 = vmatpush1.bf16.msra.mxu0 0
        %1145 = vmatprep.subr.bf16.mxu0 0
        %1146 = vmatpush1.bf16.msra.mxu0 0
        %1147 = vmatprep.mubr.bf16.mxu0 0
        %1148 = vmatmul.mubr.bf16.gmra.mrb[0].mxu0 %v1113
        %v1149 = vpop.f32.mrb[0].mxu0
        %v1150 = vadd.f32 %v1064, %v1149
        %v1151 = vpop.f32.mrb[0].mxu0
        %v1152 = vadd.f32 %v1068, %v1151
        %v1153 = vpop.f32.mrb[0].mxu0
        %v1154 = vadd.f32 %v1064, %v1153
        %v1155 = vpop.f32.mrb[0].mxu0
        %v1156 = vadd.f32 %v1068, %v1155
        %1157 = vdwg.mxu0
        %v1158 = vmul.f32 %v1150, 0.125
        %v1159 = vmul.f32 %v1154, 0.125
        %v1160 = vpack.c.bf16 %v1158, %v1158
        %v1161 = vpack.c.bf16 %v1159, %v1159
        %v1162 = vpack.c.bf16 %v1150, %v1150
        %v1163 = vpack.c.bf16 %v1154, %v1154
        %v1164 = vpack.c.bf16 %v1152, %v1152
        %v1165 = vpack.c.bf16 %v1156, %v1156
        %1167 = vrot.lane.b32.xlu0 %v1162, 64
        %v1168 = vpop.permute.xlu0 %1167
        %vm1169 = vcmask 130048
        %v1171 = vsel %vm1169, %v1160, 0
        %v1174 = vsel %vm1169, %v1168, 0
        %1176 = vmatprep.subr.bf16.mxu0 0
        %1177 = vmatpush1.bf16.xpose.msra.mxu0 %v1174
        %1178 = vmatprep.subr.bf16.mxu0 0
        %1179 = vmatpush1.bf16.xpose.msra.mxu0 0
        %1180 = vmatprep.subr.bf16.mxu0 0
        %1181 = vmatpush1.bf16.xpose.msra.mxu0 0
        %1182 = vmatprep.subr.bf16.mxu0 0
        %1183 = vmatpush1.bf16.xpose.msra.mxu0 0
        %1184 = vmatprep.subr.bf16.mxu0 0
        %1185 = vmatpush1.bf16.xpose.msra.mxu0 0
        %1186 = vmatprep.subr.bf16.mxu0 0
        %1187 = vmatpush1.bf16.xpose.msra.mxu0 0
        %1188 = vmatprep.subr.bf16.mxu0 0
        %1189 = vmatpush1.bf16.xpose.msra.mxu0 0
        %1190 = vmatprep.subr.bf16.mxu0 0
        %1191 = vmatpush1.bf16.xpose.msra.mxu0 0
        %1192 = vmatprep.subr.bf16.mxu0 0
        %1193 = vmatpush1.bf16.xpose.msra.mxu0 0
        %1194 = vmatprep.subr.bf16.mxu0 0
        %1195 = vmatpush1.bf16.xpose.msra.mxu0 0
        %1196 = vmatprep.subr.bf16.mxu0 0
        %1197 = vmatpush1.bf16.xpose.msra.mxu0 0
        %1198 = vmatprep.subr.bf16.mxu0 0
        %1199 = vmatpush1.bf16.xpose.msra.mxu0 0
        %1200 = vmatprep.subr.bf16.mxu0 0
        %1201 = vmatpush1.bf16.xpose.msra.mxu0 0
        %1202 = vmatprep.subr.bf16.mxu0 0
        %1203 = vmatpush1.bf16.xpose.msra.mxu0 0
        %1204 = vmatprep.subr.bf16.mxu0 0
        %1205 = vmatpush1.bf16.xpose.msra.mxu0 0
        %1206 = vmatprep.subr.bf16.mxu0 0
        %1207 = vmatpush1.bf16.xpose.msra.mxu0 0
        %1208 = vmatprep.mubr.bf16.mxu0 0
        %1209 = vmatmul.mubr.bf16.gmra.mrb[0].mxu0 %v1171
        %v1210 = vpop.f32.mrb[0].mxu0
        %v1211 = vadd.f32 0.0, %v1210
        %v1212 = vpop.f32.mrb[0].mxu0
        %v1213 = vpop.f32.mrb[0].mxu0
        %v1214 = vpop.f32.mrb[0].mxu0
        %1215 = vdwg.mxu0
        %1217 = vrot.lane.b32.xlu0 %v1163, 64
        %v1218 = vpop.permute.xlu0 %1217
        %v1220 = vsel %vm1169, %v1161, 0
        %v1223 = vsel %vm1169, %v1218, 0
        %1225 = vmatprep.subr.bf16.mxu0 0
        %1226 = vmatpush1.bf16.xpose.msra.mxu0 %v1223
        %1227 = vmatprep.subr.bf16.mxu0 0
        %1228 = vmatpush1.bf16.xpose.msra.mxu0 0
        %1229 = vmatprep.subr.bf16.mxu0 0
        %1230 = vmatpush1.bf16.xpose.msra.mxu0 0
        %1231 = vmatprep.subr.bf16.mxu0 0
        %1232 = vmatpush1.bf16.xpose.msra.mxu0 0
        %1233 = vmatprep.subr.bf16.mxu0 0
        %1234 = vmatpush1.bf16.xpose.msra.mxu0 0
        %1235 = vmatprep.subr.bf16.mxu0 0
        %1236 = vmatpush1.bf16.xpose.msra.mxu0 0
        %1237 = vmatprep.subr.bf16.mxu0 0
        %1238 = vmatpush1.bf16.xpose.msra.mxu0 0
        %1239 = vmatprep.subr.bf16.mxu0 0
        %1240 = vmatpush1.bf16.xpose.msra.mxu0 0
        %1241 = vmatprep.subr.bf16.mxu0 0
        %1242 = vmatpush1.bf16.xpose.msra.mxu0 0
        %1243 = vmatprep.subr.bf16.mxu0 0
        %1244 = vmatpush1.bf16.xpose.msra.mxu0 0
        %1245 = vmatprep.subr.bf16.mxu0 0
        %1246 = vmatpush1.bf16.xpose.msra.mxu0 0
        %1247 = vmatprep.subr.bf16.mxu0 0
        %1248 = vmatpush1.bf16.xpose.msra.mxu0 0
        %1249 = vmatprep.subr.bf16.mxu0 0
        %1250 = vmatpush1.bf16.xpose.msra.mxu0 0
        %1251 = vmatprep.subr.bf16.mxu0 0
        %1252 = vmatpush1.bf16.xpose.msra.mxu0 0
        %1253 = vmatprep.subr.bf16.mxu0 0
        %1254 = vmatpush1.bf16.xpose.msra.mxu0 0
        %1255 = vmatprep.subr.bf16.mxu0 0
        %1256 = vmatpush1.bf16.xpose.msra.mxu0 0
        %1257 = vmatprep.mubr.bf16.mxu0 0
        %1258 = vmatmul.mubr.bf16.gmra.mrb[0].mxu0 %v1220
        %v1259 = vpop.f32.mrb[0].mxu0
        %v1260 = vadd.f32 0.0, %v1259
        %v1261 = vpop.f32.mrb[0].mxu0
        %v1262 = vpop.f32.mrb[0].mxu0
        %v1263 = vpop.f32.mrb[0].mxu0
        %1264 = vdwg.mxu0
        %vm1265 = vcmask 64512
        %v1266 = vsel %vm1265, %v1211, -inf
        %1267 = vmax.xlane.f32.xlu0 %v1266
        %v1268 = vpop.xlane.xlu0 %1267
        %v1269 = vsel %vm1265, %v1260, -inf
        %1270 = vmax.xlane.f32.xlu0 %v1269
        %v1271 = vpop.xlane.xlu0 %1270
        %v1272 = vsub.f32 %v1211, %v1268
        %v1273 = vsub.f32 %v1260, %v1271
        %v1274 = vmul.f32 %v1272, 1.442695
        %v1275 = vpow.pop %v1274
        %v1276 = vmul.f32 %v1273, 1.442695
        %v1277 = vpow.pop %v1276
        %v1278 = vsel %vm1265, %v1275, 0.0
        %1279 = vadd.xlane.f32.xlu0 %v1278
        %v1280 = vpop.xlane.xlu0 %1279
        %v1281 = vsel %vm1265, %v1277, 0.0
        %1282 = vadd.xlane.f32.xlu0 %v1281
        %v1283 = vpop.xlane.xlu0 %1282
        %v1284 = vrcp.pop %v1280
        %v1285 = vrcp.pop %v1283
        %v1286 = vmul.f32 %v1275, %v1284
        %v1287 = vmul.f32 %v1277, %v1285
        %v1288 = vpack.c.bf16 %v1286, %v1286
        %v1289 = vpack.c.bf16 %v1287, %v1287
        %v1291 = vsel %vm1265, %v1288, 0
        %vm1293 = vcmask 1043456
        %v1295 = vsel %vm1293, %v1164, 0
        %1297 = vmatprep.subr.bf16.mxu0 0
        %1298 = vmatpush1.bf16.msra.mxu0 %v1295
        %1299 = vmatprep.subr.bf16.mxu0 0
        %1300 = vmatpush1.bf16.msra.mxu0 0
        %1301 = vmatprep.subr.bf16.mxu0 0
        %1302 = vmatpush1.bf16.msra.mxu0 0
        %1303 = vmatprep.subr.bf16.mxu0 0
        %1304 = vmatpush1.bf16.msra.mxu0 0
        %1305 = vmatprep.subr.bf16.mxu0 0
        %1306 = vmatpush1.bf16.msra.mxu0 0
        %1307 = vmatprep.subr.bf16.mxu0 0
        %1308 = vmatpush1.bf16.msra.mxu0 0
        %1309 = vmatprep.subr.bf16.mxu0 0
        %1310 = vmatpush1.bf16.msra.mxu0 0
        %1311 = vmatprep.subr.bf16.mxu0 0
        %1312 = vmatpush1.bf16.msra.mxu0 0
        %1313 = vmatprep.subr.bf16.mxu0 0
        %1314 = vmatpush1.bf16.msra.mxu0 0
        %1315 = vmatprep.subr.bf16.mxu0 0
        %1316 = vmatpush1.bf16.msra.mxu0 0
        %1317 = vmatprep.subr.bf16.mxu0 0
        %1318 = vmatpush1.bf16.msra.mxu0 0
        %1319 = vmatprep.subr.bf16.mxu0 0
        %1320 = vmatpush1.bf16.msra.mxu0 0
        %1321 = vmatprep.subr.bf16.mxu0 0
        %1322 = vmatpush1.bf16.msra.mxu0 0
        %1323 = vmatprep.subr.bf16.mxu0 0
        %1324 = vmatpush1.bf16.msra.mxu0 0
        %1325 = vmatprep.subr.bf16.mxu0 0
        %1326 = vmatpush1.bf16.msra.mxu0 0
        %1327 = vmatprep.subr.bf16.mxu0 0
        %1328 = vmatpush1.bf16.msra.mxu0 0
        %1329 = vmatprep.mubr.bf16.mxu0 0
        %1330 = vmatmul.mubr.bf16.gmra.mrb[0].mxu0 %v1291
        %v1331 = vpop.f32.mrb[0].mxu0
        %v1332 = vadd.f32 0.0, %v1331
        %v1333 = vpop.f32.mrb[0].mxu0
        %v1334 = vpop.f32.mrb[0].mxu0
        %v1335 = vpop.f32.mrb[0].mxu0
        %1336 = vdwg.mxu0
        %v1338 = vsel %vm1265, %v1289, 0
        %v1341 = vsel %vm1293, %v1165, 0
        %1343 = vmatprep.subr.bf16.mxu0 0
        %1344 = vmatpush1.bf16.msra.mxu0 %v1341
        %1345 = vmatprep.subr.bf16.mxu0 0
        %1346 = vmatpush1.bf16.msra.mxu0 0
        %1347 = vmatprep.subr.bf16.mxu0 0
        %1348 = vmatpush1.bf16.msra.mxu0 0
        %1349 = vmatprep.subr.bf16.mxu0 0
        %1350 = vmatpush1.bf16.msra.mxu0 0
        %1351 = vmatprep.subr.bf16.mxu0 0
        %1352 = vmatpush1.bf16.msra.mxu0 0
        %1353 = vmatprep.subr.bf16.mxu0 0
        %1354 = vmatpush1.bf16.msra.mxu0 0
        %1355 = vmatprep.subr.bf16.mxu0 0
        %1356 = vmatpush1.bf16.msra.mxu0 0
        %1357 = vmatprep.subr.bf16.mxu0 0
        %1358 = vmatpush1.bf16.msra.mxu0 0
        %1359 = vmatprep.subr.bf16.mxu0 0
        %1360 = vmatpush1.bf16.msra.mxu0 0
        %1361 = vmatprep.subr.bf16.mxu0 0
        %1362 = vmatpush1.bf16.msra.mxu0 0
        %1363 = vmatprep.subr.bf16.mxu0 0
        %1364 = vmatpush1.bf16.msra.mxu0 0
        %1365 = vmatprep.subr.bf16.mxu0 0
        %1366 = vmatpush1.bf16.msra.mxu0 0
        %1367 = vmatprep.subr.bf16.mxu0 0
        %1368 = vmatpush1.bf16.msra.mxu0 0
        %1369 = vmatprep.subr.bf16.mxu0 0
        %1370 = vmatpush1.bf16.msra.mxu0 0
        %1371 = vmatprep.subr.bf16.mxu0 0
        %1372 = vmatpush1.bf16.msra.mxu0 0
        %1373 = vmatprep.subr.bf16.mxu0 0
        %1374 = vmatpush1.bf16.msra.mxu0 0
        %1375 = vmatprep.mubr.bf16.mxu0 0
        %1376 = vmatmul.mubr.bf16.gmra.mrb[0].mxu0 %v1338
        %v1377 = vpop.f32.mrb[0].mxu0
        %v1378 = vadd.f32 0.0, %v1377
        %v1379 = vpop.f32.mrb[0].mxu0
        %v1380 = vpop.f32.mrb[0].mxu0
        %v1381 = vpop.f32.mrb[0].mxu0
        %1382 = vdwg.mxu0
        %1384 = vrot.lane.b32.xlu0 %v1160, 112
        %v1385 = vpop.permute.xlu0 %1384
        %1386 = vrot.lane.b32.xlu0 %v1162, 48
        %v1387 = vpop.permute.xlu0 %1386
        %v1389 = vsel %vm1169, %v1385, 0
        %v1392 = vsel %vm1169, %v1387, 0
        %1394 = vmatprep.subr.bf16.mxu0 0
        %1395 = vmatpush1.bf16.xpose.msra.mxu0 %v1392
        %1396 = vmatprep.subr.bf16.mxu0 0
        %1397 = vmatpush1.bf16.xpose.msra.mxu0 0
        %1398 = vmatprep.subr.bf16.mxu0 0
        %1399 = vmatpush1.bf16.xpose.msra.mxu0 0
        %1400 = vmatprep.subr.bf16.mxu0 0
        %1401 = vmatpush1.bf16.xpose.msra.mxu0 0
        %1402 = vmatprep.subr.bf16.mxu0 0
        %1403 = vmatpush1.bf16.xpose.msra.mxu0 0
        %1404 = vmatprep.subr.bf16.mxu0 0
        %1405 = vmatpush1.bf16.xpose.msra.mxu0 0
        %1406 = vmatprep.subr.bf16.mxu0 0
        %1407 = vmatpush1.bf16.xpose.msra.mxu0 0
        %1408 = vmatprep.subr.bf16.mxu0 0
        %1409 = vmatpush1.bf16.xpose.msra.mxu0 0
        %1410 = vmatprep.subr.bf16.mxu0 0
        %1411 = vmatpush1.bf16.xpose.msra.mxu0 0
        %1412 = vmatprep.subr.bf16.mxu0 0
        %1413 = vmatpush1.bf16.xpose.msra.mxu0 0
        %1414 = vmatprep.subr.bf16.mxu0 0
        %1415 = vmatpush1.bf16.xpose.msra.mxu0 0
        %1416 = vmatprep.subr.bf16.mxu0 0
        %1417 = vmatpush1.bf16.xpose.msra.mxu0 0
        %1418 = vmatprep.subr.bf16.mxu0 0
        %1419 = vmatpush1.bf16.xpose.msra.mxu0 0
        %1420 = vmatprep.subr.bf16.mxu0 0
        %1421 = vmatpush1.bf16.xpose.msra.mxu0 0
        %1422 = vmatprep.subr.bf16.mxu0 0
        %1423 = vmatpush1.bf16.xpose.msra.mxu0 0
        %1424 = vmatprep.subr.bf16.mxu0 0
        %1425 = vmatpush1.bf16.xpose.msra.mxu0 0
        %1426 = vmatprep.mubr.bf16.mxu0 0
        %1427 = vmatmul.mubr.bf16.gmra.mrb[0].mxu0 %v1389
        %v1428 = vpop.f32.mrb[0].mxu0
        %v1429 = vadd.f32 0.0, %v1428
        %v1430 = vpop.f32.mrb[0].mxu0
        %v1431 = vpop.f32.mrb[0].mxu0
        %v1432 = vpop.f32.mrb[0].mxu0
        %1433 = vdwg.mxu0
        %1435 = vrot.lane.b32.xlu0 %v1161, 112
        %v1436 = vpop.permute.xlu0 %1435
        %1437 = vrot.lane.b32.xlu0 %v1163, 48
        %v1438 = vpop.permute.xlu0 %1437
        %v1440 = vsel %vm1169, %v1436, 0
        %v1443 = vsel %vm1169, %v1438, 0
        %1445 = vmatprep.subr.bf16.mxu0 0
        %1446 = vmatpush1.bf16.xpose.msra.mxu0 %v1443
        %1447 = vmatprep.subr.bf16.mxu0 0
        %1448 = vmatpush1.bf16.xpose.msra.mxu0 0
        %1449 = vmatprep.subr.bf16.mxu0 0
        %1450 = vmatpush1.bf16.xpose.msra.mxu0 0
        %1451 = vmatprep.subr.bf16.mxu0 0
        %1452 = vmatpush1.bf16.xpose.msra.mxu0 0
        %1453 = vmatprep.subr.bf16.mxu0 0
        %1454 = vmatpush1.bf16.xpose.msra.mxu0 0
        %1455 = vmatprep.subr.bf16.mxu0 0
        %1456 = vmatpush1.bf16.xpose.msra.mxu0 0
        %1457 = vmatprep.subr.bf16.mxu0 0
        %1458 = vmatpush1.bf16.xpose.msra.mxu0 0
        %1459 = vmatprep.subr.bf16.mxu0 0
        %1460 = vmatpush1.bf16.xpose.msra.mxu0 0
        %1461 = vmatprep.subr.bf16.mxu0 0
        %1462 = vmatpush1.bf16.xpose.msra.mxu0 0
        %1463 = vmatprep.subr.bf16.mxu0 0
        %1464 = vmatpush1.bf16.xpose.msra.mxu0 0
        %1465 = vmatprep.subr.bf16.mxu0 0
        %1466 = vmatpush1.bf16.xpose.msra.mxu0 0
        %1467 = vmatprep.subr.bf16.mxu0 0
        %1468 = vmatpush1.bf16.xpose.msra.mxu0 0
        %1469 = vmatprep.subr.bf16.mxu0 0
        %1470 = vmatpush1.bf16.xpose.msra.mxu0 0
        %1471 = vmatprep.subr.bf16.mxu0 0
        %1472 = vmatpush1.bf16.xpose.msra.mxu0 0
        %1473 = vmatprep.subr.bf16.mxu0 0
        %1474 = vmatpush1.bf16.xpose.msra.mxu0 0
        %1475 = vmatprep.subr.bf16.mxu0 0
        %1476 = vmatpush1.bf16.xpose.msra.mxu0 0
        %1477 = vmatprep.mubr.bf16.mxu0 0
        %1478 = vmatmul.mubr.bf16.gmra.mrb[0].mxu0 %v1440
        %v1479 = vpop.f32.mrb[0].mxu0
        %v1480 = vadd.f32 0.0, %v1479
        %v1481 = vpop.f32.mrb[0].mxu0
        %v1482 = vpop.f32.mrb[0].mxu0
        %v1483 = vpop.f32.mrb[0].mxu0
        %1484 = vdwg.mxu0
        %v1485 = vsel %vm1265, %v1429, -inf
        %1486 = vmax.xlane.f32.xlu0 %v1485
        %v1487 = vpop.xlane.xlu0 %1486
        %v1488 = vsel %vm1265, %v1480, -inf
        %1489 = vmax.xlane.f32.xlu0 %v1488
        %v1490 = vpop.xlane.xlu0 %1489
        %v1491 = vsub.f32 %v1429, %v1487
        %v1492 = vsub.f32 %v1480, %v1490
        %v1493 = vmul.f32 %v1491, 1.442695
        %v1494 = vpow.pop %v1493
        %v1495 = vmul.f32 %v1492, 1.442695
        %v1496 = vpow.pop %v1495
        %v1497 = vsel %vm1265, %v1494, 0.0
        %1498 = vadd.xlane.f32.xlu0 %v1497
        %v1499 = vpop.xlane.xlu0 %1498
        %v1500 = vsel %vm1265, %v1496, 0.0
        %1501 = vadd.xlane.f32.xlu0 %v1500
        %v1502 = vpop.xlane.xlu0 %1501
        %v1503 = vrcp.pop %v1499
        %v1504 = vrcp.pop %v1502
        %v1505 = vmul.f32 %v1494, %v1503
        %v1506 = vmul.f32 %v1496, %v1504
        %v1507 = vpack.c.bf16 %v1505, %v1505
        %v1508 = vpack.c.bf16 %v1506, %v1506
        %1510 = vrot.lane.b32.xlu0 %v1164, 112
        %v1511 = vpop.permute.xlu0 %1510
        %v1513 = vsel %vm1265, %v1507, 0
        %v1516 = vsel %vm1293, %v1511, 0
        %1518 = vmatprep.subr.bf16.mxu0 0
        %1519 = vmatpush1.bf16.msra.mxu0 %v1516
        %1520 = vmatprep.subr.bf16.mxu0 0
        %1521 = vmatpush1.bf16.msra.mxu0 0
        %1522 = vmatprep.subr.bf16.mxu0 0
        %1523 = vmatpush1.bf16.msra.mxu0 0
        %1524 = vmatprep.subr.bf16.mxu0 0
        %1525 = vmatpush1.bf16.msra.mxu0 0
        %1526 = vmatprep.subr.bf16.mxu0 0
        %1527 = vmatpush1.bf16.msra.mxu0 0
        %1528 = vmatprep.subr.bf16.mxu0 0
        %1529 = vmatpush1.bf16.msra.mxu0 0
        %1530 = vmatprep.subr.bf16.mxu0 0
        %1531 = vmatpush1.bf16.msra.mxu0 0
        %1532 = vmatprep.subr.bf16.mxu0 0
        %1533 = vmatpush1.bf16.msra.mxu0 0
        %1534 = vmatprep.subr.bf16.mxu0 0
        %1535 = vmatpush1.bf16.msra.mxu0 0
        %1536 = vmatprep.subr.bf16.mxu0 0
        %1537 = vmatpush1.bf16.msra.mxu0 0
        %1538 = vmatprep.subr.bf16.mxu0 0
        %1539 = vmatpush1.bf16.msra.mxu0 0
        %1540 = vmatprep.subr.bf16.mxu0 0
        %1541 = vmatpush1.bf16.msra.mxu0 0
        %1542 = vmatprep.subr.bf16.mxu0 0
        %1543 = vmatpush1.bf16.msra.mxu0 0
        %1544 = vmatprep.subr.bf16.mxu0 0
        %1545 = vmatpush1.bf16.msra.mxu0 0
        %1546 = vmatprep.subr.bf16.mxu0 0
        %1547 = vmatpush1.bf16.msra.mxu0 0
        %1548 = vmatprep.subr.bf16.mxu0 0
        %1549 = vmatpush1.bf16.msra.mxu0 0
        %1550 = vmatprep.mubr.bf16.mxu0 0
        %1551 = vmatmul.mubr.bf16.gmra.mrb[0].mxu0 %v1513
        %v1552 = vpop.f32.mrb[0].mxu0
        %v1553 = vadd.f32 0.0, %v1552
        %v1554 = vpop.f32.mrb[0].mxu0
        %v1555 = vpop.f32.mrb[0].mxu0
        %v1556 = vpop.f32.mrb[0].mxu0
        %1557 = vdwg.mxu0
        %1559 = vrot.lane.b32.xlu0 %v1165, 112
        %v1560 = vpop.permute.xlu0 %1559
        %v1562 = vsel %vm1265, %v1508, 0
        %v1565 = vsel %vm1293, %v1560, 0
        %1567 = vmatprep.subr.bf16.mxu0 0
        %1568 = vmatpush1.bf16.msra.mxu0 %v1565
        %1569 = vmatprep.subr.bf16.mxu0 0
        %1570 = vmatpush1.bf16.msra.mxu0 0
        %1571 = vmatprep.subr.bf16.mxu0 0
        %1572 = vmatpush1.bf16.msra.mxu0 0
        %1573 = vmatprep.subr.bf16.mxu0 0
        %1574 = vmatpush1.bf16.msra.mxu0 0
        %1575 = vmatprep.subr.bf16.mxu0 0
        %1576 = vmatpush1.bf16.msra.mxu0 0
        %1577 = vmatprep.subr.bf16.mxu0 0
        %1578 = vmatpush1.bf16.msra.mxu0 0
        %1579 = vmatprep.subr.bf16.mxu0 0
        %1580 = vmatpush1.bf16.msra.mxu0 0
        %1581 = vmatprep.subr.bf16.mxu0 0
        %1582 = vmatpush1.bf16.msra.mxu0 0
        %1583 = vmatprep.subr.bf16.mxu0 0
        %1584 = vmatpush1.bf16.msra.mxu0 0
        %1585 = vmatprep.subr.bf16.mxu0 0
        %1586 = vmatpush1.bf16.msra.mxu0 0
        %1587 = vmatprep.subr.bf16.mxu0 0
        %1588 = vmatpush1.bf16.msra.mxu0 0
        %1589 = vmatprep.subr.bf16.mxu0 0
        %1590 = vmatpush1.bf16.msra.mxu0 0
        %1591 = vmatprep.subr.bf16.mxu0 0
        %1592 = vmatpush1.bf16.msra.mxu0 0
        %1593 = vmatprep.subr.bf16.mxu0 0
        %1594 = vmatpush1.bf16.msra.mxu0 0
        %1595 = vmatprep.subr.bf16.mxu0 0
        %1596 = vmatpush1.bf16.msra.mxu0 0
        %1597 = vmatprep.subr.bf16.mxu0 0
        %1598 = vmatpush1.bf16.msra.mxu0 0
        %1599 = vmatprep.mubr.bf16.mxu0 0
        %1600 = vmatmul.mubr.bf16.gmra.mrb[0].mxu0 %v1562
        %v1601 = vpop.f32.mrb[0].mxu0
        %v1602 = vadd.f32 0.0, %v1601
        %v1603 = vpop.f32.mrb[0].mxu0
        %v1604 = vpop.f32.mrb[0].mxu0
        %v1605 = vpop.f32.mrb[0].mxu0
        %1606 = vdwg.mxu0
        %1607 = vrot.lane.b32.xlu0 %v1160, 96
        %v1608 = vpop.permute.xlu0 %1607
        %1609 = vrot.lane.b32.xlu0 %v1162, 32
        %v1610 = vpop.permute.xlu0 %1609
        %v1612 = vsel %vm1169, %v1608, 0
        %v1615 = vsel %vm1169, %v1610, 0
        %1617 = vmatprep.subr.bf16.mxu0 0
        %1618 = vmatpush1.bf16.xpose.msra.mxu0 %v1615
        %1619 = vmatprep.subr.bf16.mxu0 0
        %1620 = vmatpush1.bf16.xpose.msra.mxu0 0
        %1621 = vmatprep.subr.bf16.mxu0 0
        %1622 = vmatpush1.bf16.xpose.msra.mxu0 0
        %1623 = vmatprep.subr.bf16.mxu0 0
        %1624 = vmatpush1.bf16.xpose.msra.mxu0 0
        %1625 = vmatprep.subr.bf16.mxu0 0
        %1626 = vmatpush1.bf16.xpose.msra.mxu0 0
        %1627 = vmatprep.subr.bf16.mxu0 0
        %1628 = vmatpush1.bf16.xpose.msra.mxu0 0
        %1629 = vmatprep.subr.bf16.mxu0 0
        %1630 = vmatpush1.bf16.xpose.msra.mxu0 0
        %1631 = vmatprep.subr.bf16.mxu0 0
        %1632 = vmatpush1.bf16.xpose.msra.mxu0 0
        %1633 = vmatprep.subr.bf16.mxu0 0
        %1634 = vmatpush1.bf16.xpose.msra.mxu0 0
        %1635 = vmatprep.subr.bf16.mxu0 0
        %1636 = vmatpush1.bf16.xpose.msra.mxu0 0
        %1637 = vmatprep.subr.bf16.mxu0 0
        %1638 = vmatpush1.bf16.xpose.msra.mxu0 0
        %1639 = vmatprep.subr.bf16.mxu0 0
        %1640 = vmatpush1.bf16.xpose.msra.mxu0 0
        %1641 = vmatprep.subr.bf16.mxu0 0
        %1642 = vmatpush1.bf16.xpose.msra.mxu0 0
        %1643 = vmatprep.subr.bf16.mxu0 0
        %1644 = vmatpush1.bf16.xpose.msra.mxu0 0
        %1645 = vmatprep.subr.bf16.mxu0 0
        %1646 = vmatpush1.bf16.xpose.msra.mxu0 0
        %1647 = vmatprep.subr.bf16.mxu0 0
        %1648 = vmatpush1.bf16.xpose.msra.mxu0 0
        %1649 = vmatprep.mubr.bf16.mxu0 0
        %1650 = vmatmul.mubr.bf16.gmra.mrb[0].mxu0 %v1612
        %v1651 = vpop.f32.mrb[0].mxu0
        %v1652 = vadd.f32 0.0, %v1651
        %v1653 = vpop.f32.mrb[0].mxu0
        %v1654 = vpop.f32.mrb[0].mxu0
        %v1655 = vpop.f32.mrb[0].mxu0
        %1656 = vdwg.mxu0
        %1657 = vrot.lane.b32.xlu0 %v1161, 96
        %v1658 = vpop.permute.xlu0 %1657
        %1659 = vrot.lane.b32.xlu0 %v1163, 32
        %v1660 = vpop.permute.xlu0 %1659
        %v1662 = vsel %vm1169, %v1658, 0
        %v1665 = vsel %vm1169, %v1660, 0
        %1667 = vmatprep.subr.bf16.mxu0 0
        %1668 = vmatpush1.bf16.xpose.msra.mxu0 %v1665
        %1669 = vmatprep.subr.bf16.mxu0 0
        %1670 = vmatpush1.bf16.xpose.msra.mxu0 0
        %1671 = vmatprep.subr.bf16.mxu0 0
        %1672 = vmatpush1.bf16.xpose.msra.mxu0 0
        %1673 = vmatprep.subr.bf16.mxu0 0
        %1674 = vmatpush1.bf16.xpose.msra.mxu0 0
        %1675 = vmatprep.subr.bf16.mxu0 0
        %1676 = vmatpush1.bf16.xpose.msra.mxu0 0
        %1677 = vmatprep.subr.bf16.mxu0 0
        %1678 = vmatpush1.bf16.xpose.msra.mxu0 0
        %1679 = vmatprep.subr.bf16.mxu0 0
        %1680 = vmatpush1.bf16.xpose.msra.mxu0 0
        %1681 = vmatprep.subr.bf16.mxu0 0
        %1682 = vmatpush1.bf16.xpose.msra.mxu0 0
        %1683 = vmatprep.subr.bf16.mxu0 0
        %1684 = vmatpush1.bf16.xpose.msra.mxu0 0
        %1685 = vmatprep.subr.bf16.mxu0 0
        %1686 = vmatpush1.bf16.xpose.msra.mxu0 0
        %1687 = vmatprep.subr.bf16.mxu0 0
        %1688 = vmatpush1.bf16.xpose.msra.mxu0 0
        %1689 = vmatprep.subr.bf16.mxu0 0
        %1690 = vmatpush1.bf16.xpose.msra.mxu0 0
        %1691 = vmatprep.subr.bf16.mxu0 0
        %1692 = vmatpush1.bf16.xpose.msra.mxu0 0
        %1693 = vmatprep.subr.bf16.mxu0 0
        %1694 = vmatpush1.bf16.xpose.msra.mxu0 0
        %1695 = vmatprep.subr.bf16.mxu0 0
        %1696 = vmatpush1.bf16.xpose.msra.mxu0 0
        %1697 = vmatprep.subr.bf16.mxu0 0
        %1698 = vmatpush1.bf16.xpose.msra.mxu0 0
        %1699 = vmatprep.mubr.bf16.mxu0 0
        %1700 = vmatmul.mubr.bf16.gmra.mrb[0].mxu0 %v1662
        %v1701 = vpop.f32.mrb[0].mxu0
        %v1702 = vadd.f32 0.0, %v1701
        %v1703 = vpop.f32.mrb[0].mxu0
        %v1704 = vpop.f32.mrb[0].mxu0
        %v1705 = vpop.f32.mrb[0].mxu0
        %1706 = vdwg.mxu0
        %v1707 = vsel %vm1265, %v1652, -inf
        %1708 = vmax.xlane.f32.xlu0 %v1707
        %v1709 = vpop.xlane.xlu0 %1708
        %v1710 = vsel %vm1265, %v1702, -inf
        %1711 = vmax.xlane.f32.xlu0 %v1710
        %v1712 = vpop.xlane.xlu0 %1711
        %v1713 = vsub.f32 %v1652, %v1709
        %v1714 = vsub.f32 %v1702, %v1712
        %v1715 = vmul.f32 %v1713, 1.442695
        %v1716 = vpow.pop %v1715
        %v1717 = vmul.f32 %v1714, 1.442695
        %v1718 = vpow.pop %v1717
        %v1719 = vsel %vm1265, %v1716, 0.0
        %1720 = vadd.xlane.f32.xlu0 %v1719
        %v1721 = vpop.xlane.xlu0 %1720
        %v1722 = vsel %vm1265, %v1718, 0.0
        %1723 = vadd.xlane.f32.xlu0 %v1722
        %v1724 = vpop.xlane.xlu0 %1723
        %v1725 = vrcp.pop %v1721
        %v1726 = vrcp.pop %v1724
        %v1727 = vmul.f32 %v1716, %v1725
        %v1728 = vmul.f32 %v1718, %v1726
        %v1729 = vpack.c.bf16 %v1727, %v1727
        %v1730 = vpack.c.bf16 %v1728, %v1728
        %1731 = vrot.lane.b32.xlu0 %v1164, 96
        %v1732 = vpop.permute.xlu0 %1731
        %v1734 = vsel %vm1265, %v1729, 0
        %v1737 = vsel %vm1293, %v1732, 0
        %1739 = vmatprep.subr.bf16.mxu0 0
        %1740 = vmatpush1.bf16.msra.mxu0 %v1737
        %1741 = vmatprep.subr.bf16.mxu0 0
        %1742 = vmatpush1.bf16.msra.mxu0 0
        %1743 = vmatprep.subr.bf16.mxu0 0
        %1744 = vmatpush1.bf16.msra.mxu0 0
        %1745 = vmatprep.subr.bf16.mxu0 0
        %1746 = vmatpush1.bf16.msra.mxu0 0
        %1747 = vmatprep.subr.bf16.mxu0 0
        %1748 = vmatpush1.bf16.msra.mxu0 0
        %1749 = vmatprep.subr.bf16.mxu0 0
        %1750 = vmatpush1.bf16.msra.mxu0 0
        %1751 = vmatprep.subr.bf16.mxu0 0
        %1752 = vmatpush1.bf16.msra.mxu0 0
        %1753 = vmatprep.subr.bf16.mxu0 0
        %1754 = vmatpush1.bf16.msra.mxu0 0
        %1755 = vmatprep.subr.bf16.mxu0 0
        %1756 = vmatpush1.bf16.msra.mxu0 0
        %1757 = vmatprep.subr.bf16.mxu0 0
        %1758 = vmatpush1.bf16.msra.mxu0 0
        %1759 = vmatprep.subr.bf16.mxu0 0
        %1760 = vmatpush1.bf16.msra.mxu0 0
        %1761 = vmatprep.subr.bf16.mxu0 0
        %1762 = vmatpush1.bf16.msra.mxu0 0
        %1763 = vmatprep.subr.bf16.mxu0 0
        %1764 = vmatpush1.bf16.msra.mxu0 0
        %1765 = vmatprep.subr.bf16.mxu0 0
        %1766 = vmatpush1.bf16.msra.mxu0 0
        %1767 = vmatprep.subr.bf16.mxu0 0
        %1768 = vmatpush1.bf16.msra.mxu0 0
        %1769 = vmatprep.subr.bf16.mxu0 0
        %1770 = vmatpush1.bf16.msra.mxu0 0
        %1771 = vmatprep.mubr.bf16.mxu0 0
        %1772 = vmatmul.mubr.bf16.gmra.mrb[0].mxu0 %v1734
        %v1773 = vpop.f32.mrb[0].mxu0
        %v1774 = vadd.f32 0.0, %v1773
        %v1775 = vpop.f32.mrb[0].mxu0
        %v1776 = vpop.f32.mrb[0].mxu0
        %v1777 = vpop.f32.mrb[0].mxu0
        %1778 = vdwg.mxu0
        %1779 = vrot.lane.b32.xlu0 %v1165, 96
        %v1780 = vpop.permute.xlu0 %1779
        %v1782 = vsel %vm1265, %v1730, 0
        %v1785 = vsel %vm1293, %v1780, 0
        %1787 = vmatprep.subr.bf16.mxu0 0
        %1788 = vmatpush1.bf16.msra.mxu0 %v1785
        %1789 = vmatprep.subr.bf16.mxu0 0
        %1790 = vmatpush1.bf16.msra.mxu0 0
        %1791 = vmatprep.subr.bf16.mxu0 0
        %1792 = vmatpush1.bf16.msra.mxu0 0
        %1793 = vmatprep.subr.bf16.mxu0 0
        %1794 = vmatpush1.bf16.msra.mxu0 0
        %1795 = vmatprep.subr.bf16.mxu0 0
        %1796 = vmatpush1.bf16.msra.mxu0 0
        %1797 = vmatprep.subr.bf16.mxu0 0
        %1798 = vmatpush1.bf16.msra.mxu0 0
        %1799 = vmatprep.subr.bf16.mxu0 0
        %1800 = vmatpush1.bf16.msra.mxu0 0
        %1801 = vmatprep.subr.bf16.mxu0 0
        %1802 = vmatpush1.bf16.msra.mxu0 0
        %1803 = vmatprep.subr.bf16.mxu0 0
        %1804 = vmatpush1.bf16.msra.mxu0 0
        %1805 = vmatprep.subr.bf16.mxu0 0
        %1806 = vmatpush1.bf16.msra.mxu0 0
        %1807 = vmatprep.subr.bf16.mxu0 0
        %1808 = vmatpush1.bf16.msra.mxu0 0
        %1809 = vmatprep.subr.bf16.mxu0 0
        %1810 = vmatpush1.bf16.msra.mxu0 0
        %1811 = vmatprep.subr.bf16.mxu0 0
        %1812 = vmatpush1.bf16.msra.mxu0 0
        %1813 = vmatprep.subr.bf16.mxu0 0
        %1814 = vmatpush1.bf16.msra.mxu0 0
        %1815 = vmatprep.subr.bf16.mxu0 0
        %1816 = vmatpush1.bf16.msra.mxu0 0
        %1817 = vmatprep.subr.bf16.mxu0 0
        %1818 = vmatpush1.bf16.msra.mxu0 0
        %1819 = vmatprep.mubr.bf16.mxu0 0
        %1820 = vmatmul.mubr.bf16.gmra.mrb[0].mxu0 %v1782
        %v1821 = vpop.f32.mrb[0].mxu0
        %v1822 = vadd.f32 0.0, %v1821
        %v1823 = vpop.f32.mrb[0].mxu0
        %v1824 = vpop.f32.mrb[0].mxu0
        %v1825 = vpop.f32.mrb[0].mxu0
        %1826 = vdwg.mxu0
        %1827 = vrot.lane.b32.xlu0 %v1160, 80
        %v1828 = vpop.permute.xlu0 %1827
        %1829 = vrot.lane.b32.xlu0 %v1162, 16
        %v1830 = vpop.permute.xlu0 %1829
        %v1832 = vsel %vm1169, %v1828, 0
        %v1835 = vsel %vm1169, %v1830, 0
        %1837 = vmatprep.subr.bf16.mxu0 0
        %1838 = vmatpush1.bf16.xpose.msra.mxu0 %v1835
        %1839 = vmatprep.subr.bf16.mxu0 0
        %1840 = vmatpush1.bf16.xpose.msra.mxu0 0
        %1841 = vmatprep.subr.bf16.mxu0 0
        %1842 = vmatpush1.bf16.xpose.msra.mxu0 0
        %1843 = vmatprep.subr.bf16.mxu0 0
        %1844 = vmatpush1.bf16.xpose.msra.mxu0 0
        %1845 = vmatprep.subr.bf16.mxu0 0
        %1846 = vmatpush1.bf16.xpose.msra.mxu0 0
        %1847 = vmatprep.subr.bf16.mxu0 0
        %1848 = vmatpush1.bf16.xpose.msra.mxu0 0
        %1849 = vmatprep.subr.bf16.mxu0 0
        %1850 = vmatpush1.bf16.xpose.msra.mxu0 0
        %1851 = vmatprep.subr.bf16.mxu0 0
        %1852 = vmatpush1.bf16.xpose.msra.mxu0 0
        %1853 = vmatprep.subr.bf16.mxu0 0
        %1854 = vmatpush1.bf16.xpose.msra.mxu0 0
        %1855 = vmatprep.subr.bf16.mxu0 0
        %1856 = vmatpush1.bf16.xpose.msra.mxu0 0
        %1857 = vmatprep.subr.bf16.mxu0 0
        %1858 = vmatpush1.bf16.xpose.msra.mxu0 0
        %1859 = vmatprep.subr.bf16.mxu0 0
        %1860 = vmatpush1.bf16.xpose.msra.mxu0 0
        %1861 = vmatprep.subr.bf16.mxu0 0
        %1862 = vmatpush1.bf16.xpose.msra.mxu0 0
        %1863 = vmatprep.subr.bf16.mxu0 0
        %1864 = vmatpush1.bf16.xpose.msra.mxu0 0
        %1865 = vmatprep.subr.bf16.mxu0 0
        %1866 = vmatpush1.bf16.xpose.msra.mxu0 0
        %1867 = vmatprep.subr.bf16.mxu0 0
        %1868 = vmatpush1.bf16.xpose.msra.mxu0 0
        %1869 = vmatprep.mubr.bf16.mxu0 0
        %1870 = vmatmul.mubr.bf16.gmra.mrb[0].mxu0 %v1832
        %v1871 = vpop.f32.mrb[0].mxu0
        %v1872 = vadd.f32 0.0, %v1871
        %v1873 = vpop.f32.mrb[0].mxu0
        %v1874 = vpop.f32.mrb[0].mxu0
        %v1875 = vpop.f32.mrb[0].mxu0
        %1876 = vdwg.mxu0
        %1877 = vrot.lane.b32.xlu0 %v1161, 80
        %v1878 = vpop.permute.xlu0 %1877
        %1879 = vrot.lane.b32.xlu0 %v1163, 16
        %v1880 = vpop.permute.xlu0 %1879
        %v1882 = vsel %vm1169, %v1878, 0
        %v1885 = vsel %vm1169, %v1880, 0
        %1887 = vmatprep.subr.bf16.mxu0 0
        %1888 = vmatpush1.bf16.xpose.msra.mxu0 %v1885
        %1889 = vmatprep.subr.bf16.mxu0 0
        %1890 = vmatpush1.bf16.xpose.msra.mxu0 0
        %1891 = vmatprep.subr.bf16.mxu0 0
        %1892 = vmatpush1.bf16.xpose.msra.mxu0 0
        %1893 = vmatprep.subr.bf16.mxu0 0
        %1894 = vmatpush1.bf16.xpose.msra.mxu0 0
        %1895 = vmatprep.subr.bf16.mxu0 0
        %1896 = vmatpush1.bf16.xpose.msra.mxu0 0
        %1897 = vmatprep.subr.bf16.mxu0 0
        %1898 = vmatpush1.bf16.xpose.msra.mxu0 0
        %1899 = vmatprep.subr.bf16.mxu0 0
        %1900 = vmatpush1.bf16.xpose.msra.mxu0 0
        %1901 = vmatprep.subr.bf16.mxu0 0
        %1902 = vmatpush1.bf16.xpose.msra.mxu0 0
        %1903 = vmatprep.subr.bf16.mxu0 0
        %1904 = vmatpush1.bf16.xpose.msra.mxu0 0
        %1905 = vmatprep.subr.bf16.mxu0 0
        %1906 = vmatpush1.bf16.xpose.msra.mxu0 0
        %1907 = vmatprep.subr.bf16.mxu0 0
        %1908 = vmatpush1.bf16.xpose.msra.mxu0 0
        %1909 = vmatprep.subr.bf16.mxu0 0
        %1910 = vmatpush1.bf16.xpose.msra.mxu0 0
        %1911 = vmatprep.subr.bf16.mxu0 0
        %1912 = vmatpush1.bf16.xpose.msra.mxu0 0
        %1913 = vmatprep.subr.bf16.mxu0 0
        %1914 = vmatpush1.bf16.xpose.msra.mxu0 0
        %1915 = vmatprep.subr.bf16.mxu0 0
        %1916 = vmatpush1.bf16.xpose.msra.mxu0 0
        %1917 = vmatprep.subr.bf16.mxu0 0
        %1918 = vmatpush1.bf16.xpose.msra.mxu0 0
        %1919 = vmatprep.mubr.bf16.mxu0 0
        %1920 = vmatmul.mubr.bf16.gmra.mrb[0].mxu0 %v1882
        %v1921 = vpop.f32.mrb[0].mxu0
        %v1922 = vadd.f32 0.0, %v1921
        %v1923 = vpop.f32.mrb[0].mxu0
        %v1924 = vpop.f32.mrb[0].mxu0
        %v1925 = vpop.f32.mrb[0].mxu0
        %1926 = vdwg.mxu0
        %v1927 = vsel %vm1265, %v1872, -inf
        %1928 = vmax.xlane.f32.xlu0 %v1927
        %v1929 = vpop.xlane.xlu0 %1928
        %v1930 = vsel %vm1265, %v1922, -inf
        %1931 = vmax.xlane.f32.xlu0 %v1930
        %v1932 = vpop.xlane.xlu0 %1931
        %v1933 = vsub.f32 %v1872, %v1929
        %v1934 = vsub.f32 %v1922, %v1932
        %v1935 = vmul.f32 %v1933, 1.442695
        %v1936 = vpow.pop %v1935
        %v1937 = vmul.f32 %v1934, 1.442695
        %v1938 = vpow.pop %v1937
        %v1939 = vsel %vm1265, %v1936, 0.0
        %1940 = vadd.xlane.f32.xlu0 %v1939
        %v1941 = vpop.xlane.xlu0 %1940
        %v1942 = vsel %vm1265, %v1938, 0.0
        %1943 = vadd.xlane.f32.xlu0 %v1942
        %v1944 = vpop.xlane.xlu0 %1943
        %v1945 = vrcp.pop %v1941
        %v1946 = vrcp.pop %v1944
        %v1947 = vmul.f32 %v1936, %v1945
        %v1948 = vmul.f32 %v1938, %v1946
        %v1949 = vpack.c.bf16 %v1947, %v1947
        %v1950 = vpack.c.bf16 %v1948, %v1948
        %1951 = vrot.lane.b32.xlu0 %v1164, 80
        %v1952 = vpop.permute.xlu0 %1951
        %v1954 = vsel %vm1265, %v1949, 0
        %v1957 = vsel %vm1293, %v1952, 0
        %1959 = vmatprep.subr.bf16.mxu0 0
        %1960 = vmatpush1.bf16.msra.mxu0 %v1957
        %1961 = vmatprep.subr.bf16.mxu0 0
        %1962 = vmatpush1.bf16.msra.mxu0 0
        %1963 = vmatprep.subr.bf16.mxu0 0
        %1964 = vmatpush1.bf16.msra.mxu0 0
        %1965 = vmatprep.subr.bf16.mxu0 0
        %1966 = vmatpush1.bf16.msra.mxu0 0
        %1967 = vmatprep.subr.bf16.mxu0 0
        %1968 = vmatpush1.bf16.msra.mxu0 0
        %1969 = vmatprep.subr.bf16.mxu0 0
        %1970 = vmatpush1.bf16.msra.mxu0 0
        %1971 = vmatprep.subr.bf16.mxu0 0
        %1972 = vmatpush1.bf16.msra.mxu0 0
        %1973 = vmatprep.subr.bf16.mxu0 0
        %1974 = vmatpush1.bf16.msra.mxu0 0
        %1975 = vmatprep.subr.bf16.mxu0 0
        %1976 = vmatpush1.bf16.msra.mxu0 0
        %1977 = vmatprep.subr.bf16.mxu0 0
        %1978 = vmatpush1.bf16.msra.mxu0 0
        %1979 = vmatprep.subr.bf16.mxu0 0
        %1980 = vmatpush1.bf16.msra.mxu0 0
        %1981 = vmatprep.subr.bf16.mxu0 0
        %1982 = vmatpush1.bf16.msra.mxu0 0
        %1983 = vmatprep.subr.bf16.mxu0 0
        %1984 = vmatpush1.bf16.msra.mxu0 0
        %1985 = vmatprep.subr.bf16.mxu0 0
        %1986 = vmatpush1.bf16.msra.mxu0 0
        %1987 = vmatprep.subr.bf16.mxu0 0
        %1988 = vmatpush1.bf16.msra.mxu0 0
        %1989 = vmatprep.subr.bf16.mxu0 0
        %1990 = vmatpush1.bf16.msra.mxu0 0
        %1991 = vmatprep.mubr.bf16.mxu0 0
        %1992 = vmatmul.mubr.bf16.gmra.mrb[0].mxu0 %v1954
        %v1993 = vpop.f32.mrb[0].mxu0
        %v1994 = vadd.f32 0.0, %v1993
        %v1995 = vpop.f32.mrb[0].mxu0
        %v1996 = vpop.f32.mrb[0].mxu0
        %v1997 = vpop.f32.mrb[0].mxu0
        %1998 = vdwg.mxu0
        %1999 = vrot.lane.b32.xlu0 %v1165, 80
        %v2000 = vpop.permute.xlu0 %1999
        %v2002 = vsel %vm1265, %v1950, 0
        %v2005 = vsel %vm1293, %v2000, 0
        %2007 = vmatprep.subr.bf16.mxu0 0
        %2008 = vmatpush1.bf16.msra.mxu0 %v2005
        %2009 = vmatprep.subr.bf16.mxu0 0
        %2010 = vmatpush1.bf16.msra.mxu0 0
        %2011 = vmatprep.subr.bf16.mxu0 0
        %2012 = vmatpush1.bf16.msra.mxu0 0
        %2013 = vmatprep.subr.bf16.mxu0 0
        %2014 = vmatpush1.bf16.msra.mxu0 0
        %2015 = vmatprep.subr.bf16.mxu0 0
        %2016 = vmatpush1.bf16.msra.mxu0 0
        %2017 = vmatprep.subr.bf16.mxu0 0
        %2018 = vmatpush1.bf16.msra.mxu0 0
        %2019 = vmatprep.subr.bf16.mxu0 0
        %2020 = vmatpush1.bf16.msra.mxu0 0
        %2021 = vmatprep.subr.bf16.mxu0 0
        %2022 = vmatpush1.bf16.msra.mxu0 0
        %2023 = vmatprep.subr.bf16.mxu0 0
        %2024 = vmatpush1.bf16.msra.mxu0 0
        %2025 = vmatprep.subr.bf16.mxu0 0
        %2026 = vmatpush1.bf16.msra.mxu0 0
        %2027 = vmatprep.subr.bf16.mxu0 0
        %2028 = vmatpush1.bf16.msra.mxu0 0
        %2029 = vmatprep.subr.bf16.mxu0 0
        %2030 = vmatpush1.bf16.msra.mxu0 0
        %2031 = vmatprep.subr.bf16.mxu0 0
        %2032 = vmatpush1.bf16.msra.mxu0 0
        %2033 = vmatprep.subr.bf16.mxu0 0
        %2034 = vmatpush1.bf16.msra.mxu0 0
        %2035 = vmatprep.subr.bf16.mxu0 0
        %2036 = vmatpush1.bf16.msra.mxu0 0
        %2037 = vmatprep.subr.bf16.mxu0 0
        %2038 = vmatpush1.bf16.msra.mxu0 0
        %2039 = vmatprep.mubr.bf16.mxu0 0
        %2040 = vmatmul.mubr.bf16.gmra.mrb[0].mxu0 %v2002
        %v2041 = vpop.f32.mrb[0].mxu0
        %v2042 = vadd.f32 0.0, %v2041
        %v2043 = vpop.f32.mrb[0].mxu0
        %v2044 = vpop.f32.mrb[0].mxu0
        %v2045 = vpop.f32.mrb[0].mxu0
        %2046 = vdwg.mxu0
        %2049 = vrot.lane.b32.xlu0 %v1553, 16
        %v2050 = vpop.permute.xlu0 %2049
        %2051 = vrot.lane.b32.xlu0 %v1602, 16
        %v2052 = vpop.permute.xlu0 %2051
        %2057 = vrot.lane.b32.xlu0 %v1774, 32
        %v2058 = vpop.permute.xlu0 %2057
        %2059 = vrot.lane.b32.xlu0 %v1822, 32
        %v2060 = vpop.permute.xlu0 %2059
        %2065 = vrot.lane.b32.xlu0 %v1994, 48
        %v2066 = vpop.permute.xlu0 %2065
        %2067 = vrot.lane.b32.xlu0 %v2042, 48
        %v2068 = vpop.permute.xlu0 %2067
        %v2071 = vsel %vm1169, %v1332, %v2050
        %v2072 = vsel %vm1169, %v1378, %v2052
        %vm2073 = vcmask 261120
        %v2074 = vsel %vm2073, %v2071, %v2058
        %v2075 = vsel %vm2073, %v2072, %v2060
        %vm2076 = vcmask 392192
        %v2077 = vsel %vm2076, %v2074, %v2066
        %v2078 = vsel %vm2076, %v2075, %v2068
        %v2079 = vld [vmem:[%s969] sm:$0xf]
        %v2080 = vld [vmem:[%s969 + $0x4] sm:$0xf]
        %v2081 = vld [vmem:[%s969 + $0x8] sm:$0xf]
        %v2082 = vld [vmem:[%s969 + $0xc] sm:$0xf]
        %v2083 = vld [vmem:[%s969 + $0x10] sm:$0xf]
        %v2084 = vld [vmem:[%s969 + $0x14] sm:$0xf]
        %v2085 = vld [vmem:[%s969 + $0x18] sm:$0xf]
        %v2086 = vld [vmem:[%s969 + $0x1c] sm:$0xf]
        %v2087 = vpack.c.bf16 %v2078, %v2077
        %v2088 = vld [vmem:[%s972] sm:$0x1]
        %v2090 = vlaneseq
        %v2091 = vshrl.u32 %v2090, 7
        %v2092 = vsub.s32 0, %v2091
        %v2093 = vrot.slane %v2088, %v2092
        %v2103 = vunpack.c.l.b16 %v2079
        %v2104 = vunpack.c.l.b16 %v2080
        %v2105 = vunpack.c.l.b16 %v2081
        %v2106 = vunpack.c.l.b16 %v2082
        %v2107 = vunpack.c.l.b16 %v2083
        %v2108 = vunpack.c.l.b16 %v2084
        %v2109 = vunpack.c.l.b16 %v2085
        %v2110 = vunpack.c.l.b16 %v2086
        %v2111 = vpack.c.b16 %v2104, %v2103
        %v2112 = vpack.c.b16 %v2106, %v2105
        %v2113 = vpack.c.b16 %v2108, %v2107
        %v2114 = vpack.c.b16 %v2110, %v2109
        %v2120 = vsel %vm1111, %v2087, 0
        %2122 = vmatprep.subr.bf16.mxu0 0
        %2123 = vmatpush1.bf16.msra.mxu0 %v2111
        %2124 = vmatprep.subr.bf16.mxu0 0
        %2125 = vmatpush1.bf16.msra.mxu0 %v2112
        %2126 = vmatprep.subr.bf16.mxu0 0
        %2127 = vmatpush1.bf16.msra.mxu0 %v2113
        %2128 = vmatprep.subr.bf16.mxu0 0
        %2129 = vmatpush1.bf16.msra.mxu0 %v2114
        %2130 = vmatprep.subr.bf16.mxu0 0
        %2131 = vmatpush1.bf16.msra.mxu0 0
        %2132 = vmatprep.subr.bf16.mxu0 0
        %2133 = vmatpush1.bf16.msra.mxu0 0
        %2134 = vmatprep.subr.bf16.mxu0 0
        %2135 = vmatpush1.bf16.msra.mxu0 0
        %2136 = vmatprep.subr.bf16.mxu0 0
        %2137 = vmatpush1.bf16.msra.mxu0 0
        %2138 = vmatprep.subr.bf16.mxu0 0
        %2139 = vmatpush1.bf16.msra.mxu0 0
        %2140 = vmatprep.subr.bf16.mxu0 0
        %2141 = vmatpush1.bf16.msra.mxu0 0
        %2142 = vmatprep.subr.bf16.mxu0 0
        %2143 = vmatpush1.bf16.msra.mxu0 0
        %2144 = vmatprep.subr.bf16.mxu0 0
        %2145 = vmatpush1.bf16.msra.mxu0 0
        %2146 = vmatprep.subr.bf16.mxu0 0
        %2147 = vmatpush1.bf16.msra.mxu0 0
        %2148 = vmatprep.subr.bf16.mxu0 0
        %2149 = vmatpush1.bf16.msra.mxu0 0
        %2150 = vmatprep.subr.bf16.mxu0 0
        %2151 = vmatpush1.bf16.msra.mxu0 0
        %2152 = vmatprep.subr.bf16.mxu0 0
        %2153 = vmatpush1.bf16.msra.mxu0 0
        %2154 = vmatprep.mubr.bf16.mxu0 0
        %2155 = vmatmul.mubr.bf16.gmra.mrb[0].mxu0 %v2120
        %v2156 = vpop.f32.mrb[0].mxu0
        %v2157 = vadd.f32 %v2093, %v2156
        %v2158 = vpop.f32.mrb[0].mxu0
        %v2159 = vpop.f32.mrb[0].mxu0
        %v2160 = vadd.f32 %v2093, %v2159
        %v2161 = vpop.f32.mrb[0].mxu0
        %2162 = vdwg.mxu0
        %v2163 = vadd.f32 %v2157, %v1044
        %v2164 = vadd.f32 %v2160, %v1045
        %v2165 = vsel %vm1111, %v2163, 0.0
        %2166 = vadd.xlane.f32.xlu0 %v2165
        %v2167 = vpop.xlane.xlu0 %2166
        %v2168 = vsel %vm1111, %v2164, 0.0
        %2169 = vadd.xlane.f32.xlu0 %v2168
        %v2170 = vpop.xlane.xlu0 %2169
        %v2171 = vrcp.pop 64.0
        %v2172 = vmul.f32 %v2167, %v2171
        %v2173 = vmul.f32 %v2170, %v2171
        %v2174 = vsub.f32 %v2163, %v2172
        %v2175 = vsub.f32 %v2164, %v2173
        %v2176 = vmul.f32 %v2174, %v2174
        %v2177 = vmul.f32 %v2175, %v2175
        %v2178 = vsel %vm1111, %v2176, 0.0
        %2179 = vadd.xlane.f32.xlu0 %v2178
        %v2180 = vpop.xlane.xlu0 %2179
        %v2181 = vsel %vm1111, %v2177, 0.0
        %2182 = vadd.xlane.f32.xlu0 %v2181
        %v2183 = vpop.xlane.xlu0 %2182
        %v2184 = vmul.f32 %v2180, %v2171
        %v2185 = vmul.f32 %v2183, %v2171
        %v2186 = vadd.f32 %v2184, 1e-05
        %v2187 = vadd.f32 %v2185, 1e-05
        %v2188 = vrsqrt.pop %v2186
        %v2189 = vrsqrt.pop %v2187
        %v2190 = vmul.f32 %v2174, %v2188
        %v2191 = vmul.f32 %v2175, %v2189
        %v2192 = vld [vmem:[%s975] sm:$0x1]
        %v2194 = vlaneseq
        %v2195 = vshrl.u32 %v2194, 7
        %v2196 = vsub.s32 0, %v2195
        %v2197 = vrot.slane %v2192, %v2196
        %v2199 = vmul.f32 %v2190, %v2197
        %v2200 = vmul.f32 %v2191, %v2197
        %v2201 = vld [vmem:[%s978] sm:$0x1]
        %v2203 = vlaneseq
        %v2204 = vshrl.u32 %v2203, 7
        %v2205 = vsub.s32 0, %v2204
        %v2206 = vrot.slane %v2201, %v2205
        %v2208 = vadd.f32 %v2199, %v2206
        %v2209 = vadd.f32 %v2200, %v2206
        %v2210 = vld [vmem:[%s983] sm:$0xf]
        %v2211 = vld [vmem:[%s983 + $0x4] sm:$0xf]
        %v2212 = vld [vmem:[%s983 + $0x8] sm:$0xf]
        %v2213 = vld [vmem:[%s983 + $0xc] sm:$0xf]
        %v2214 = vld [vmem:[%s983 + $0x10] sm:$0xf]
        %v2215 = vld [vmem:[%s983 + $0x14] sm:$0xf]
        %v2216 = vld [vmem:[%s983 + $0x18] sm:$0xf]
        %v2217 = vld [vmem:[%s983 + $0x1c] sm:$0xf]
        %v2218 = vpack.c.bf16 %v2209, %v2208
        %v2219 = vld [vmem:[%s986] sm:$0x1]
        %v2221 = vlaneseq
        %v2222 = vshrl.u32 %v2221, 7
        %v2223 = vsub.s32 0, %v2222
        %v2224 = vrot.slane %v2219, %v2223
        %v2234 = vunpack.c.l.b16 %v2210
        %v2235 = vunpack.c.l.b16 %v2211
        %v2236 = vunpack.c.l.b16 %v2212
        %v2237 = vunpack.c.l.b16 %v2213
        %v2238 = vunpack.c.l.b16 %v2214
        %v2239 = vunpack.c.l.b16 %v2215
        %v2240 = vunpack.c.l.b16 %v2216
        %v2241 = vunpack.c.l.b16 %v2217
        %v2242 = vpack.c.b16 %v2235, %v2234
        %v2243 = vpack.c.b16 %v2237, %v2236
        %v2244 = vpack.c.b16 %v2239, %v2238
        %v2245 = vpack.c.b16 %v2241, %v2240
        %v2251 = vsel %vm1111, %v2218, 0
        %2253 = vmatprep.subr.bf16.mxu0 0
        %2254 = vmatpush1.bf16.msra.mxu0 %v2242
        %2255 = vmatprep.subr.bf16.mxu0 0
        %2256 = vmatpush1.bf16.msra.mxu0 %v2243
        %2257 = vmatprep.subr.bf16.mxu0 0
        %2258 = vmatpush1.bf16.msra.mxu0 %v2244
        %2259 = vmatprep.subr.bf16.mxu0 0
        %2260 = vmatpush1.bf16.msra.mxu0 %v2245
        %2261 = vmatprep.subr.bf16.mxu0 0
        %2262 = vmatpush1.bf16.msra.mxu0 0
        %2263 = vmatprep.subr.bf16.mxu0 0
        %2264 = vmatpush1.bf16.msra.mxu0 0
        %2265 = vmatprep.subr.bf16.mxu0 0
        %2266 = vmatpush1.bf16.msra.mxu0 0
        %2267 = vmatprep.subr.bf16.mxu0 0
        %2268 = vmatpush1.bf16.msra.mxu0 0
        %2269 = vmatprep.subr.bf16.mxu0 0
        %2270 = vmatpush1.bf16.msra.mxu0 0
        %2271 = vmatprep.subr.bf16.mxu0 0
        %2272 = vmatpush1.bf16.msra.mxu0 0
        %2273 = vmatprep.subr.bf16.mxu0 0
        %2274 = vmatpush1.bf16.msra.mxu0 0
        %2275 = vmatprep.subr.bf16.mxu0 0
        %2276 = vmatpush1.bf16.msra.mxu0 0
        %2277 = vmatprep.subr.bf16.mxu0 0
        %2278 = vmatpush1.bf16.msra.mxu0 0
        %2279 = vmatprep.subr.bf16.mxu0 0
        %2280 = vmatpush1.bf16.msra.mxu0 0
        %2281 = vmatprep.subr.bf16.mxu0 0
        %2282 = vmatpush1.bf16.msra.mxu0 0
        %2283 = vmatprep.subr.bf16.mxu0 0
        %2284 = vmatpush1.bf16.msra.mxu0 0
        %2285 = vmatprep.mubr.bf16.mxu0 0
        %2286 = vmatmul.mubr.bf16.gmra.mrb[0].mxu0 %v2251
        %v2287 = vpop.f32.mrb[0].mxu0
        %v2288 = vadd.f32 %v2224, %v2287
        %v2289 = vpop.f32.mrb[0].mxu0
        %v2290 = vpop.f32.mrb[0].mxu0
        %v2291 = vadd.f32 %v2224, %v2290
        %v2292 = vpop.f32.mrb[0].mxu0
        %2293 = vdwg.mxu0
        %v2294 = vld [vmem:[%s991] sm:$0xf]
        %v2295 = vld [vmem:[%s991 + $0x4] sm:$0xf]
        %v2296 = vld [vmem:[%s991 + $0x8] sm:$0xf]
        %v2297 = vld [vmem:[%s991 + $0xc] sm:$0xf]
        %v2298 = vld [vmem:[%s991 + $0x10] sm:$0xf]
        %v2299 = vld [vmem:[%s991 + $0x14] sm:$0xf]
        %v2300 = vld [vmem:[%s991 + $0x18] sm:$0xf]
        %v2301 = vld [vmem:[%s991 + $0x1c] sm:$0xf]
        %v2302 = vld [vmem:[%s994] sm:$0x1]
        %v2304 = vlaneseq
        %v2305 = vshrl.u32 %v2304, 7
        %v2306 = vsub.s32 0, %v2305
        %v2307 = vrot.slane %v2302, %v2306
        %v2313 = vunpack.c.l.b16 %v1046
        %v2314 = vunpack.c.l.b16 %v1047
        %v2315 = vunpack.c.l.b16 %v1048
        %v2316 = vunpack.c.l.b16 %v1049
        %v2317 = vpack.c.b16 %v2314, %v2313
        %v2318 = vpack.c.b16 %v2316, %v2315
        %v2327 = vunpack.c.l.b16 %v2294
        %v2328 = vunpack.c.l.b16 %v2295
        %v2329 = vunpack.c.l.b16 %v2296
        %v2330 = vunpack.c.l.b16 %v2297
        %v2331 = vunpack.c.l.b16 %v2298
        %v2332 = vunpack.c.l.b16 %v2299
        %v2333 = vunpack.c.l.b16 %v2300
        %v2334 = vunpack.c.l.b16 %v2301
        %v2335 = vpack.c.b16 %v2328, %v2327
        %v2336 = vpack.c.b16 %v2330, %v2329
        %v2337 = vpack.c.b16 %v2332, %v2331
        %v2338 = vpack.c.b16 %v2334, %v2333
        %v2344 = vsel %vm1111, %v2317, 0
        %v2347 = vsel %vm1111, %v2318, 0
        %2349 = vmatprep.subr.bf16.mxu0 0
        %2350 = vmatpush1.bf16.msra.mxu0 %v2335
        %2351 = vmatprep.subr.bf16.mxu0 0
        %2352 = vmatpush1.bf16.msra.mxu0 %v2336
        %2353 = vmatprep.subr.bf16.mxu0 0
        %2354 = vmatpush1.bf16.msra.mxu0 %v2337
        %2355 = vmatprep.subr.bf16.mxu0 0
        %2356 = vmatpush1.bf16.msra.mxu0 %v2338
        %2357 = vmatprep.subr.bf16.mxu0 0
        %2358 = vmatpush1.bf16.msra.mxu0 0
        %2359 = vmatprep.subr.bf16.mxu0 0
        %2360 = vmatpush1.bf16.msra.mxu0 0
        %2361 = vmatprep.subr.bf16.mxu0 0
        %2362 = vmatpush1.bf16.msra.mxu0 0
        %2363 = vmatprep.subr.bf16.mxu0 0
        %2364 = vmatpush1.bf16.msra.mxu0 0
        %2365 = vmatprep.subr.bf16.mxu0 0
        %2366 = vmatpush1.bf16.msra.mxu0 0
        %2367 = vmatprep.subr.bf16.mxu0 0
        %2368 = vmatpush1.bf16.msra.mxu0 0
        %2369 = vmatprep.subr.bf16.mxu0 0
        %2370 = vmatpush1.bf16.msra.mxu0 0
        %2371 = vmatprep.subr.bf16.mxu0 0
        %2372 = vmatpush1.bf16.msra.mxu0 0
        %2373 = vmatprep.subr.bf16.mxu0 0
        %2374 = vmatpush1.bf16.msra.mxu0 0
        %2375 = vmatprep.subr.bf16.mxu0 0
        %2376 = vmatpush1.bf16.msra.mxu0 0
        %2377 = vmatprep.subr.bf16.mxu0 0
        %2378 = vmatpush1.bf16.msra.mxu0 0
        %2379 = vmatprep.subr.bf16.mxu0 0
        %2380 = vmatpush1.bf16.msra.mxu0 0
        %2381 = vmatprep.mubr.bf16.mxu0 0
        %2382 = vmatmul.mubr.bf16.gmra.mrb[0].mxu0 %v2344
        %v2383 = vpop.f32.mrb[0].mxu0
        %v2384 = vadd.f32 %v2307, %v2383
        %v2385 = vpop.f32.mrb[0].mxu0
        %v2386 = vpop.f32.mrb[0].mxu0
        %v2387 = vadd.f32 %v2307, %v2386
        %v2388 = vpop.f32.mrb[0].mxu0
        %2389 = vmatprep.mubr.bf16.mxu0 0
        %2390 = vmatmul.mubr.bf16.gmra.mrb[0].mxu0 %v2347
        %v2391 = vpop.f32.mrb[0].mxu0
        %v2392 = vadd.f32 %v2307, %v2391
        %v2393 = vpop.f32.mrb[0].mxu0
        %v2394 = vpop.f32.mrb[0].mxu0
        %v2395 = vadd.f32 %v2307, %v2394
        %v2396 = vpop.f32.mrb[0].mxu0
        %2397 = vdwg.mxu0
        %v2398 = vmul.f32 %v2288, 0.125
        %v2399 = vmul.f32 %v2291, 0.125
        %v2400 = vpack.c.bf16 %v2398, %v2398
        %v2401 = vpack.c.bf16 %v2399, %v2399
        %v2402 = vpack.c.bf16 %v2387, %v2384
        %v2403 = vpack.c.bf16 %v2395, %v2392
        %v2405 = vsel %vm1169, %v2400, 0
        %v2408 = vsel %vm1169, %v2402, 0
        %2410 = vmatprep.subr.bf16.mxu0 0
        %2411 = vmatpush1.bf16.xpose.msra.mxu0 %v2408
        %2412 = vmatprep.subr.bf16.mxu0 0
        %2413 = vmatpush1.bf16.xpose.msra.mxu0 0
        %2414 = vmatprep.subr.bf16.mxu0 0
        %2415 = vmatpush1.bf16.xpose.msra.mxu0 0
        %2416 = vmatprep.subr.bf16.mxu0 0
        %2417 = vmatpush1.bf16.xpose.msra.mxu0 0
        %2418 = vmatprep.subr.bf16.mxu0 0
        %2419 = vmatpush1.bf16.xpose.msra.mxu0 0
        %2420 = vmatprep.subr.bf16.mxu0 0
        %2421 = vmatpush1.bf16.xpose.msra.mxu0 0
        %2422 = vmatprep.subr.bf16.mxu0 0
        %2423 = vmatpush1.bf16.xpose.msra.mxu0 0
        %2424 = vmatprep.subr.bf16.mxu0 0
        %2425 = vmatpush1.bf16.xpose.msra.mxu0 0
        %2426 = vmatprep.subr.bf16.mxu0 0
        %2427 = vmatpush1.bf16.xpose.msra.mxu0 0
        %2428 = vmatprep.subr.bf16.mxu0 0
        %2429 = vmatpush1.bf16.xpose.msra.mxu0 0
        %2430 = vmatprep.subr.bf16.mxu0 0
        %2431 = vmatpush1.bf16.xpose.msra.mxu0 0
        %2432 = vmatprep.subr.bf16.mxu0 0
        %2433 = vmatpush1.bf16.xpose.msra.mxu0 0
        %2434 = vmatprep.subr.bf16.mxu0 0
        %2435 = vmatpush1.bf16.xpose.msra.mxu0 0
        %2436 = vmatprep.subr.bf16.mxu0 0
        %2437 = vmatpush1.bf16.xpose.msra.mxu0 0
        %2438 = vmatprep.subr.bf16.mxu0 0
        %2439 = vmatpush1.bf16.xpose.msra.mxu0 0
        %2440 = vmatprep.subr.bf16.mxu0 0
        %2441 = vmatpush1.bf16.xpose.msra.mxu0 0
        %2442 = vmatprep.mubr.bf16.mxu0 0
        %2443 = vmatmul.mubr.bf16.gmra.mrb[0].mxu0 %v2405
        %v2444 = vpop.f32.mrb[0].mxu0
        %v2445 = vadd.f32 0.0, %v2444
        %v2446 = vpop.f32.mrb[0].mxu0
        %v2447 = vpop.f32.mrb[0].mxu0
        %v2448 = vpop.f32.mrb[0].mxu0
        %2449 = vdwg.mxu0
        %v2451 = vsel %vm1169, %v2401, 0
        %v2454 = vsel %vm1169, %v2403, 0
        %2456 = vmatprep.subr.bf16.mxu0 0
        %2457 = vmatpush1.bf16.xpose.msra.mxu0 %v2454
        %2458 = vmatprep.subr.bf16.mxu0 0
        %2459 = vmatpush1.bf16.xpose.msra.mxu0 0
        %2460 = vmatprep.subr.bf16.mxu0 0
        %2461 = vmatpush1.bf16.xpose.msra.mxu0 0
        %2462 = vmatprep.subr.bf16.mxu0 0
        %2463 = vmatpush1.bf16.xpose.msra.mxu0 0
        %2464 = vmatprep.subr.bf16.mxu0 0
        %2465 = vmatpush1.bf16.xpose.msra.mxu0 0
        %2466 = vmatprep.subr.bf16.mxu0 0
        %2467 = vmatpush1.bf16.xpose.msra.mxu0 0
        %2468 = vmatprep.subr.bf16.mxu0 0
        %2469 = vmatpush1.bf16.xpose.msra.mxu0 0
        %2470 = vmatprep.subr.bf16.mxu0 0
        %2471 = vmatpush1.bf16.xpose.msra.mxu0 0
        %2472 = vmatprep.subr.bf16.mxu0 0
        %2473 = vmatpush1.bf16.xpose.msra.mxu0 0
        %2474 = vmatprep.subr.bf16.mxu0 0
        %2475 = vmatpush1.bf16.xpose.msra.mxu0 0
        %2476 = vmatprep.subr.bf16.mxu0 0
        %2477 = vmatpush1.bf16.xpose.msra.mxu0 0
        %2478 = vmatprep.subr.bf16.mxu0 0
        %2479 = vmatpush1.bf16.xpose.msra.mxu0 0
        %2480 = vmatprep.subr.bf16.mxu0 0
        %2481 = vmatpush1.bf16.xpose.msra.mxu0 0
        %2482 = vmatprep.subr.bf16.mxu0 0
        %2483 = vmatpush1.bf16.xpose.msra.mxu0 0
        %2484 = vmatprep.subr.bf16.mxu0 0
        %2485 = vmatpush1.bf16.xpose.msra.mxu0 0
        %2486 = vmatprep.subr.bf16.mxu0 0
        %2487 = vmatpush1.bf16.xpose.msra.mxu0 0
        %2488 = vmatprep.mubr.bf16.mxu0 0
        %2489 = vmatmul.mubr.bf16.gmra.mrb[0].mxu0 %v2451
        %v2490 = vpop.f32.mrb[0].mxu0
        %v2491 = vadd.f32 0.0, %v2490
        %v2492 = vpop.f32.mrb[0].mxu0
        %v2493 = vpop.f32.mrb[0].mxu0
        %v2494 = vpop.f32.mrb[0].mxu0
        %2495 = vdwg.mxu0
        %v2496 = vsel %vm1169, %v2445, -inf
        %2497 = vmax.xlane.f32.xlu0 %v2496
        %v2498 = vpop.xlane.xlu0 %2497
        %v2499 = vsel %vm1169, %v2491, -inf
        %2500 = vmax.xlane.f32.xlu0 %v2499
        %v2501 = vpop.xlane.xlu0 %2500
        %v2502 = vsub.f32 %v2445, %v2498
        %v2503 = vsub.f32 %v2491, %v2501
        %v2504 = vmul.f32 %v2502, 1.442695
        %v2505 = vpow.pop %v2504
        %v2506 = vmul.f32 %v2503, 1.442695
        %v2507 = vpow.pop %v2506
        %v2508 = vsel %vm1169, %v2505, 0.0
        %2509 = vadd.xlane.f32.xlu0 %v2508
        %v2510 = vpop.xlane.xlu0 %2509
        %v2511 = vsel %vm1169, %v2507, 0.0
        %2512 = vadd.xlane.f32.xlu0 %v2511
        %v2513 = vpop.xlane.xlu0 %2512
        %v2514 = vrcp.pop %v2510
        %v2515 = vrcp.pop %v2513
        %v2516 = vmul.f32 %v2505, %v2514
        %v2517 = vmul.f32 %v2507, %v2515
        %v2518 = vpack.c.bf16 %v2516, %v2516
        %v2519 = vpack.c.bf16 %v2517, %v2517
        %2521 = vrot.lane.b32.xlu0 %v2402, 64
        %v2522 = vpop.permute.xlu0 %2521
        %v2525 = vsel %vm1169, %v2518, 0
        %2527 = vmatprep.subr.bf16.mxu0 0
        %2528 = vmatpush1.bf16.msra.mxu0 %v2522
        %2529 = vmatprep.subr.bf16.mxu0 0
        %2530 = vmatpush1.bf16.msra.mxu0 0
        %2531 = vmatprep.subr.bf16.mxu0 0
        %2532 = vmatpush1.bf16.msra.mxu0 0
        %2533 = vmatprep.subr.bf16.mxu0 0
        %2534 = vmatpush1.bf16.msra.mxu0 0
        %2535 = vmatprep.subr.bf16.mxu0 0
        %2536 = vmatpush1.bf16.msra.mxu0 0
        %2537 = vmatprep.subr.bf16.mxu0 0
        %2538 = vmatpush1.bf16.msra.mxu0 0
        %2539 = vmatprep.subr.bf16.mxu0 0
        %2540 = vmatpush1.bf16.msra.mxu0 0
        %2541 = vmatprep.subr.bf16.mxu0 0
        %2542 = vmatpush1.bf16.msra.mxu0 0
        %2543 = vmatprep.subr.bf16.mxu0 0
        %2544 = vmatpush1.bf16.msra.mxu0 0
        %2545 = vmatprep.subr.bf16.mxu0 0
        %2546 = vmatpush1.bf16.msra.mxu0 0
        %2547 = vmatprep.subr.bf16.mxu0 0
        %2548 = vmatpush1.bf16.msra.mxu0 0
        %2549 = vmatprep.subr.bf16.mxu0 0
        %2550 = vmatpush1.bf16.msra.mxu0 0
        %2551 = vmatprep.subr.bf16.mxu0 0
        %2552 = vmatpush1.bf16.msra.mxu0 0
        %2553 = vmatprep.subr.bf16.mxu0 0
        %2554 = vmatpush1.bf16.msra.mxu0 0
        %2555 = vmatprep.subr.bf16.mxu0 0
        %2556 = vmatpush1.bf16.msra.mxu0 0
        %2557 = vmatprep.subr.bf16.mxu0 0
        %2558 = vmatpush1.bf16.msra.mxu0 0
        %2559 = vmatprep.mubr.bf16.mxu0 0
        %2560 = vmatmul.mubr.bf16.gmra.mrb[0].mxu0 %v2525
        %v2561 = vpop.f32.mrb[0].mxu0
        %v2562 = vadd.f32 0.0, %v2561
        %v2563 = vpop.f32.mrb[0].mxu0
        %v2564 = vpop.f32.mrb[0].mxu0
        %v2565 = vpop.f32.mrb[0].mxu0
        %2566 = vdwg.mxu0
        %2568 = vrot.lane.b32.xlu0 %v2403, 64
        %v2569 = vpop.permute.xlu0 %2568
        %v2572 = vsel %vm1169, %v2519, 0
        %2574 = vmatprep.subr.bf16.mxu0 0
        %2575 = vmatpush1.bf16.msra.mxu0 %v2569
        %2576 = vmatprep.subr.bf16.mxu0 0
        %2577 = vmatpush1.bf16.msra.mxu0 0
        %2578 = vmatprep.subr.bf16.mxu0 0
        %2579 = vmatpush1.bf16.msra.mxu0 0
        %2580 = vmatprep.subr.bf16.mxu0 0
        %2581 = vmatpush1.bf16.msra.mxu0 0
        %2582 = vmatprep.subr.bf16.mxu0 0
        %2583 = vmatpush1.bf16.msra.mxu0 0
        %2584 = vmatprep.subr.bf16.mxu0 0
        %2585 = vmatpush1.bf16.msra.mxu0 0
        %2586 = vmatprep.subr.bf16.mxu0 0
        %2587 = vmatpush1.bf16.msra.mxu0 0
        %2588 = vmatprep.subr.bf16.mxu0 0
        %2589 = vmatpush1.bf16.msra.mxu0 0
        %2590 = vmatprep.subr.bf16.mxu0 0
        %2591 = vmatpush1.bf16.msra.mxu0 0
        %2592 = vmatprep.subr.bf16.mxu0 0
        %2593 = vmatpush1.bf16.msra.mxu0 0
        %2594 = vmatprep.subr.bf16.mxu0 0
        %2595 = vmatpush1.bf16.msra.mxu0 0
        %2596 = vmatprep.subr.bf16.mxu0 0
        %2597 = vmatpush1.bf16.msra.mxu0 0
        %2598 = vmatprep.subr.bf16.mxu0 0
        %2599 = vmatpush1.bf16.msra.mxu0 0
        %2600 = vmatprep.subr.bf16.mxu0 0
        %2601 = vmatpush1.bf16.msra.mxu0 0
        %2602 = vmatprep.subr.bf16.mxu0 0
        %2603 = vmatpush1.bf16.msra.mxu0 0
        %2604 = vmatprep.subr.bf16.mxu0 0
        %2605 = vmatpush1.bf16.msra.mxu0 0
        %2606 = vmatprep.mubr.bf16.mxu0 0
        %2607 = vmatmul.mubr.bf16.gmra.mrb[0].mxu0 %v2572
        %v2608 = vpop.f32.mrb[0].mxu0
        %v2609 = vadd.f32 0.0, %v2608
        %v2610 = vpop.f32.mrb[0].mxu0
        %v2611 = vpop.f32.mrb[0].mxu0
        %v2612 = vpop.f32.mrb[0].mxu0
        %2613 = vdwg.mxu0
        %2615 = vrot.lane.b32.xlu0 %v2400, 112
        %v2616 = vpop.permute.xlu0 %2615
        %2617 = vrot.lane.b32.xlu0 %v2402, 112
        %v2618 = vpop.permute.xlu0 %2617
        %v2620 = vsel %vm1169, %v2616, 0
        %v2623 = vsel %vm1169, %v2618, 0
        %2625 = vmatprep.subr.bf16.mxu0 0
        %2626 = vmatpush1.bf16.xpose.msra.mxu0 %v2623
        %2627 = vmatprep.subr.bf16.mxu0 0
        %2628 = vmatpush1.bf16.xpose.msra.mxu0 0
        %2629 = vmatprep.subr.bf16.mxu0 0
        %2630 = vmatpush1.bf16.xpose.msra.mxu0 0
        %2631 = vmatprep.subr.bf16.mxu0 0
        %2632 = vmatpush1.bf16.xpose.msra.mxu0 0
        %2633 = vmatprep.subr.bf16.mxu0 0
        %2634 = vmatpush1.bf16.xpose.msra.mxu0 0
        %2635 = vmatprep.subr.bf16.mxu0 0
        %2636 = vmatpush1.bf16.xpose.msra.mxu0 0
        %2637 = vmatprep.subr.bf16.mxu0 0
        %2638 = vmatpush1.bf16.xpose.msra.mxu0 0
        %2639 = vmatprep.subr.bf16.mxu0 0
        %2640 = vmatpush1.bf16.xpose.msra.mxu0 0
        %2641 = vmatprep.subr.bf16.mxu0 0
        %2642 = vmatpush1.bf16.xpose.msra.mxu0 0
        %2643 = vmatprep.subr.bf16.mxu0 0
        %2644 = vmatpush1.bf16.xpose.msra.mxu0 0
        %2645 = vmatprep.subr.bf16.mxu0 0
        %2646 = vmatpush1.bf16.xpose.msra.mxu0 0
        %2647 = vmatprep.subr.bf16.mxu0 0
        %2648 = vmatpush1.bf16.xpose.msra.mxu0 0
        %2649 = vmatprep.subr.bf16.mxu0 0
        %2650 = vmatpush1.bf16.xpose.msra.mxu0 0
        %2651 = vmatprep.subr.bf16.mxu0 0
        %2652 = vmatpush1.bf16.xpose.msra.mxu0 0
        %2653 = vmatprep.subr.bf16.mxu0 0
        %2654 = vmatpush1.bf16.xpose.msra.mxu0 0
        %2655 = vmatprep.subr.bf16.mxu0 0
        %2656 = vmatpush1.bf16.xpose.msra.mxu0 0
        %2657 = vmatprep.mubr.bf16.mxu0 0
        %2658 = vmatmul.mubr.bf16.gmra.mrb[0].mxu0 %v2620
        %v2659 = vpop.f32.mrb[0].mxu0
        %v2660 = vadd.f32 0.0, %v2659
        %v2661 = vpop.f32.mrb[0].mxu0
        %v2662 = vpop.f32.mrb[0].mxu0
        %v2663 = vpop.f32.mrb[0].mxu0
        %2664 = vdwg.mxu0
        %2666 = vrot.lane.b32.xlu0 %v2401, 112
        %v2667 = vpop.permute.xlu0 %2666
        %2668 = vrot.lane.b32.xlu0 %v2403, 112
        %v2669 = vpop.permute.xlu0 %2668
        %v2671 = vsel %vm1169, %v2667, 0
        %v2674 = vsel %vm1169, %v2669, 0
        %2676 = vmatprep.subr.bf16.mxu0 0
        %2677 = vmatpush1.bf16.xpose.msra.mxu0 %v2674
        %2678 = vmatprep.subr.bf16.mxu0 0
        %2679 = vmatpush1.bf16.xpose.msra.mxu0 0
        %2680 = vmatprep.subr.bf16.mxu0 0
        %2681 = vmatpush1.bf16.xpose.msra.mxu0 0
        %2682 = vmatprep.subr.bf16.mxu0 0
        %2683 = vmatpush1.bf16.xpose.msra.mxu0 0
        %2684 = vmatprep.subr.bf16.mxu0 0
        %2685 = vmatpush1.bf16.xpose.msra.mxu0 0
        %2686 = vmatprep.subr.bf16.mxu0 0
        %2687 = vmatpush1.bf16.xpose.msra.mxu0 0
        %2688 = vmatprep.subr.bf16.mxu0 0
        %2689 = vmatpush1.bf16.xpose.msra.mxu0 0
        %2690 = vmatprep.subr.bf16.mxu0 0
        %2691 = vmatpush1.bf16.xpose.msra.mxu0 0
        %2692 = vmatprep.subr.bf16.mxu0 0
        %2693 = vmatpush1.bf16.xpose.msra.mxu0 0
        %2694 = vmatprep.subr.bf16.mxu0 0
        %2695 = vmatpush1.bf16.xpose.msra.mxu0 0
        %2696 = vmatprep.subr.bf16.mxu0 0
        %2697 = vmatpush1.bf16.xpose.msra.mxu0 0
        %2698 = vmatprep.subr.bf16.mxu0 0
        %2699 = vmatpush1.bf16.xpose.msra.mxu0 0
        %2700 = vmatprep.subr.bf16.mxu0 0
        %2701 = vmatpush1.bf16.xpose.msra.mxu0 0
        %2702 = vmatprep.subr.bf16.mxu0 0
        %2703 = vmatpush1.bf16.xpose.msra.mxu0 0
        %2704 = vmatprep.subr.bf16.mxu0 0
        %2705 = vmatpush1.bf16.xpose.msra.mxu0 0
        %2706 = vmatprep.subr.bf16.mxu0 0
        %2707 = vmatpush1.bf16.xpose.msra.mxu0 0
        %2708 = vmatprep.mubr.bf16.mxu0 0
        %2709 = vmatmul.mubr.bf16.gmra.mrb[0].mxu0 %v2671
        %v2710 = vpop.f32.mrb[0].mxu0
        %v2711 = vadd.f32 0.0, %v2710
        %v2712 = vpop.f32.mrb[0].mxu0
        %v2713 = vpop.f32.mrb[0].mxu0
        %v2714 = vpop.f32.mrb[0].mxu0
        %2715 = vdwg.mxu0
        %v2716 = vsel %vm1169, %v2660, -inf
        %2717 = vmax.xlane.f32.xlu0 %v2716
        %v2718 = vpop.xlane.xlu0 %2717
        %v2719 = vsel %vm1169, %v2711, -inf
        %2720 = vmax.xlane.f32.xlu0 %v2719
        %v2721 = vpop.xlane.xlu0 %2720
        %v2722 = vsub.f32 %v2660, %v2718
        %v2723 = vsub.f32 %v2711, %v2721
        %v2724 = vmul.f32 %v2722, 1.442695
        %v2725 = vpow.pop %v2724
        %v2726 = vmul.f32 %v2723, 1.442695
        %v2727 = vpow.pop %v2726
        %v2728 = vsel %vm1169, %v2725, 0.0
        %2729 = vadd.xlane.f32.xlu0 %v2728
        %v2730 = vpop.xlane.xlu0 %2729
        %v2731 = vsel %vm1169, %v2727, 0.0
        %2732 = vadd.xlane.f32.xlu0 %v2731
        %v2733 = vpop.xlane.xlu0 %2732
        %v2734 = vrcp.pop %v2730
        %v2735 = vrcp.pop %v2733
        %v2736 = vmul.f32 %v2725, %v2734
        %v2737 = vmul.f32 %v2727, %v2735
        %v2738 = vpack.c.bf16 %v2736, %v2736
        %v2739 = vpack.c.bf16 %v2737, %v2737
        %2740 = vrot.lane.b32.xlu0 %v2402, 48
        %v2741 = vpop.permute.xlu0 %2740
        %v2744 = vsel %vm1169, %v2738, 0
        %2746 = vmatprep.subr.bf16.mxu0 0
        %2747 = vmatpush1.bf16.msra.mxu0 %v2741
        %2748 = vmatprep.subr.bf16.mxu0 0
        %2749 = vmatpush1.bf16.msra.mxu0 0
        %2750 = vmatprep.subr.bf16.mxu0 0
        %2751 = vmatpush1.bf16.msra.mxu0 0
        %2752 = vmatprep.subr.bf16.mxu0 0
        %2753 = vmatpush1.bf16.msra.mxu0 0
        %2754 = vmatprep.subr.bf16.mxu0 0
        %2755 = vmatpush1.bf16.msra.mxu0 0
        %2756 = vmatprep.subr.bf16.mxu0 0
        %2757 = vmatpush1.bf16.msra.mxu0 0
        %2758 = vmatprep.subr.bf16.mxu0 0
        %2759 = vmatpush1.bf16.msra.mxu0 0
        %2760 = vmatprep.subr.bf16.mxu0 0
        %2761 = vmatpush1.bf16.msra.mxu0 0
        %2762 = vmatprep.subr.bf16.mxu0 0
        %2763 = vmatpush1.bf16.msra.mxu0 0
        %2764 = vmatprep.subr.bf16.mxu0 0
        %2765 = vmatpush1.bf16.msra.mxu0 0
        %2766 = vmatprep.subr.bf16.mxu0 0
        %2767 = vmatpush1.bf16.msra.mxu0 0
        %2768 = vmatprep.subr.bf16.mxu0 0
        %2769 = vmatpush1.bf16.msra.mxu0 0
        %2770 = vmatprep.subr.bf16.mxu0 0
        %2771 = vmatpush1.bf16.msra.mxu0 0
        %2772 = vmatprep.subr.bf16.mxu0 0
        %2773 = vmatpush1.bf16.msra.mxu0 0
        %2774 = vmatprep.subr.bf16.mxu0 0
        %2775 = vmatpush1.bf16.msra.mxu0 0
        %2776 = vmatprep.subr.bf16.mxu0 0
        %2777 = vmatpush1.bf16.msra.mxu0 0
        %2778 = vmatprep.mubr.bf16.mxu0 0
        %2779 = vmatmul.mubr.bf16.gmra.mrb[0].mxu0 %v2744
        %v2780 = vpop.f32.mrb[0].mxu0
        %v2781 = vadd.f32 0.0, %v2780
        %v2782 = vpop.f32.mrb[0].mxu0
        %v2783 = vpop.f32.mrb[0].mxu0
        %v2784 = vpop.f32.mrb[0].mxu0
        %2785 = vdwg.mxu0
        %2786 = vrot.lane.b32.xlu0 %v2403, 48
        %v2787 = vpop.permute.xlu0 %2786
        %v2790 = vsel %vm1169, %v2739, 0
        %2792 = vmatprep.subr.bf16.mxu0 0
        %2793 = vmatpush1.bf16.msra.mxu0 %v2787
        %2794 = vmatprep.subr.bf16.mxu0 0
        %2795 = vmatpush1.bf16.msra.mxu0 0
        %2796 = vmatprep.subr.bf16.mxu0 0
        %2797 = vmatpush1.bf16.msra.mxu0 0
        %2798 = vmatprep.subr.bf16.mxu0 0
        %2799 = vmatpush1.bf16.msra.mxu0 0
        %2800 = vmatprep.subr.bf16.mxu0 0
        %2801 = vmatpush1.bf16.msra.mxu0 0
        %2802 = vmatprep.subr.bf16.mxu0 0
        %2803 = vmatpush1.bf16.msra.mxu0 0
        %2804 = vmatprep.subr.bf16.mxu0 0
        %2805 = vmatpush1.bf16.msra.mxu0 0
        %2806 = vmatprep.subr.bf16.mxu0 0
        %2807 = vmatpush1.bf16.msra.mxu0 0
        %2808 = vmatprep.subr.bf16.mxu0 0
        %2809 = vmatpush1.bf16.msra.mxu0 0
        %2810 = vmatprep.subr.bf16.mxu0 0
        %2811 = vmatpush1.bf16.msra.mxu0 0
        %2812 = vmatprep.subr.bf16.mxu0 0
        %2813 = vmatpush1.bf16.msra.mxu0 0
        %2814 = vmatprep.subr.bf16.mxu0 0
        %2815 = vmatpush1.bf16.msra.mxu0 0
        %2816 = vmatprep.subr.bf16.mxu0 0
        %2817 = vmatpush1.bf16.msra.mxu0 0
        %2818 = vmatprep.subr.bf16.mxu0 0
        %2819 = vmatpush1.bf16.msra.mxu0 0
        %2820 = vmatprep.subr.bf16.mxu0 0
        %2821 = vmatpush1.bf16.msra.mxu0 0
        %2822 = vmatprep.subr.bf16.mxu0 0
        %2823 = vmatpush1.bf16.msra.mxu0 0
        %2824 = vmatprep.mubr.bf16.mxu0 0
        %2825 = vmatmul.mubr.bf16.gmra.mrb[0].mxu0 %v2790
        %v2826 = vpop.f32.mrb[0].mxu0
        %v2827 = vadd.f32 0.0, %v2826
        %v2828 = vpop.f32.mrb[0].mxu0
        %v2829 = vpop.f32.mrb[0].mxu0
        %v2830 = vpop.f32.mrb[0].mxu0
        %2831 = vdwg.mxu0
        %2832 = vrot.lane.b32.xlu0 %v2400, 96
        %v2833 = vpop.permute.xlu0 %2832
        %2834 = vrot.lane.b32.xlu0 %v2402, 96
        %v2835 = vpop.permute.xlu0 %2834
        %v2837 = vsel %vm1169, %v2833, 0
        %v2840 = vsel %vm1169, %v2835, 0
        %2842 = vmatprep.subr.bf16.mxu0 0
        %2843 = vmatpush1.bf16.xpose.msra.mxu0 %v2840
        %2844 = vmatprep.subr.bf16.mxu0 0
        %2845 = vmatpush1.bf16.xpose.msra.mxu0 0
        %2846 = vmatprep.subr.bf16.mxu0 0
        %2847 = vmatpush1.bf16.xpose.msra.mxu0 0
        %2848 = vmatprep.subr.bf16.mxu0 0
        %2849 = vmatpush1.bf16.xpose.msra.mxu0 0
        %2850 = vmatprep.subr.bf16.mxu0 0
        %2851 = vmatpush1.bf16.xpose.msra.mxu0 0
        %2852 = vmatprep.subr.bf16.mxu0 0
        %2853 = vmatpush1.bf16.xpose.msra.mxu0 0
        %2854 = vmatprep.subr.bf16.mxu0 0
        %2855 = vmatpush1.bf16.xpose.msra.mxu0 0
        %2856 = vmatprep.subr.bf16.mxu0 0
        %2857 = vmatpush1.bf16.xpose.msra.mxu0 0
        %2858 = vmatprep.subr.bf16.mxu0 0
        %2859 = vmatpush1.bf16.xpose.msra.mxu0 0
        %2860 = vmatprep.subr.bf16.mxu0 0
        %2861 = vmatpush1.bf16.xpose.msra.mxu0 0
        %2862 = vmatprep.subr.bf16.mxu0 0
        %2863 = vmatpush1.bf16.xpose.msra.mxu0 0
        %2864 = vmatprep.subr.bf16.mxu0 0
        %2865 = vmatpush1.bf16.xpose.msra.mxu0 0
        %2866 = vmatprep.subr.bf16.mxu0 0
        %2867 = vmatpush1.bf16.xpose.msra.mxu0 0
        %2868 = vmatprep.subr.bf16.mxu0 0
        %2869 = vmatpush1.bf16.xpose.msra.mxu0 0
        %2870 = vmatprep.subr.bf16.mxu0 0
        %2871 = vmatpush1.bf16.xpose.msra.mxu0 0
        %2872 = vmatprep.subr.bf16.mxu0 0
        %2873 = vmatpush1.bf16.xpose.msra.mxu0 0
        %2874 = vmatprep.mubr.bf16.mxu0 0
        %2875 = vmatmul.mubr.bf16.gmra.mrb[0].mxu0 %v2837
        %v2876 = vpop.f32.mrb[0].mxu0
        %v2877 = vadd.f32 0.0, %v2876
        %v2878 = vpop.f32.mrb[0].mxu0
        %v2879 = vpop.f32.mrb[0].mxu0
        %v2880 = vpop.f32.mrb[0].mxu0
        %2881 = vdwg.mxu0
        %2882 = vrot.lane.b32.xlu0 %v2401, 96
        %v2883 = vpop.permute.xlu0 %2882
        %2884 = vrot.lane.b32.xlu0 %v2403, 96
        %v2885 = vpop.permute.xlu0 %2884
        %v2887 = vsel %vm1169, %v2883, 0
        %v2890 = vsel %vm1169, %v2885, 0
        %2892 = vmatprep.subr.bf16.mxu0 0
        %2893 = vmatpush1.bf16.xpose.msra.mxu0 %v2890
        %2894 = vmatprep.subr.bf16.mxu0 0
        %2895 = vmatpush1.bf16.xpose.msra.mxu0 0
        %2896 = vmatprep.subr.bf16.mxu0 0
        %2897 = vmatpush1.bf16.xpose.msra.mxu0 0
        %2898 = vmatprep.subr.bf16.mxu0 0
        %2899 = vmatpush1.bf16.xpose.msra.mxu0 0
        %2900 = vmatprep.subr.bf16.mxu0 0
        %2901 = vmatpush1.bf16.xpose.msra.mxu0 0
        %2902 = vmatprep.subr.bf16.mxu0 0
        %2903 = vmatpush1.bf16.xpose.msra.mxu0 0
        %2904 = vmatprep.subr.bf16.mxu0 0
        %2905 = vmatpush1.bf16.xpose.msra.mxu0 0
        %2906 = vmatprep.subr.bf16.mxu0 0
        %2907 = vmatpush1.bf16.xpose.msra.mxu0 0
        %2908 = vmatprep.subr.bf16.mxu0 0
        %2909 = vmatpush1.bf16.xpose.msra.mxu0 0
        %2910 = vmatprep.subr.bf16.mxu0 0
        %2911 = vmatpush1.bf16.xpose.msra.mxu0 0
        %2912 = vmatprep.subr.bf16.mxu0 0
        %2913 = vmatpush1.bf16.xpose.msra.mxu0 0
        %2914 = vmatprep.subr.bf16.mxu0 0
        %2915 = vmatpush1.bf16.xpose.msra.mxu0 0
        %2916 = vmatprep.subr.bf16.mxu0 0
        %2917 = vmatpush1.bf16.xpose.msra.mxu0 0
        %2918 = vmatprep.subr.bf16.mxu0 0
        %2919 = vmatpush1.bf16.xpose.msra.mxu0 0
        %2920 = vmatprep.subr.bf16.mxu0 0
        %2921 = vmatpush1.bf16.xpose.msra.mxu0 0
        %2922 = vmatprep.subr.bf16.mxu0 0
        %2923 = vmatpush1.bf16.xpose.msra.mxu0 0
        %2924 = vmatprep.mubr.bf16.mxu0 0
        %2925 = vmatmul.mubr.bf16.gmra.mrb[0].mxu0 %v2887
        %v2926 = vpop.f32.mrb[0].mxu0
        %v2927 = vadd.f32 0.0, %v2926
        %v2928 = vpop.f32.mrb[0].mxu0
        %v2929 = vpop.f32.mrb[0].mxu0
        %v2930 = vpop.f32.mrb[0].mxu0
        %2931 = vdwg.mxu0
        %v2932 = vsel %vm1169, %v2877, -inf
        %2933 = vmax.xlane.f32.xlu0 %v2932
        %v2934 = vpop.xlane.xlu0 %2933
        %v2935 = vsel %vm1169, %v2927, -inf
        %2936 = vmax.xlane.f32.xlu0 %v2935
        %v2937 = vpop.xlane.xlu0 %2936
        %v2938 = vsub.f32 %v2877, %v2934
        %v2939 = vsub.f32 %v2927, %v2937
        %v2940 = vmul.f32 %v2938, 1.442695
        %v2941 = vpow.pop %v2940
        %v2942 = vmul.f32 %v2939, 1.442695
        %v2943 = vpow.pop %v2942
        %v2944 = vsel %vm1169, %v2941, 0.0
        %2945 = vadd.xlane.f32.xlu0 %v2944
        %v2946 = vpop.xlane.xlu0 %2945
        %v2947 = vsel %vm1169, %v2943, 0.0
        %2948 = vadd.xlane.f32.xlu0 %v2947
        %v2949 = vpop.xlane.xlu0 %2948
        %v2950 = vrcp.pop %v2946
        %v2951 = vrcp.pop %v2949
        %v2952 = vmul.f32 %v2941, %v2950
        %v2953 = vmul.f32 %v2943, %v2951
        %v2954 = vpack.c.bf16 %v2952, %v2952
        %v2955 = vpack.c.bf16 %v2953, %v2953
        %2956 = vrot.lane.b32.xlu0 %v2402, 32
        %v2957 = vpop.permute.xlu0 %2956
        %v2960 = vsel %vm1169, %v2954, 0
        %2962 = vmatprep.subr.bf16.mxu0 0
        %2963 = vmatpush1.bf16.msra.mxu0 %v2957
        %2964 = vmatprep.subr.bf16.mxu0 0
        %2965 = vmatpush1.bf16.msra.mxu0 0
        %2966 = vmatprep.subr.bf16.mxu0 0
        %2967 = vmatpush1.bf16.msra.mxu0 0
        %2968 = vmatprep.subr.bf16.mxu0 0
        %2969 = vmatpush1.bf16.msra.mxu0 0
        %2970 = vmatprep.subr.bf16.mxu0 0
        %2971 = vmatpush1.bf16.msra.mxu0 0
        %2972 = vmatprep.subr.bf16.mxu0 0
        %2973 = vmatpush1.bf16.msra.mxu0 0
        %2974 = vmatprep.subr.bf16.mxu0 0
        %2975 = vmatpush1.bf16.msra.mxu0 0
        %2976 = vmatprep.subr.bf16.mxu0 0
        %2977 = vmatpush1.bf16.msra.mxu0 0
        %2978 = vmatprep.subr.bf16.mxu0 0
        %2979 = vmatpush1.bf16.msra.mxu0 0
        %2980 = vmatprep.subr.bf16.mxu0 0
        %2981 = vmatpush1.bf16.msra.mxu0 0
        %2982 = vmatprep.subr.bf16.mxu0 0
        %2983 = vmatpush1.bf16.msra.mxu0 0
        %2984 = vmatprep.subr.bf16.mxu0 0
        %2985 = vmatpush1.bf16.msra.mxu0 0
        %2986 = vmatprep.subr.bf16.mxu0 0
        %2987 = vmatpush1.bf16.msra.mxu0 0
        %2988 = vmatprep.subr.bf16.mxu0 0
        %2989 = vmatpush1.bf16.msra.mxu0 0
        %2990 = vmatprep.subr.bf16.mxu0 0
        %2991 = vmatpush1.bf16.msra.mxu0 0
        %2992 = vmatprep.subr.bf16.mxu0 0
        %2993 = vmatpush1.bf16.msra.mxu0 0
        %2994 = vmatprep.mubr.bf16.mxu0 0
        %2995 = vmatmul.mubr.bf16.gmra.mrb[0].mxu0 %v2960
        %v2996 = vpop.f32.mrb[0].mxu0
        %v2997 = vadd.f32 0.0, %v2996
        %v2998 = vpop.f32.mrb[0].mxu0
        %v2999 = vpop.f32.mrb[0].mxu0
        %v3000 = vpop.f32.mrb[0].mxu0
        %3001 = vdwg.mxu0
        %3002 = vrot.lane.b32.xlu0 %v2403, 32
        %v3003 = vpop.permute.xlu0 %3002
        %v3006 = vsel %vm1169, %v2955, 0
        %3008 = vmatprep.subr.bf16.mxu0 0
        %3009 = vmatpush1.bf16.msra.mxu0 %v3003
        %3010 = vmatprep.subr.bf16.mxu0 0
        %3011 = vmatpush1.bf16.msra.mxu0 0
        %3012 = vmatprep.subr.bf16.mxu0 0
        %3013 = vmatpush1.bf16.msra.mxu0 0
        %3014 = vmatprep.subr.bf16.mxu0 0
        %3015 = vmatpush1.bf16.msra.mxu0 0
        %3016 = vmatprep.subr.bf16.mxu0 0
        %3017 = vmatpush1.bf16.msra.mxu0 0
        %3018 = vmatprep.subr.bf16.mxu0 0
        %3019 = vmatpush1.bf16.msra.mxu0 0
        %3020 = vmatprep.subr.bf16.mxu0 0
        %3021 = vmatpush1.bf16.msra.mxu0 0
        %3022 = vmatprep.subr.bf16.mxu0 0
        %3023 = vmatpush1.bf16.msra.mxu0 0
        %3024 = vmatprep.subr.bf16.mxu0 0
        %3025 = vmatpush1.bf16.msra.mxu0 0
        %3026 = vmatprep.subr.bf16.mxu0 0
        %3027 = vmatpush1.bf16.msra.mxu0 0
        %3028 = vmatprep.subr.bf16.mxu0 0
        %3029 = vmatpush1.bf16.msra.mxu0 0
        %3030 = vmatprep.subr.bf16.mxu0 0
        %3031 = vmatpush1.bf16.msra.mxu0 0
        %3032 = vmatprep.subr.bf16.mxu0 0
        %3033 = vmatpush1.bf16.msra.mxu0 0
        %3034 = vmatprep.subr.bf16.mxu0 0
        %3035 = vmatpush1.bf16.msra.mxu0 0
        %3036 = vmatprep.subr.bf16.mxu0 0
        %3037 = vmatpush1.bf16.msra.mxu0 0
        %3038 = vmatprep.subr.bf16.mxu0 0
        %3039 = vmatpush1.bf16.msra.mxu0 0
        %3040 = vmatprep.mubr.bf16.mxu0 0
        %3041 = vmatmul.mubr.bf16.gmra.mrb[0].mxu0 %v3006
        %v3042 = vpop.f32.mrb[0].mxu0
        %v3043 = vadd.f32 0.0, %v3042
        %v3044 = vpop.f32.mrb[0].mxu0
        %v3045 = vpop.f32.mrb[0].mxu0
        %v3046 = vpop.f32.mrb[0].mxu0
        %3047 = vdwg.mxu0
        %3048 = vrot.lane.b32.xlu0 %v2400, 80
        %v3049 = vpop.permute.xlu0 %3048
        %3050 = vrot.lane.b32.xlu0 %v2402, 80
        %v3051 = vpop.permute.xlu0 %3050
        %v3053 = vsel %vm1169, %v3049, 0
        %v3056 = vsel %vm1169, %v3051, 0
        %3058 = vmatprep.subr.bf16.mxu0 0
        %3059 = vmatpush1.bf16.xpose.msra.mxu0 %v3056
        %3060 = vmatprep.subr.bf16.mxu0 0
        %3061 = vmatpush1.bf16.xpose.msra.mxu0 0
        %3062 = vmatprep.subr.bf16.mxu0 0
        %3063 = vmatpush1.bf16.xpose.msra.mxu0 0
        %3064 = vmatprep.subr.bf16.mxu0 0
        %3065 = vmatpush1.bf16.xpose.msra.mxu0 0
        %3066 = vmatprep.subr.bf16.mxu0 0
        %3067 = vmatpush1.bf16.xpose.msra.mxu0 0
        %3068 = vmatprep.subr.bf16.mxu0 0
        %3069 = vmatpush1.bf16.xpose.msra.mxu0 0
        %3070 = vmatprep.subr.bf16.mxu0 0
        %3071 = vmatpush1.bf16.xpose.msra.mxu0 0
        %3072 = vmatprep.subr.bf16.mxu0 0
        %3073 = vmatpush1.bf16.xpose.msra.mxu0 0
        %3074 = vmatprep.subr.bf16.mxu0 0
        %3075 = vmatpush1.bf16.xpose.msra.mxu0 0
        %3076 = vmatprep.subr.bf16.mxu0 0
        %3077 = vmatpush1.bf16.xpose.msra.mxu0 0
        %3078 = vmatprep.subr.bf16.mxu0 0
        %3079 = vmatpush1.bf16.xpose.msra.mxu0 0
        %3080 = vmatprep.subr.bf16.mxu0 0
        %3081 = vmatpush1.bf16.xpose.msra.mxu0 0
        %3082 = vmatprep.subr.bf16.mxu0 0
        %3083 = vmatpush1.bf16.xpose.msra.mxu0 0
        %3084 = vmatprep.subr.bf16.mxu0 0
        %3085 = vmatpush1.bf16.xpose.msra.mxu0 0
        %3086 = vmatprep.subr.bf16.mxu0 0
        %3087 = vmatpush1.bf16.xpose.msra.mxu0 0
        %3088 = vmatprep.subr.bf16.mxu0 0
        %3089 = vmatpush1.bf16.xpose.msra.mxu0 0
        %3090 = vmatprep.mubr.bf16.mxu0 0
        %3091 = vmatmul.mubr.bf16.gmra.mrb[0].mxu0 %v3053
        %v3092 = vpop.f32.mrb[0].mxu0
        %v3093 = vadd.f32 0.0, %v3092
        %v3094 = vpop.f32.mrb[0].mxu0
        %v3095 = vpop.f32.mrb[0].mxu0
        %v3096 = vpop.f32.mrb[0].mxu0
        %3097 = vdwg.mxu0
        %3098 = vrot.lane.b32.xlu0 %v2401, 80
        %v3099 = vpop.permute.xlu0 %3098
        %3100 = vrot.lane.b32.xlu0 %v2403, 80
        %v3101 = vpop.permute.xlu0 %3100
        %v3103 = vsel %vm1169, %v3099, 0
        %v3106 = vsel %vm1169, %v3101, 0
        %3108 = vmatprep.subr.bf16.mxu0 0
        %3109 = vmatpush1.bf16.xpose.msra.mxu0 %v3106
        %3110 = vmatprep.subr.bf16.mxu0 0
        %3111 = vmatpush1.bf16.xpose.msra.mxu0 0
        %3112 = vmatprep.subr.bf16.mxu0 0
        %3113 = vmatpush1.bf16.xpose.msra.mxu0 0
        %3114 = vmatprep.subr.bf16.mxu0 0
        %3115 = vmatpush1.bf16.xpose.msra.mxu0 0
        %3116 = vmatprep.subr.bf16.mxu0 0
        %3117 = vmatpush1.bf16.xpose.msra.mxu0 0
        %3118 = vmatprep.subr.bf16.mxu0 0
        %3119 = vmatpush1.bf16.xpose.msra.mxu0 0
        %3120 = vmatprep.subr.bf16.mxu0 0
        %3121 = vmatpush1.bf16.xpose.msra.mxu0 0
        %3122 = vmatprep.subr.bf16.mxu0 0
        %3123 = vmatpush1.bf16.xpose.msra.mxu0 0
        %3124 = vmatprep.subr.bf16.mxu0 0
        %3125 = vmatpush1.bf16.xpose.msra.mxu0 0
        %3126 = vmatprep.subr.bf16.mxu0 0
        %3127 = vmatpush1.bf16.xpose.msra.mxu0 0
        %3128 = vmatprep.subr.bf16.mxu0 0
        %3129 = vmatpush1.bf16.xpose.msra.mxu0 0
        %3130 = vmatprep.subr.bf16.mxu0 0
        %3131 = vmatpush1.bf16.xpose.msra.mxu0 0
        %3132 = vmatprep.subr.bf16.mxu0 0
        %3133 = vmatpush1.bf16.xpose.msra.mxu0 0
        %3134 = vmatprep.subr.bf16.mxu0 0
        %3135 = vmatpush1.bf16.xpose.msra.mxu0 0
        %3136 = vmatprep.subr.bf16.mxu0 0
        %3137 = vmatpush1.bf16.xpose.msra.mxu0 0
        %3138 = vmatprep.subr.bf16.mxu0 0
        %3139 = vmatpush1.bf16.xpose.msra.mxu0 0
        %3140 = vmatprep.mubr.bf16.mxu0 0
        %3141 = vmatmul.mubr.bf16.gmra.mrb[0].mxu0 %v3103
        %v3142 = vpop.f32.mrb[0].mxu0
        %v3143 = vadd.f32 0.0, %v3142
        %v3144 = vpop.f32.mrb[0].mxu0
        %v3145 = vpop.f32.mrb[0].mxu0
        %v3146 = vpop.f32.mrb[0].mxu0
        %3147 = vdwg.mxu0
        %v3148 = vsel %vm1169, %v3093, -inf
        %3149 = vmax.xlane.f32.xlu0 %v3148
        %v3150 = vpop.xlane.xlu0 %3149
        %v3151 = vsel %vm1169, %v3143, -inf
        %3152 = vmax.xlane.f32.xlu0 %v3151
        %v3153 = vpop.xlane.xlu0 %3152
        %v3154 = vsub.f32 %v3093, %v3150
        %v3155 = vsub.f32 %v3143, %v3153
        %v3156 = vmul.f32 %v3154, 1.442695
        %v3157 = vpow.pop %v3156
        %v3158 = vmul.f32 %v3155, 1.442695
        %v3159 = vpow.pop %v3158
        %v3160 = vsel %vm1169, %v3157, 0.0
        %3161 = vadd.xlane.f32.xlu0 %v3160
        %v3162 = vpop.xlane.xlu0 %3161
        %v3163 = vsel %vm1169, %v3159, 0.0
        %3164 = vadd.xlane.f32.xlu0 %v3163
        %v3165 = vpop.xlane.xlu0 %3164
        %v3166 = vrcp.pop %v3162
        %v3167 = vrcp.pop %v3165
        %v3168 = vmul.f32 %v3157, %v3166
        %v3169 = vmul.f32 %v3159, %v3167
        %v3170 = vpack.c.bf16 %v3168, %v3168
        %v3171 = vpack.c.bf16 %v3169, %v3169
        %3172 = vrot.lane.b32.xlu0 %v2402, 16
        %v3173 = vpop.permute.xlu0 %3172
        %v3176 = vsel %vm1169, %v3170, 0
        %3178 = vmatprep.subr.bf16.mxu0 0
        %3179 = vmatpush1.bf16.msra.mxu0 %v3173
        %3180 = vmatprep.subr.bf16.mxu0 0
        %3181 = vmatpush1.bf16.msra.mxu0 0
        %3182 = vmatprep.subr.bf16.mxu0 0
        %3183 = vmatpush1.bf16.msra.mxu0 0
        %3184 = vmatprep.subr.bf16.mxu0 0
        %3185 = vmatpush1.bf16.msra.mxu0 0
        %3186 = vmatprep.subr.bf16.mxu0 0
        %3187 = vmatpush1.bf16.msra.mxu0 0
        %3188 = vmatprep.subr.bf16.mxu0 0
        %3189 = vmatpush1.bf16.msra.mxu0 0
        %3190 = vmatprep.subr.bf16.mxu0 0
        %3191 = vmatpush1.bf16.msra.mxu0 0
        %3192 = vmatprep.subr.bf16.mxu0 0
        %3193 = vmatpush1.bf16.msra.mxu0 0
        %3194 = vmatprep.subr.bf16.mxu0 0
        %3195 = vmatpush1.bf16.msra.mxu0 0
        %3196 = vmatprep.subr.bf16.mxu0 0
        %3197 = vmatpush1.bf16.msra.mxu0 0
        %3198 = vmatprep.subr.bf16.mxu0 0
        %3199 = vmatpush1.bf16.msra.mxu0 0
        %3200 = vmatprep.subr.bf16.mxu0 0
        %3201 = vmatpush1.bf16.msra.mxu0 0
        %3202 = vmatprep.subr.bf16.mxu0 0
        %3203 = vmatpush1.bf16.msra.mxu0 0
        %3204 = vmatprep.subr.bf16.mxu0 0
        %3205 = vmatpush1.bf16.msra.mxu0 0
        %3206 = vmatprep.subr.bf16.mxu0 0
        %3207 = vmatpush1.bf16.msra.mxu0 0
        %3208 = vmatprep.subr.bf16.mxu0 0
        %3209 = vmatpush1.bf16.msra.mxu0 0
        %3210 = vmatprep.mubr.bf16.mxu0 0
        %3211 = vmatmul.mubr.bf16.gmra.mrb[0].mxu0 %v3176
        %v3212 = vpop.f32.mrb[0].mxu0
        %v3213 = vadd.f32 0.0, %v3212
        %v3214 = vpop.f32.mrb[0].mxu0
        %v3215 = vpop.f32.mrb[0].mxu0
        %v3216 = vpop.f32.mrb[0].mxu0
        %3217 = vdwg.mxu0
        %3218 = vrot.lane.b32.xlu0 %v2403, 16
        %v3219 = vpop.permute.xlu0 %3218
        %v3222 = vsel %vm1169, %v3171, 0
        %3224 = vmatprep.subr.bf16.mxu0 0
        %3225 = vmatpush1.bf16.msra.mxu0 %v3219
        %3226 = vmatprep.subr.bf16.mxu0 0
        %3227 = vmatpush1.bf16.msra.mxu0 0
        %3228 = vmatprep.subr.bf16.mxu0 0
        %3229 = vmatpush1.bf16.msra.mxu0 0
        %3230 = vmatprep.subr.bf16.mxu0 0
        %3231 = vmatpush1.bf16.msra.mxu0 0
        %3232 = vmatprep.subr.bf16.mxu0 0
        %3233 = vmatpush1.bf16.msra.mxu0 0
        %3234 = vmatprep.subr.bf16.mxu0 0
        %3235 = vmatpush1.bf16.msra.mxu0 0
        %3236 = vmatprep.subr.bf16.mxu0 0
        %3237 = vmatpush1.bf16.msra.mxu0 0
        %3238 = vmatprep.subr.bf16.mxu0 0
        %3239 = vmatpush1.bf16.msra.mxu0 0
        %3240 = vmatprep.subr.bf16.mxu0 0
        %3241 = vmatpush1.bf16.msra.mxu0 0
        %3242 = vmatprep.subr.bf16.mxu0 0
        %3243 = vmatpush1.bf16.msra.mxu0 0
        %3244 = vmatprep.subr.bf16.mxu0 0
        %3245 = vmatpush1.bf16.msra.mxu0 0
        %3246 = vmatprep.subr.bf16.mxu0 0
        %3247 = vmatpush1.bf16.msra.mxu0 0
        %3248 = vmatprep.subr.bf16.mxu0 0
        %3249 = vmatpush1.bf16.msra.mxu0 0
        %3250 = vmatprep.subr.bf16.mxu0 0
        %3251 = vmatpush1.bf16.msra.mxu0 0
        %3252 = vmatprep.subr.bf16.mxu0 0
        %3253 = vmatpush1.bf16.msra.mxu0 0
        %3254 = vmatprep.subr.bf16.mxu0 0
        %3255 = vmatpush1.bf16.msra.mxu0 0
        %3256 = vmatprep.mubr.bf16.mxu0 0
        %3257 = vmatmul.mubr.bf16.gmra.mrb[0].mxu0 %v3222
        %v3258 = vpop.f32.mrb[0].mxu0
        %v3259 = vadd.f32 0.0, %v3258
        %v3260 = vpop.f32.mrb[0].mxu0
        %v3261 = vpop.f32.mrb[0].mxu0
        %v3262 = vpop.f32.mrb[0].mxu0
        %3263 = vdwg.mxu0
        %3266 = vrot.lane.b32.xlu0 %v2781, 16
        %v3267 = vpop.permute.xlu0 %3266
        %3268 = vrot.lane.b32.xlu0 %v2827, 16
        %v3269 = vpop.permute.xlu0 %3268
        %3274 = vrot.lane.b32.xlu0 %v2997, 32
        %v3275 = vpop.permute.xlu0 %3274
        %3276 = vrot.lane.b32.xlu0 %v3043, 32
        %v3277 = vpop.permute.xlu0 %3276
        %3282 = vrot.lane.b32.xlu0 %v3213, 48
        %v3283 = vpop.permute.xlu0 %3282
        %3284 = vrot.lane.b32.xlu0 %v3259, 48
        %v3285 = vpop.permute.xlu0 %3284
        %v3288 = vsel %vm1169, %v2562, %v3267
        %v3289 = vsel %vm1169, %v2609, %v3269
        %v3290 = vsel %vm2073, %v3288, %v3275
        %v3291 = vsel %vm2073, %v3289, %v3277
        %v3292 = vsel %vm2076, %v3290, %v3283
        %v3293 = vsel %vm2076, %v3291, %v3285
        %v3294 = vld [vmem:[%s999] sm:$0xf]
        %v3295 = vld [vmem:[%s999 + $0x4] sm:$0xf]
        %v3296 = vld [vmem:[%s999 + $0x8] sm:$0xf]
        %v3297 = vld [vmem:[%s999 + $0xc] sm:$0xf]
        %v3298 = vld [vmem:[%s999 + $0x10] sm:$0xf]
        %v3299 = vld [vmem:[%s999 + $0x14] sm:$0xf]
        %v3300 = vld [vmem:[%s999 + $0x18] sm:$0xf]
        %v3301 = vld [vmem:[%s999 + $0x1c] sm:$0xf]
        %v3302 = vpack.c.bf16 %v3293, %v3292
        %v3303 = vld [vmem:[%s1002] sm:$0x1]
        %v3305 = vlaneseq
        %v3306 = vshrl.u32 %v3305, 7
        %v3307 = vsub.s32 0, %v3306
        %v3308 = vrot.slane %v3303, %v3307
        %v3318 = vunpack.c.l.b16 %v3294
        %v3319 = vunpack.c.l.b16 %v3295
        %v3320 = vunpack.c.l.b16 %v3296
        %v3321 = vunpack.c.l.b16 %v3297
        %v3322 = vunpack.c.l.b16 %v3298
        %v3323 = vunpack.c.l.b16 %v3299
        %v3324 = vunpack.c.l.b16 %v3300
        %v3325 = vunpack.c.l.b16 %v3301
        %v3326 = vpack.c.b16 %v3319, %v3318
        %v3327 = vpack.c.b16 %v3321, %v3320
        %v3328 = vpack.c.b16 %v3323, %v3322
        %v3329 = vpack.c.b16 %v3325, %v3324
        %v3335 = vsel %vm1111, %v3302, 0
        %3337 = vmatprep.subr.bf16.mxu0 0
        %3338 = vmatpush1.bf16.msra.mxu0 %v3326
        %3339 = vmatprep.subr.bf16.mxu0 0
        %3340 = vmatpush1.bf16.msra.mxu0 %v3327
        %3341 = vmatprep.subr.bf16.mxu0 0
        %3342 = vmatpush1.bf16.msra.mxu0 %v3328
        %3343 = vmatprep.subr.bf16.mxu0 0
        %3344 = vmatpush1.bf16.msra.mxu0 %v3329
        %3345 = vmatprep.subr.bf16.mxu0 0
        %3346 = vmatpush1.bf16.msra.mxu0 0
        %3347 = vmatprep.subr.bf16.mxu0 0
        %3348 = vmatpush1.bf16.msra.mxu0 0
        %3349 = vmatprep.subr.bf16.mxu0 0
        %3350 = vmatpush1.bf16.msra.mxu0 0
        %3351 = vmatprep.subr.bf16.mxu0 0
        %3352 = vmatpush1.bf16.msra.mxu0 0
        %3353 = vmatprep.subr.bf16.mxu0 0
        %3354 = vmatpush1.bf16.msra.mxu0 0
        %3355 = vmatprep.subr.bf16.mxu0 0
        %3356 = vmatpush1.bf16.msra.mxu0 0
        %3357 = vmatprep.subr.bf16.mxu0 0
        %3358 = vmatpush1.bf16.msra.mxu0 0
        %3359 = vmatprep.subr.bf16.mxu0 0
        %3360 = vmatpush1.bf16.msra.mxu0 0
        %3361 = vmatprep.subr.bf16.mxu0 0
        %3362 = vmatpush1.bf16.msra.mxu0 0
        %3363 = vmatprep.subr.bf16.mxu0 0
        %3364 = vmatpush1.bf16.msra.mxu0 0
        %3365 = vmatprep.subr.bf16.mxu0 0
        %3366 = vmatpush1.bf16.msra.mxu0 0
        %3367 = vmatprep.subr.bf16.mxu0 0
        %3368 = vmatpush1.bf16.msra.mxu0 0
        %3369 = vmatprep.mubr.bf16.mxu0 0
        %3370 = vmatmul.mubr.bf16.gmra.mrb[0].mxu0 %v3335
        %v3371 = vpop.f32.mrb[0].mxu0
        %v3372 = vadd.f32 %v3308, %v3371
        %v3373 = vpop.f32.mrb[0].mxu0
        %v3374 = vpop.f32.mrb[0].mxu0
        %v3375 = vadd.f32 %v3308, %v3374
        %v3376 = vpop.f32.mrb[0].mxu0
        %3377 = vdwg.mxu0
        %v3378 = vadd.f32 %v3372, %v2208
        %v3379 = vadd.f32 %v3375, %v2209
        %v3380 = vsel %vm1111, %v3378, 0.0
        %3381 = vadd.xlane.f32.xlu0 %v3380
        %v3382 = vpop.xlane.xlu0 %3381
        %v3383 = vsel %vm1111, %v3379, 0.0
        %3384 = vadd.xlane.f32.xlu0 %v3383
        %v3385 = vpop.xlane.xlu0 %3384
        %v3386 = vmul.f32 %v3382, %v2171
        %v3387 = vmul.f32 %v3385, %v2171
        %v3388 = vsub.f32 %v3378, %v3386
        %v3389 = vsub.f32 %v3379, %v3387
        %v3390 = vmul.f32 %v3388, %v3388
        %v3391 = vmul.f32 %v3389, %v3389
        %v3392 = vsel %vm1111, %v3390, 0.0
        %3393 = vadd.xlane.f32.xlu0 %v3392
        %v3394 = vpop.xlane.xlu0 %3393
        %v3395 = vsel %vm1111, %v3391, 0.0
        %3396 = vadd.xlane.f32.xlu0 %v3395
        %v3397 = vpop.xlane.xlu0 %3396
        %v3398 = vmul.f32 %v3394, %v2171
        %v3399 = vmul.f32 %v3397, %v2171
        %v3400 = vadd.f32 %v3398, 1e-05
        %v3401 = vadd.f32 %v3399, 1e-05
        %v3402 = vrsqrt.pop %v3400
        %v3403 = vrsqrt.pop %v3401
        %v3404 = vmul.f32 %v3388, %v3402
        %v3405 = vmul.f32 %v3389, %v3403
        %v3406 = vld [vmem:[%s1005] sm:$0x1]
        %v3408 = vlaneseq
        %v3409 = vshrl.u32 %v3408, 7
        %v3410 = vsub.s32 0, %v3409
        %v3411 = vrot.slane %v3406, %v3410
        %v3413 = vmul.f32 %v3404, %v3411
        %v3414 = vmul.f32 %v3405, %v3411
        %v3415 = vld [vmem:[%s1008] sm:$0x1]
        %v3417 = vlaneseq
        %v3418 = vshrl.u32 %v3417, 7
        %v3419 = vsub.s32 0, %v3418
        %v3420 = vrot.slane %v3415, %v3419
        %v3422 = vadd.f32 %v3413, %v3420
        %v3423 = vadd.f32 %v3414, %v3420
        %v3424 = vld [vmem:[%s1013] sm:$0xff]
        %v3425 = vld [vmem:[%s1013 + $0x8] sm:$0xff]
        %v3426 = vld [vmem:[%s1013 + $0x10] sm:$0xff]
        %v3427 = vld [vmem:[%s1013 + $0x18] sm:$0xff]
        %v3428 = vld [vmem:[%s1013 + $0x20] sm:$0xff]
        %v3429 = vld [vmem:[%s1013 + $0x28] sm:$0xff]
        %v3430 = vld [vmem:[%s1013 + $0x30] sm:$0xff]
        %v3431 = vld [vmem:[%s1013 + $0x38] sm:$0xff]
        %v3432 = vpack.c.bf16 %v3423, %v3422
        %v3433 = vld [vmem:[%s1017] sm:$0x3]
        %v3435 = vlaneseq
        %v3436 = vshrl.u32 %v3435, 7
        %v3437 = vsub.s32 0, %v3436
        %v3438 = vrot.slane %v3433, %v3437
        %v3439 = vlaneseq
        %v3440 = vshrl.u32 %v3439, 7
        %v3441 = vsub.s32 1, %v3440
        %v3442 = vrot.slane %v3433, %v3441
        %v3453 = vunpack.c.l.b16 %v3424
        %v3454 = vunpack.c.h.b16 %v3424
        %v3455 = vunpack.c.l.b16 %v3425
        %v3456 = vunpack.c.h.b16 %v3425
        %v3457 = vunpack.c.l.b16 %v3426
        %v3458 = vunpack.c.h.b16 %v3426
        %v3459 = vunpack.c.l.b16 %v3427
        %v3460 = vunpack.c.h.b16 %v3427
        %v3461 = vunpack.c.l.b16 %v3428
        %v3462 = vunpack.c.h.b16 %v3428
        %v3463 = vunpack.c.l.b16 %v3429
        %v3464 = vunpack.c.h.b16 %v3429
        %v3465 = vunpack.c.l.b16 %v3430
        %v3466 = vunpack.c.h.b16 %v3430
        %v3467 = vunpack.c.l.b16 %v3431
        %v3468 = vunpack.c.h.b16 %v3431
        %v3469 = vpack.c.b16 %v3455, %v3453
        %v3470 = vpack.c.b16 %v3456, %v3454
        %v3471 = vpack.c.b16 %v3459, %v3457
        %v3472 = vpack.c.b16 %v3460, %v3458
        %v3473 = vpack.c.b16 %v3463, %v3461
        %v3474 = vpack.c.b16 %v3464, %v3462
        %v3475 = vpack.c.b16 %v3467, %v3465
        %v3476 = vpack.c.b16 %v3468, %v3466
        %v3486 = vsel %vm1111, %v3432, 0
        %3488 = vmatprep.subr.bf16.mxu0 %v3470
        %3489 = vmatpush1.bf16.msra.mxu0 %v3469
        %3490 = vmatprep.subr.bf16.mxu0 %v3472
        %3491 = vmatpush1.bf16.msra.mxu0 %v3471
        %3492 = vmatprep.subr.bf16.mxu0 %v3474
        %3493 = vmatpush1.bf16.msra.mxu0 %v3473
        %3494 = vmatprep.subr.bf16.mxu0 %v3476
        %3495 = vmatpush1.bf16.msra.mxu0 %v3475
        %3496 = vmatprep.subr.bf16.mxu0 0
        %3497 = vmatpush1.bf16.msra.mxu0 0
        %3498 = vmatprep.subr.bf16.mxu0 0
        %3499 = vmatpush1.bf16.msra.mxu0 0
        %3500 = vmatprep.subr.bf16.mxu0 0
        %3501 = vmatpush1.bf16.msra.mxu0 0
        %3502 = vmatprep.subr.bf16.mxu0 0
        %3503 = vmatpush1.bf16.msra.mxu0 0
        %3504 = vmatprep.subr.bf16.mxu0 0
        %3505 = vmatpush1.bf16.msra.mxu0 0
        %3506 = vmatprep.subr.bf16.mxu0 0
        %3507 = vmatpush1.bf16.msra.mxu0 0
        %3508 = vmatprep.subr.bf16.mxu0 0
        %3509 = vmatpush1.bf16.msra.mxu0 0
        %3510 = vmatprep.subr.bf16.mxu0 0
        %3511 = vmatpush1.bf16.msra.mxu0 0
        %3512 = vmatprep.subr.bf16.mxu0 0
        %3513 = vmatpush1.bf16.msra.mxu0 0
        %3514 = vmatprep.subr.bf16.mxu0 0
        %3515 = vmatpush1.bf16.msra.mxu0 0
        %3516 = vmatprep.subr.bf16.mxu0 0
        %3517 = vmatpush1.bf16.msra.mxu0 0
        %3518 = vmatprep.subr.bf16.mxu0 0
        %3519 = vmatpush1.bf16.msra.mxu0 0
        %3520 = vmatprep.mubr.bf16.mxu0 0
        %3521 = vmatmul.mubr.bf16.gmra.mrb[0].mxu0 %v3486
        %v3522 = vpop.f32.mrb[0].mxu0
        %v3523 = vadd.f32 %v3438, %v3522
        %v3524 = vpop.f32.mrb[0].mxu0
        %v3525 = vadd.f32 %v3442, %v3524
        %v3526 = vpop.f32.mrb[0].mxu0
        %v3527 = vadd.f32 %v3438, %v3526
        %v3528 = vpop.f32.mrb[0].mxu0
        %v3529 = vadd.f32 %v3442, %v3528
        %3530 = vdwg.mxu0
        %v3531 = vmax.f32 %v3523, 0.0
        %v3532 = vmax.f32 %v3525, 0.0
        %v3533 = vmax.f32 %v3527, 0.0
        %v3534 = vmax.f32 %v3529, 0.0
        %v3535 = vld [vmem:[%s1022] sm:$0xf]
        %v3536 = vld [vmem:[%s1022 + $0x4] sm:$0xf]
        %v3537 = vld [vmem:[%s1022 + $0x8] sm:$0xf]
        %v3538 = vld [vmem:[%s1022 + $0xc] sm:$0xf]
        %v3539 = vld [vmem:[%s1022 + $0x10] sm:$0xf]
        %v3540 = vld [vmem:[%s1022 + $0x14] sm:$0xf]
        %v3541 = vld [vmem:[%s1022 + $0x18] sm:$0xf]
        %v3542 = vld [vmem:[%s1022 + $0x1c] sm:$0xf]
        %v3543 = vld [vmem:[%s1022 + $0x20] sm:$0xf]
        %v3544 = vld [vmem:[%s1022 + $0x24] sm:$0xf]
        %v3545 = vld [vmem:[%s1022 + $0x28] sm:$0xf]
        %v3546 = vld [vmem:[%s1022 + $0x2c] sm:$0xf]
        %v3547 = vld [vmem:[%s1022 + $0x30] sm:$0xf]
        %v3548 = vld [vmem:[%s1022 + $0x34] sm:$0xf]
        %v3549 = vld [vmem:[%s1022 + $0x38] sm:$0xf]
        %v3550 = vld [vmem:[%s1022 + $0x3c] sm:$0xf]
        %v3551 = vld [vmem:[%s1022 + $0x40] sm:$0xf]
        %v3552 = vld [vmem:[%s1022 + $0x44] sm:$0xf]
        %v3553 = vld [vmem:[%s1022 + $0x48] sm:$0xf]
        %v3554 = vld [vmem:[%s1022 + $0x4c] sm:$0xf]
        %v3555 = vld [vmem:[%s1022 + $0x50] sm:$0xf]
        %v3556 = vld [vmem:[%s1022 + $0x54] sm:$0xf]
        %v3557 = vld [vmem:[%s1022 + $0x58] sm:$0xf]
        %v3558 = vld [vmem:[%s1022 + $0x5c] sm:$0xf]
        %v3559 = vld [vmem:[%s1022 + $0x60] sm:$0xf]
        %v3560 = vld [vmem:[%s1022 + $0x64] sm:$0xf]
        %v3561 = vld [vmem:[%s1022 + $0x68] sm:$0xf]
        %v3562 = vld [vmem:[%s1022 + $0x6c] sm:$0xf]
        %v3563 = vld [vmem:[%s1022 + $0x70] sm:$0xf]
        %v3564 = vld [vmem:[%s1022 + $0x74] sm:$0xf]
        %v3565 = vld [vmem:[%s1022 + $0x78] sm:$0xf]
        %v3566 = vld [vmem:[%s1022 + $0x7c] sm:$0xf]
        %v3567 = vpack.c.bf16 %v3533, %v3531
        %v3568 = vpack.c.bf16 %v3534, %v3532
        %v3569 = vld [vmem:[%s1025] sm:$0x1]
        %v3571 = vlaneseq
        %v3572 = vshrl.u32 %v3571, 7
        %v3573 = vsub.s32 0, %v3572
        %v3574 = vrot.slane %v3569, %v3573
        %v3608 = vunpack.c.l.b16 %v3535
        %v3609 = vunpack.c.l.b16 %v3536
        %v3610 = vunpack.c.l.b16 %v3537
        %v3611 = vunpack.c.l.b16 %v3538
        %v3612 = vunpack.c.l.b16 %v3539
        %v3613 = vunpack.c.l.b16 %v3540
        %v3614 = vunpack.c.l.b16 %v3541
        %v3615 = vunpack.c.l.b16 %v3542
        %v3616 = vunpack.c.l.b16 %v3543
        %v3617 = vunpack.c.l.b16 %v3544
        %v3618 = vunpack.c.l.b16 %v3545
        %v3619 = vunpack.c.l.b16 %v3546
        %v3620 = vunpack.c.l.b16 %v3547
        %v3621 = vunpack.c.l.b16 %v3548
        %v3622 = vunpack.c.l.b16 %v3549
        %v3623 = vunpack.c.l.b16 %v3550
        %v3624 = vunpack.c.l.b16 %v3551
        %v3625 = vunpack.c.l.b16 %v3552
        %v3626 = vunpack.c.l.b16 %v3553
        %v3627 = vunpack.c.l.b16 %v3554
        %v3628 = vunpack.c.l.b16 %v3555
        %v3629 = vunpack.c.l.b16 %v3556
        %v3630 = vunpack.c.l.b16 %v3557
        %v3631 = vunpack.c.l.b16 %v3558
        %v3632 = vunpack.c.l.b16 %v3559
        %v3633 = vunpack.c.l.b16 %v3560
        %v3634 = vunpack.c.l.b16 %v3561
        %v3635 = vunpack.c.l.b16 %v3562
        %v3636 = vunpack.c.l.b16 %v3563
        %v3637 = vunpack.c.l.b16 %v3564
        %v3638 = vunpack.c.l.b16 %v3565
        %v3639 = vunpack.c.l.b16 %v3566
        %v3640 = vpack.c.b16 %v3609, %v3608
        %v3641 = vpack.c.b16 %v3611, %v3610
        %v3642 = vpack.c.b16 %v3613, %v3612
        %v3643 = vpack.c.b16 %v3615, %v3614
        %v3644 = vpack.c.b16 %v3617, %v3616
        %v3645 = vpack.c.b16 %v3619, %v3618
        %v3646 = vpack.c.b16 %v3621, %v3620
        %v3647 = vpack.c.b16 %v3623, %v3622
        %v3648 = vpack.c.b16 %v3625, %v3624
        %v3649 = vpack.c.b16 %v3627, %v3626
        %v3650 = vpack.c.b16 %v3629, %v3628
        %v3651 = vpack.c.b16 %v3631, %v3630
        %v3652 = vpack.c.b16 %v3633, %v3632
        %v3653 = vpack.c.b16 %v3635, %v3634
        %v3654 = vpack.c.b16 %v3637, %v3636
        %v3655 = vpack.c.b16 %v3639, %v3638
        %3672 = vmatprep.subr.bf16.mxu0 0
        %3673 = vmatpush1.bf16.msra.mxu0 %v3640
        %3674 = vmatprep.subr.bf16.mxu0 0
        %3675 = vmatpush1.bf16.msra.mxu0 %v3641
        %3676 = vmatprep.subr.bf16.mxu0 0
        %3677 = vmatpush1.bf16.msra.mxu0 %v3642
        %3678 = vmatprep.subr.bf16.mxu0 0
        %3679 = vmatpush1.bf16.msra.mxu0 %v3643
        %3680 = vmatprep.subr.bf16.mxu0 0
        %3681 = vmatpush1.bf16.msra.mxu0 %v3644
        %3682 = vmatprep.subr.bf16.mxu0 0
        %3683 = vmatpush1.bf16.msra.mxu0 %v3645
        %3684 = vmatprep.subr.bf16.mxu0 0
        %3685 = vmatpush1.bf16.msra.mxu0 %v3646
        %3686 = vmatprep.subr.bf16.mxu0 0
        %3687 = vmatpush1.bf16.msra.mxu0 %v3647
        %3688 = vmatprep.subr.bf16.mxu0 0
        %3689 = vmatpush1.bf16.msra.mxu0 %v3648
        %3690 = vmatprep.subr.bf16.mxu0 0
        %3691 = vmatpush1.bf16.msra.mxu0 %v3649
        %3692 = vmatprep.subr.bf16.mxu0 0
        %3693 = vmatpush1.bf16.msra.mxu0 %v3650
        %3694 = vmatprep.subr.bf16.mxu0 0
        %3695 = vmatpush1.bf16.msra.mxu0 %v3651
        %3696 = vmatprep.subr.bf16.mxu0 0
        %3697 = vmatpush1.bf16.msra.mxu0 %v3652
        %3698 = vmatprep.subr.bf16.mxu0 0
        %3699 = vmatpush1.bf16.msra.mxu0 %v3653
        %3700 = vmatprep.subr.bf16.mxu0 0
        %3701 = vmatpush1.bf16.msra.mxu0 %v3654
        %3702 = vmatprep.subr.bf16.mxu0 0
        %3703 = vmatpush1.bf16.msra.mxu0 %v3655
        %3704 = vmatprep.mubr.bf16.mxu0 %v3568
        %3705 = vmatmul.mubr.bf16.gmra.mrb[0].mxu0 %v3567
        %v3706 = vpop.f32.mrb[0].mxu0
        %v3707 = vadd.f32 %v3574, %v3706
        %v3708 = vpop.f32.mrb[0].mxu0
        %v3709 = vpop.f32.mrb[0].mxu0
        %v3710 = vadd.f32 %v3574, %v3709
        %v3711 = vpop.f32.mrb[0].mxu0
        %3712 = vdwg.mxu0
        %v3713 = vadd.f32 %v3707, %v3422
        %v3714 = vadd.f32 %v3710, %v3423
        %v3715 = vsel %vm1111, %v3713, 0.0
        %3716 = vadd.xlane.f32.xlu0 %v3715
        %v3717 = vpop.xlane.xlu0 %3716
        %v3718 = vsel %vm1111, %v3714, 0.0
        %3719 = vadd.xlane.f32.xlu0 %v3718
        %v3720 = vpop.xlane.xlu0 %3719
        %v3721 = vmul.f32 %v3717, %v2171
        %v3722 = vmul.f32 %v3720, %v2171
        %v3723 = vsub.f32 %v3713, %v3721
        %v3724 = vsub.f32 %v3714, %v3722
        %v3725 = vmul.f32 %v3723, %v3723
        %v3726 = vmul.f32 %v3724, %v3724
        %v3727 = vsel %vm1111, %v3725, 0.0
        %3728 = vadd.xlane.f32.xlu0 %v3727
        %v3729 = vpop.xlane.xlu0 %3728
        %v3730 = vsel %vm1111, %v3726, 0.0
        %3731 = vadd.xlane.f32.xlu0 %v3730
        %v3732 = vpop.xlane.xlu0 %3731
        %v3733 = vmul.f32 %v3729, %v2171
        %v3734 = vmul.f32 %v3732, %v2171
        %v3735 = vadd.f32 %v3733, 1e-05
        %v3736 = vadd.f32 %v3734, 1e-05
        %v3737 = vrsqrt.pop %v3735
        %v3738 = vrsqrt.pop %v3736
        %v3739 = vmul.f32 %v3723, %v3737
        %v3740 = vmul.f32 %v3724, %v3738
        %v3741 = vld [vmem:[%s1028] sm:$0x1]
        %v3743 = vlaneseq
        %v3744 = vshrl.u32 %v3743, 7
        %v3745 = vsub.s32 0, %v3744
        %v3746 = vrot.slane %v3741, %v3745
        %v3748 = vmul.f32 %v3739, %v3746
        %v3749 = vmul.f32 %v3740, %v3746
        %v3750 = vld [vmem:[%s1031] sm:$0x1]
        %v3752 = vlaneseq
        %v3753 = vshrl.u32 %v3752, 7
        %v3754 = vsub.s32 0, %v3753
        %v3755 = vrot.slane %v3750, %v3754
        %v3757 = vadd.f32 %v3748, %v3755
        %v3758 = vadd.f32 %v3749, %v3755
        %3759 = vst.msk [vmem:[#allocation2] sm:$0xff] %vm1111, %v3757
        %3760 = vst.msk [vmem:[#allocation2 + $0x8] sm:$0xff] %vm1111, %v3758
        %p3761 = scmp.eq.s32.totalorder %s36, 1
        // Predicated region
        $region121: #{decoder_forward.1} parent=115 // pred_check
          %p3762 = pneg %p3761
        $region122: #{decoder_forward.1} parent=115 // pred_check_branch
          %3764 = sbr.rel (%p3762) target = $region124
        $region123: #{decoder_forward.1} parent=115 // pred_region
          %v3765 = vld [vmem:[%s22] sm:$0xf]
          %v3766 = vld [vmem:[%s22 + $0x4] sm:$0xf]
          %v3767 = vld [vmem:[%s22 + $0x8] sm:$0xf]
          %v3768 = vld [vmem:[%s22 + $0xc] sm:$0xf]
          %v3769 = vld [vmem:[%s22 + $0x10] sm:$0xf]
          %v3770 = vld [vmem:[%s22 + $0x14] sm:$0xf]
          %v3771 = vld [vmem:[%s22 + $0x18] sm:$0xf]
          %v3772 = vld [vmem:[%s22 + $0x1c] sm:$0xf]
          %v3773 = vpack.c.bf16 %v3758, %v3757
          %v3774 = vld [vmem:[%s23] sm:$0x1]
          %v3776 = vlaneseq
          %v3777 = vshrl.u32 %v3776, 7
          %v3778 = vsub.s32 0, %v3777
          %v3779 = vrot.slane %v3774, %v3778
          %v3789 = vunpack.c.l.b16 %v3765
          %v3790 = vunpack.c.l.b16 %v3766
          %v3791 = vunpack.c.l.b16 %v3767
          %v3792 = vunpack.c.l.b16 %v3768
          %v3793 = vunpack.c.l.b16 %v3769
          %v3794 = vunpack.c.l.b16 %v3770
          %v3795 = vunpack.c.l.b16 %v3771
          %v3796 = vunpack.c.l.b16 %v3772
          %v3797 = vpack.c.b16 %v3790, %v3789
          %v3798 = vpack.c.b16 %v3792, %v3791
          %v3799 = vpack.c.b16 %v3794, %v3793
          %v3800 = vpack.c.b16 %v3796, %v3795
          %v3806 = vsel %vm1111, %v3773, 0
          %3808 = vmatprep.subr.bf16.mxu0 0
          %3809 = vmatpush1.bf16.msra.mxu0 %v3797
          %3810 = vmatprep.subr.bf16.mxu0 0
          %3811 = vmatpush1.bf16.msra.mxu0 %v3798
          %3812 = vmatprep.subr.bf16.mxu0 0
          %3813 = vmatpush1.bf16.msra.mxu0 %v3799
          %3814 = vmatprep.subr.bf16.mxu0 0
          %3815 = vmatpush1.bf16.msra.mxu0 %v3800
          %3816 = vmatprep.subr.bf16.mxu0 0
          %3817 = vmatpush1.bf16.msra.mxu0 0
          %3818 = vmatprep.subr.bf16.mxu0 0
          %3819 = vmatpush1.bf16.msra.mxu0 0
          %3820 = vmatprep.subr.bf16.mxu0 0
          %3821 = vmatpush1.bf16.msra.mxu0 0
          %3822 = vmatprep.subr.bf16.mxu0 0
          %3823 = vmatpush1.bf16.msra.mxu0 0
          %3824 = vmatprep.subr.bf16.mxu0 0
          %3825 = vmatpush1.bf16.msra.mxu0 0
          %3826 = vmatprep.subr.bf16.mxu0 0
          %3827 = vmatpush1.bf16.msra.mxu0 0
          %3828 = vmatprep.subr.bf16.mxu0 0
          %3829 = vmatpush1.bf16.msra.mxu0 0
          %3830 = vmatprep.subr.bf16.mxu0 0
          %3831 = vmatpush1.bf16.msra.mxu0 0
          %3832 = vmatprep.subr.bf16.mxu0 0
          %3833 = vmatpush1.bf16.msra.mxu0 0
          %3834 = vmatprep.subr.bf16.mxu0 0
          %3835 = vmatpush1.bf16.msra.mxu0 0
          %3836 = vmatprep.subr.bf16.mxu0 0
          %3837 = vmatpush1.bf16.msra.mxu0 0
          %3838 = vmatprep.subr.bf16.mxu0 0
          %3839 = vmatpush1.bf16.msra.mxu0 0
          %3840 = vmatprep.mubr.bf16.mxu0 0
          %3841 = vmatmul.mubr.bf16.gmra.mrb[0].mxu0 %v3806
          %v3842 = vpop.f32.mrb[0].mxu0
          %v3843 = vadd.f32 %v3779, %v3842
          %v3844 = vpop.f32.mrb[0].mxu0
          %v3845 = vpop.f32.mrb[0].mxu0
          %v3846 = vadd.f32 %v3779, %v3845
          %v3847 = vpop.f32.mrb[0].mxu0
          %3848 = vdwg.mxu0
          %3849 = vst [vmem:[#allocation3] sm:$0xff] %v3843
          %3850 = vst [vmem:[#allocation3 + $0x8] sm:$0xff] %v3846
        $region124: #{decoder_forward.1} parent=115 // pred_fallthru
          _
        // Predicated region
        $region125: #{decoder_forward.1} parent=115 // pred_check
          %p3851 = pneg %p653
        $region126: #{decoder_forward.1} parent=115 // pred_check_branch
          %3853 = sbr.rel (%p3851) target = $region128
        $region127: #{decoder_forward.1} parent=115 // pred_region
          %s3855 = ssub.s32 256, 256
          %3856 = vsyncadd [#allocation4], %s3855
          %s3857 = sshll.u32 [#allocation3], 4
          %s3858 = int_to_ptr.vmem [resolvable:$true] %s3857
          %3863 = dma.vmem_to_hbm [thread:$0]  %s3858, 256, %s24, [#allocation4], 128, 128, 8
        $region128: #{decoder_forward.1} parent=115 // pred_fallthru
          _
        // Predicated region
        $region129: #{decoder_forward.1} parent=115 // pred_check
          %p3864 = pneg %p653
        $region130: #{decoder_forward.1} parent=115 // pred_check_branch
          %3866 = sbr.rel (%p3864) target = $region132
        $region131: #{decoder_forward.1} parent=115 // pred_region
          %3867 = dma.done [#allocation4], 256
        $region132: #{decoder_forward.1} parent=115 // pred_fallthru
          _
      $region116: #{decoder_forward.1} parent=5 // pred_fallthru
        _
      %p3868 = scmp.le.s32.totalorder 2, %s31
      // Predicated region
      $region133: #{decoder_forward.1} parent=5 // pred_check
        %p3869 = pneg %p3868
      $region134: #{decoder_forward.1} parent=5 // pred_check_branch
        %3871 = sbr.rel (%p3869) target = $region136
      $region135: #{decoder_forward.1} parent=5 // pred_region
        %s3872 = ssub.s32 %s31, 2
      $region136: #{decoder_forward.1} parent=5 // pred_fallthru
        _
    $region6: #{decoder_forward.1} parent=1 // loop_footer
      %s35 = sadd.s32 1, %s31
    $region7: #{decoder_forward.1} parent=1 // loop_footer_branch
      %30 = sbr.rel target = $region3
    $region8: #{decoder_forward.1} parent=1 // loop_exit
      _
    %3873 = vsyncpa [#allocation4], 1
    %s3874 = scalar_lea.sflag [#allocation4], 1
    %3875 = vsyncpa %s3874, 1

</llo_original>
